<compile_context>
chip_gen: v7x
topology: tpu7x:2x2x1
jax: 0.10.0
libtpu: 0.0.40
codegen_flags: <defaults>
</compile_context>

<pallas_src>
import math
from functools import partial

import jax
import jax.numpy as jnp
from jax import lax
from jax.experimental import pallas as pl
from jax.experimental.pallas import tpu as pltpu


# ----------------------------- fused kernel --------------------------------

def _fused_squeezenet_kernel(x_ref, w1_ref, b1_ref, wsq_ref, bsq_ref,
                             wex_ref, bex_ref, wfc_ref, bfc_ref,
                             o_ref, pad_ref, *, ho1, wo1, wp):
    """Whole per-image forward: conv1+ReLU -> Fire -> final conv+ReLU -> avgpool.

    x_ref  : (4, hp*wp, 3) bf16  -- 4 row/col-parity phases, flattened row-major.
    pad_ref: ((ho1+3)*wp, 16) bf16 scratch -- zero-padded squeeze output.
    Wide layout convention: every conv output is stored row-major with row
    length `wp` (columns >= wo are garbage and are masked / discarded).
    """
    f32 = jnp.float32
    m1 = ho1 * wp                                   # wide M for 7x7 outputs (63)

    # ---- Conv2d(3, 64, k=3, s=2) + ReLU: 9 accumulating taps, M = m1 -------
    c1 = w1_ref.shape[-1]
    acc1 = jnp.zeros((m1, c1), f32)
    for kh in range(3):
        for kw in range(3):
            ph = (kh % 2) * 2 + (kw % 2)            # input parity phase
            off = (kh // 2) * wp + (kw // 2)        # contiguous slab offset
            acc1 = acc1 + jnp.dot(x_ref[ph, off:off + m1, :],
                                  w1_ref[kh * 3 + kw],
                                  preferred_element_type=f32)
    y1 = jnp.maximum(acc1 + b1_ref[...], 0.0)       # bias/ReLU once, no row loop

    # ---- Fire.squeeze 1x1 + ReLU -------------------------------------------
    s = jnp.dot(y1.astype(jnp.bfloat16), wsq_ref[...], preferred_element_type=f32)
    s = jnp.maximum(s + bsq_ref[...], 0.0)          # (m1, 16)

    # Zero the garbage wide columns and place the valid 7x7 block at offset
    # (wp+1) of the zeroed scratch: this reproduces exactly the zero padding
    # the expand conv (padding=1) expects, with ONE contiguous store.
    col = lax.broadcasted_iota(jnp.int32, (m1, 1), 0) % wp
    s = jnp.where(col < wo1, s, 0.0)
    pad_ref[...] = jnp.zeros_like(pad_ref)
    pad_ref[wp + 1:wp + 1 + m1, :] = s.astype(pad_ref.dtype)

    # ---- Fire expand (expand1x1 embedded as centre tap of combined 3x3) ----
    ce = wex_ref.shape[-1]
    acc2 = jnp.zeros((m1, ce), f32)
    for kh in range(3):
        for kw in range(3):
            off = kh * wp + kw
            acc2 = acc2 + jnp.dot(pad_ref[off:off + m1, :],
                                  wex_ref[kh * 3 + kw],
                                  preferred_element_type=f32)
    fexp = jnp.maximum(acc2 + bex_ref[...], 0.0).astype(jnp.bfloat16)  # (m1,128)

    # ---- Conv2d(128, 36, k=3, s=2) + ReLU + AdaptiveAvgPool2d(1) -----------
    # Output position (i2, j2) lives at accumulator row q = 2*i2*wp + 2*j2,
    # which is tap-independent, so all 9 taps accumulate into one (mf, 36)
    # matrix; non-grid rows are garbage and masked out before pooling.
    ho2 = (ho1 - 3) // 2 + 1
    wo2 = (wo1 - 3) // 2 + 1
    mf = 2 * (ho2 - 1) * wp + 2 * (wo2 - 1) + 1     # 41 for 7x7 -> 3x3
    cf = wfc_ref.shape[-1]
    acc3 = jnp.zeros((mf, cf), f32)
    for kh in range(3):
        for kw in range(3):
            base = kh * wp + kw
            acc3 = acc3 + jnp.dot(fexp[base:base + mf, :],
                                  wfc_ref[kh * 3 + kw],
                                  preferred_element_type=f32)
    y3 = jnp.maximum(acc3 + bfc_ref[...], 0.0)      # (mf, 36)
    q = lax.broadcasted_iota(jnp.int32, (mf, 1), 0)
    valid = ((q % (2 * wp)) < 2 * wo2) & ((q % 2) == 0)
    pooled = jnp.sum(jnp.where(valid, y3, 0.0), axis=0, keepdims=True)
    o_ref[...] = (pooled * (1.0 / (ho2 * wo2))).astype(o_ref.dtype)


# --------------------------- wrapper-side glue ------------------------------

def _phase_split(x, hp, wp):
    """(N,H,W,C) -> (N,4,hp*wp,C): row/col parity phases, zero padded to
    (hp, wp) and flattened row-major.  Pure layout pass on the raw input only."""
    n, _, _, c = x.shape
    phases = []
    for pr in range(2):
        for pc in range(2):
            p = x[:, pr::2, pc::2, :]
            p = jnp.pad(p, ((0, 0), (0, hp - p.shape[1]),
                            (0, wp - p.shape[2]), (0, 0)))
            phases.append(p.reshape(n, hp * wp, c))
    return jnp.stack(phases, axis=1)


def squeezenet_forward(params, x_nchw):
    x = jnp.transpose(x_nchw, (0, 2, 3, 1)).astype(jnp.bfloat16)   # NCHW -> NHWC
    n, h, w, cin = x.shape
    ho1, wo1 = (h - 3) // 2 + 1, (w - 3) // 2 + 1
    ho2, wo2 = (ho1 - 3) // 2 + 1, (wo1 - 3) // 2 + 1
    wp = wo1 + 2                       # wide row length == expand's padded width
    hp = max((h + 1) // 2, ho1 + 2)    # enough phase rows for every tap slab
    x4 = _phase_split(x, hp, wp)       # (n, 4, hp*wp, cin)

    c1 = params['w1'].shape[-1]
    csq = params['wsq'].shape[-1]
    ce = params['wex'].shape[-1]
    cf = params['wfc'].shape[-1]
    pad_rows = (ho1 + 3) * wp          # padded squeeze scratch (+1 row of slack)

    kernel = partial(_fused_squeezenet_kernel, ho1=ho1, wo1=wo1, wp=wp)
    flops = 2 * n * (ho1 * wo1 * (9 * cin * c1 + c1 * csq + 9 * csq * ce)
                     + ho2 * wo2 * 9 * ce * cf)
    bytes_accessed = int(x4.size * x4.dtype.itemsize
                         + sum(int(v.size) * v.dtype.itemsize for v in params.values())
                         + n * cf * 4)

    out = pl.pallas_call(
        kernel,
        grid=(n,),
        out_shape=jax.ShapeDtypeStruct((n, 1, cf), jnp.float32),
        in_specs=[
            pl.BlockSpec((None, 4, hp * wp, cin), lambda i: (i, 0, 0, 0)),
            # Weights/biases: grid-invariant index maps -> DMA'd once, resident.
            pl.BlockSpec((9, cin, c1), lambda i: (0, 0, 0)),
            pl.BlockSpec((1, c1), lambda i: (0, 0)),
            pl.BlockSpec((c1, csq), lambda i: (0, 0)),
            pl.BlockSpec((1, csq), lambda i: (0, 0)),
            pl.BlockSpec((9, csq, ce), lambda i: (0, 0, 0)),
            pl.BlockSpec((1, ce), lambda i: (0, 0)),
            pl.BlockSpec((9, ce, cf), lambda i: (0, 0, 0)),
            pl.BlockSpec((1, cf), lambda i: (0, 0)),
        ],
        out_specs=pl.BlockSpec((None, 1, cf), lambda i: (i, 0, 0)),
        scratch_shapes=[pltpu.VMEM((pad_rows, csq), jnp.bfloat16)],
        compiler_params=pltpu.CompilerParams(dimension_semantics=("parallel",)),
        cost_estimate=pl.CostEstimate(flops=flops, transcendentals=0,
                                      bytes_accessed=bytes_accessed),
    )(x4, params['w1'], params['b1'], params['wsq'], params['bsq'],
      params['wex'], params['bex'], params['wfc'], params['bfc'])

    return out.reshape(n, cf, 1, 1)                 # (N, 36, 1, 1), PyTorch layout


# ------------------------------ parameters ----------------------------------

def _kaiming_uniform(key, shape, fan_in):
    bound = math.sqrt(6.0 / fan_in)
    return jax.random.uniform(key, shape, jnp.float32, -bound, bound)


def init_params(key):
    """Parameters already in the fused-kernel layout (built ONCE, not per call):
    conv weights as (KH*KW, Cin, Cout) bf16, biases as (1, Cout) f32, and the
    Fire expand1x1/expand3x3 pair pre-combined into one (9, 16, 128) weight
    (expand1x1 occupies the centre tap, output channels 0:64)."""
    ks = jax.random.split(key, 5)
    w1 = _kaiming_uniform(ks[0], (9, 3, 64), 3 * 3 * 3)        # Conv2d(3,64,k3,s2)
    wsq = _kaiming_uniform(ks[1], (64, 16), 64)                # Fire.squeeze 1x1
    e1 = _kaiming_uniform(ks[2], (16, 64), 16)                 # Fire.expand1x1
    e3 = _kaiming_uniform(ks[3], (9, 16, 64), 3 * 3 * 16)      # Fire.expand3x3
    wfc = _kaiming_uniform(ks[4], (9, 128, 36), 3 * 3 * 128)   # final_conv
    wex = jnp.zeros((9, 16, 128), jnp.float32)
    wex = wex.at[:, :, 64:].set(e3)
    wex = wex.at[4, :, :64].set(e1)
    bf16 = jnp.bfloat16
    return {
        'w1': w1.astype(bf16), 'b1': jnp.zeros((1, 64), jnp.float32),
        'wsq': wsq.astype(bf16), 'bsq': jnp.zeros((1, 16), jnp.float32),
        'wex': wex.astype(bf16), 'bex': jnp.zeros((1, 128), jnp.float32),
        'wfc': wfc.astype(bf16), 'bfc': jnp.zeros((1, 36), jnp.float32),
    }


# --------------------------------- main --------------------------------------

if __name__ == "__main__":
    key = jax.random.PRNGKey(0)
    kx, kp = jax.random.split(key)
    x = jax.random.normal(kx, (2, 3, 16, 16), jnp.float32)     # NCHW, like PyTorch
    params = init_params(kp)

    out = jax.jit(squeezenet_forward)(params, x)
    out = jax.block_until_ready(out)
    assert out.shape == (2, 36, 1, 1), out.shape
    assert bool(jnp.all(jnp.isfinite(out)))
    print("KERNEL_OK")
</pallas_src>

<mosaic_0001>
module attributes {stable_mosaic.version = 11 : i64} {
  func.func @_fused_squeezenet_kernel(%arg0: i32, %arg1: memref<1x4x81x3xbf16, #tpu.memory_space<vmem>>, %arg2: memref<9x3x64xbf16, #tpu.memory_space<vmem>>, %arg3: memref<1x64xf32, #tpu.memory_space<vmem>>, %arg4: memref<64x16xbf16, #tpu.memory_space<vmem>>, %arg5: memref<1x16xf32, #tpu.memory_space<vmem>>, %arg6: memref<9x16x128xbf16, #tpu.memory_space<vmem>>, %arg7: memref<1x128xf32, #tpu.memory_space<vmem>>, %arg8: memref<9x128x36xbf16, #tpu.memory_space<vmem>>, %arg9: memref<1x36xf32, #tpu.memory_space<vmem>>, %arg10: memref<1x1x36xf32, #tpu.memory_space<vmem>>, %arg11: memref<90x16xbf16, #tpu.memory_space<vmem>>) attributes {dimension_semantics = [#tpu.dimension_semantics<parallel>], iteration_bounds = array<i64: 2>, scalar_prefetch = 0 : i64, scratch_operands = 1 : i64, tpu.core_type = #tpu.core_type<tc>, window_params = [{transform_indices = @transform_0, window_bounds = array<i64: 1, 4, 81, 3>}, {pipeline_mode = #tpu.pipeline_mode<synchronous>, transform_indices = @transform_1, window_bounds = array<i64: 9, 3, 64>}, {pipeline_mode = #tpu.pipeline_mode<synchronous>, transform_indices = @transform_2, window_bounds = array<i64: 1, 64>}, {pipeline_mode = #tpu.pipeline_mode<synchronous>, transform_indices = @transform_3, window_bounds = array<i64: 64, 16>}, {pipeline_mode = #tpu.pipeline_mode<synchronous>, transform_indices = @transform_4, window_bounds = array<i64: 1, 16>}, {pipeline_mode = #tpu.pipeline_mode<synchronous>, transform_indices = @transform_5, window_bounds = array<i64: 9, 16, 128>}, {pipeline_mode = #tpu.pipeline_mode<synchronous>, transform_indices = @transform_6, window_bounds = array<i64: 1, 128>}, {pipeline_mode = #tpu.pipeline_mode<synchronous>, transform_indices = @transform_7, window_bounds = array<i64: 9, 128, 36>}, {pipeline_mode = #tpu.pipeline_mode<synchronous>, transform_indices = @transform_8, window_bounds = array<i64: 1, 36>}, {transform_indices = @transform_9, window_bounds = array<i64: 1, 1, 36>}]} {
    %cst = arith.constant 0.000000e+00 : f32
    %0 = vector.broadcast %cst : f32 to vector<63x64xf32>
    %c0 = arith.constant 0 : index
    %c0_0 = arith.constant 0 : index
    %c0_1 = arith.constant 0 : index
    %c0_2 = arith.constant 0 : index
    %1 = vector.load %arg1[%c0, %c0_0, %c0_1, %c0_2] : memref<1x4x81x3xbf16, #tpu.memory_space<vmem>>, vector<1x1x63x3xbf16>
    %2 = vector.shape_cast %1 : vector<1x1x63x3xbf16> to vector<63x3xbf16>
    %c0_3 = arith.constant 0 : index
    %c0_4 = arith.constant 0 : index
    %c0_5 = arith.constant 0 : index
    %3 = vector.load %arg2[%c0_3, %c0_4, %c0_5] : memref<9x3x64xbf16, #tpu.memory_space<vmem>>, vector<1x3x64xbf16>
    %4 = vector.shape_cast %3 : vector<1x3x64xbf16> to vector<3x64xbf16>
    %cst_6 = arith.constant dense<0.000000e+00> : vector<63x64xf32>
    %5 = tpu.matmul %2, %4, %cst_6 {dimension_numbers = #tpu.dot_dimension_numbers<[1], [0], [0], [1], [0, 0, 1, 1], [], []>} : vector<63x3xbf16>, vector<3x64xbf16>, vector<63x64xf32> -> vector<63x64xf32>
    %6 = arith.addf %0, %5 : vector<63x64xf32>
    %c0_7 = arith.constant 0 : index
    %c1 = arith.constant 1 : index
    %c0_8 = arith.constant 0 : index
    %c0_9 = arith.constant 0 : index
    %7 = vector.load %arg1[%c0_7, %c1, %c0_8, %c0_9] : memref<1x4x81x3xbf16, #tpu.memory_space<vmem>>, vector<1x1x63x3xbf16>
    %8 = vector.shape_cast %7 : vector<1x1x63x3xbf16> to vector<63x3xbf16>
    %c1_10 = arith.constant 1 : index
    %c0_11 = arith.constant 0 : index
    %c0_12 = arith.constant 0 : index
    %9 = vector.load %arg2[%c1_10, %c0_11, %c0_12] : memref<9x3x64xbf16, #tpu.memory_space<vmem>>, vector<1x3x64xbf16>
    %10 = vector.shape_cast %9 : vector<1x3x64xbf16> to vector<3x64xbf16>
    %cst_13 = arith.constant dense<0.000000e+00> : vector<63x64xf32>
    %11 = tpu.matmul %8, %10, %cst_13 {dimension_numbers = #tpu.dot_dimension_numbers<[1], [0], [0], [1], [0, 0, 1, 1], [], []>} : vector<63x3xbf16>, vector<3x64xbf16>, vector<63x64xf32> -> vector<63x64xf32>
    %12 = arith.addf %6, %11 : vector<63x64xf32>
    %c0_14 = arith.constant 0 : index
    %c0_15 = arith.constant 0 : index
    %c1_16 = arith.constant 1 : index
    %c0_17 = arith.constant 0 : index
    %13 = vector.load %arg1[%c0_14, %c0_15, %c1_16, %c0_17] : memref<1x4x81x3xbf16, #tpu.memory_space<vmem>>, vector<1x1x63x3xbf16>
    %14 = vector.shape_cast %13 : vector<1x1x63x3xbf16> to vector<63x3xbf16>
    %c2 = arith.constant 2 : index
    %c0_18 = arith.constant 0 : index
    %c0_19 = arith.constant 0 : index
    %15 = vector.load %arg2[%c2, %c0_18, %c0_19] : memref<9x3x64xbf16, #tpu.memory_space<vmem>>, vector<1x3x64xbf16>
    %16 = vector.shape_cast %15 : vector<1x3x64xbf16> to vector<3x64xbf16>
    %cst_20 = arith.constant dense<0.000000e+00> : vector<63x64xf32>
    %17 = tpu.matmul %14, %16, %cst_20 {dimension_numbers = #tpu.dot_dimension_numbers<[1], [0], [0], [1], [0, 0, 1, 1], [], []>} : vector<63x3xbf16>, vector<3x64xbf16>, vector<63x64xf32> -> vector<63x64xf32>
    %18 = arith.addf %12, %17 : vector<63x64xf32>
    %c0_21 = arith.constant 0 : index
    %c2_22 = arith.constant 2 : index
    %c0_23 = arith.constant 0 : index
    %c0_24 = arith.constant 0 : index
    %19 = vector.load %arg1[%c0_21, %c2_22, %c0_23, %c0_24] : memref<1x4x81x3xbf16, #tpu.memory_space<vmem>>, vector<1x1x63x3xbf16>
    %20 = vector.shape_cast %19 : vector<1x1x63x3xbf16> to vector<63x3xbf16>
    %c3 = arith.constant 3 : index
    %c0_25 = arith.constant 0 : index
    %c0_26 = arith.constant 0 : index
    %21 = vector.load %arg2[%c3, %c0_25, %c0_26] : memref<9x3x64xbf16, #tpu.memory_space<vmem>>, vector<1x3x64xbf16>
    %22 = vector.shape_cast %21 : vector<1x3x64xbf16> to vector<3x64xbf16>
    %cst_27 = arith.constant dense<0.000000e+00> : vector<63x64xf32>
    %23 = tpu.matmul %20, %22, %cst_27 {dimension_numbers = #tpu.dot_dimension_numbers<[1], [0], [0], [1], [0, 0, 1, 1], [], []>} : vector<63x3xbf16>, vector<3x64xbf16>, vector<63x64xf32> -> vector<63x64xf32>
    %24 = arith.addf %18, %23 : vector<63x64xf32>
    %c0_28 = arith.constant 0 : index
    %c3_29 = arith.constant 3 : index
    %c0_30 = arith.constant 0 : index
    %c0_31 = arith.constant 0 : index
    %25 = vector.load %arg1[%c0_28, %c3_29, %c0_30, %c0_31] : memref<1x4x81x3xbf16, #tpu.memory_space<vmem>>, vector<1x1x63x3xbf16>
    %26 = vector.shape_cast %25 : vector<1x1x63x3xbf16> to vector<63x3xbf16>
    %c4 = arith.constant 4 : index
    %c0_32 = arith.constant 0 : index
    %c0_33 = arith.constant 0 : index
    %27 = vector.load %arg2[%c4, %c0_32, %c0_33] : memref<9x3x64xbf16, #tpu.memory_space<vmem>>, vector<1x3x64xbf16>
    %28 = vector.shape_cast %27 : vector<1x3x64xbf16> to vector<3x64xbf16>
    %cst_34 = arith.constant dense<0.000000e+00> : vector<63x64xf32>
    %29 = tpu.matmul %26, %28, %cst_34 {dimension_numbers = #tpu.dot_dimension_numbers<[1], [0], [0], [1], [0, 0, 1, 1], [], []>} : vector<63x3xbf16>, vector<3x64xbf16>, vector<63x64xf32> -> vector<63x64xf32>
    %30 = arith.addf %24, %29 : vector<63x64xf32>
    %c0_35 = arith.constant 0 : index
    %c2_36 = arith.constant 2 : index
    %c1_37 = arith.constant 1 : index
    %c0_38 = arith.constant 0 : index
    %31 = vector.load %arg1[%c0_35, %c2_36, %c1_37, %c0_38] : memref<1x4x81x3xbf16, #tpu.memory_space<vmem>>, vector<1x1x63x3xbf16>
    %32 = vector.shape_cast %31 : vector<1x1x63x3xbf16> to vector<63x3xbf16>
    %c5 = arith.constant 5 : index
    %c0_39 = arith.constant 0 : index
    %c0_40 = arith.constant 0 : index
    %33 = vector.load %arg2[%c5, %c0_39, %c0_40] : memref<9x3x64xbf16, #tpu.memory_space<vmem>>, vector<1x3x64xbf16>
    %34 = vector.shape_cast %33 : vector<1x3x64xbf16> to vector<3x64xbf16>
    %cst_41 = arith.constant dense<0.000000e+00> : vector<63x64xf32>
    %35 = tpu.matmul %32, %34, %cst_41 {dimension_numbers = #tpu.dot_dimension_numbers<[1], [0], [0], [1], [0, 0, 1, 1], [], []>} : vector<63x3xbf16>, vector<3x64xbf16>, vector<63x64xf32> -> vector<63x64xf32>
    %36 = arith.addf %30, %35 : vector<63x64xf32>
    %c0_42 = arith.constant 0 : index
    %c0_43 = arith.constant 0 : index
    %c9 = arith.constant 9 : index
    %c0_44 = arith.constant 0 : index
    %37 = vector.load %arg1[%c0_42, %c0_43, %c9, %c0_44] : memref<1x4x81x3xbf16, #tpu.memory_space<vmem>>, vector<1x1x63x3xbf16>
    %38 = vector.shape_cast %37 : vector<1x1x63x3xbf16> to vector<63x3xbf16>
    %c6 = arith.constant 6 : index
    %c0_45 = arith.constant 0 : index
    %c0_46 = arith.constant 0 : index
    %39 = vector.load %arg2[%c6, %c0_45, %c0_46] : memref<9x3x64xbf16, #tpu.memory_space<vmem>>, vector<1x3x64xbf16>
    %40 = vector.shape_cast %39 : vector<1x3x64xbf16> to vector<3x64xbf16>
    %cst_47 = arith.constant dense<0.000000e+00> : vector<63x64xf32>
    %41 = tpu.matmul %38, %40, %cst_47 {dimension_numbers = #tpu.dot_dimension_numbers<[1], [0], [0], [1], [0, 0, 1, 1], [], []>} : vector<63x3xbf16>, vector<3x64xbf16>, vector<63x64xf32> -> vector<63x64xf32>
    %42 = arith.addf %36, %41 : vector<63x64xf32>
    %c0_48 = arith.constant 0 : index
    %c1_49 = arith.constant 1 : index
    %c9_50 = arith.constant 9 : index
    %c0_51 = arith.constant 0 : index
    %43 = vector.load %arg1[%c0_48, %c1_49, %c9_50, %c0_51] : memref<1x4x81x3xbf16, #tpu.memory_space<vmem>>, vector<1x1x63x3xbf16>
    %44 = vector.shape_cast %43 : vector<1x1x63x3xbf16> to vector<63x3xbf16>
    %c7 = arith.constant 7 : index
    %c0_52 = arith.constant 0 : index
    %c0_53 = arith.constant 0 : index
    %45 = vector.load %arg2[%c7, %c0_52, %c0_53] : memref<9x3x64xbf16, #tpu.memory_space<vmem>>, vector<1x3x64xbf16>
    %46 = vector.shape_cast %45 : vector<1x3x64xbf16> to vector<3x64xbf16>
    %cst_54 = arith.constant dense<0.000000e+00> : vector<63x64xf32>
    %47 = tpu.matmul %44, %46, %cst_54 {dimension_numbers = #tpu.dot_dimension_numbers<[1], [0], [0], [1], [0, 0, 1, 1], [], []>} : vector<63x3xbf16>, vector<3x64xbf16>, vector<63x64xf32> -> vector<63x64xf32>
    %48 = arith.addf %42, %47 : vector<63x64xf32>
    %c0_55 = arith.constant 0 : index
    %c0_56 = arith.constant 0 : index
    %c10 = arith.constant 10 : index
    %c0_57 = arith.constant 0 : index
    %49 = vector.load %arg1[%c0_55, %c0_56, %c10, %c0_57] : memref<1x4x81x3xbf16, #tpu.memory_space<vmem>>, vector<1x1x63x3xbf16>
    %50 = vector.shape_cast %49 : vector<1x1x63x3xbf16> to vector<63x3xbf16>
    %c8 = arith.constant 8 : index
    %c0_58 = arith.constant 0 : index
    %c0_59 = arith.constant 0 : index
    %51 = vector.load %arg2[%c8, %c0_58, %c0_59] : memref<9x3x64xbf16, #tpu.memory_space<vmem>>, vector<1x3x64xbf16>
    %52 = vector.shape_cast %51 : vector<1x3x64xbf16> to vector<3x64xbf16>
    %cst_60 = arith.constant dense<0.000000e+00> : vector<63x64xf32>
    %53 = tpu.matmul %50, %52, %cst_60 {dimension_numbers = #tpu.dot_dimension_numbers<[1], [0], [0], [1], [0, 0, 1, 1], [], []>} : vector<63x3xbf16>, vector<3x64xbf16>, vector<63x64xf32> -> vector<63x64xf32>
    %54 = arith.addf %48, %53 : vector<63x64xf32>
    %c0_61 = arith.constant 0 : index
    %c0_62 = arith.constant 0 : index
    %55 = vector.load %arg3[%c0_61, %c0_62] : memref<1x64xf32, #tpu.memory_space<vmem>>, vector<1x64xf32>
    %56 = vector.broadcast %55 : vector<1x64xf32> to vector<63x64xf32>
    %57 = arith.addf %54, %56 : vector<63x64xf32>
    %cst_63 = arith.constant 0.000000e+00 : f32
    %58 = vector.broadcast %cst_63 : f32 to vector<63x64xf32>
    %59 = arith.maximumf %57, %58 : vector<63x64xf32>
    %60 = arith.truncf %59 : vector<63x64xf32> to vector<63x64xbf16>
    %c0_64 = arith.constant 0 : index
    %c0_65 = arith.constant 0 : index
    %61 = vector.load %arg4[%c0_64, %c0_65] : memref<64x16xbf16, #tpu.memory_space<vmem>>, vector<64x16xbf16>
    %cst_66 = arith.constant dense<0.000000e+00> : vector<63x16xf32>
    %62 = tpu.matmul %60, %61, %cst_66 {dimension_numbers = #tpu.dot_dimension_numbers<[1], [0], [0], [1], [0, 0, 1, 1], [], []>} : vector<63x64xbf16>, vector<64x16xbf16>, vector<63x16xf32> -> vector<63x16xf32>
    %c0_67 = arith.constant 0 : index
    %c0_68 = arith.constant 0 : index
    %63 = vector.load %arg5[%c0_67, %c0_68] : memref<1x16xf32, #tpu.memory_space<vmem>>, vector<1x16xf32>
    %64 = vector.broadcast %63 : vector<1x16xf32> to vector<63x16xf32>
    %65 = arith.addf %62, %64 : vector<63x16xf32>
    %cst_69 = arith.constant 0.000000e+00 : f32
    %66 = vector.broadcast %cst_69 : f32 to vector<63x16xf32>
    %67 = arith.maximumf %65, %66 : vector<63x16xf32>
    %68 = tpu.iota {dimensions = array<i32: 0>} : vector<63x1xi32>
    %c9_i32 = arith.constant 9 : i32
    %c0_i32 = arith.constant 0 : i32
    %69 = arith.cmpi eq, %c9_i32, %c0_i32 : i32
    %c1_i32 = arith.constant 1 : i32
    %70 = arith.select %69, %c1_i32, %c9_i32 : i32
    %71 = vector.broadcast %70 : i32 to vector<63x1xi32>
    %72 = arith.remsi %68, %71 : vector<63x1xi32>
    %c0_i32_70 = arith.constant 0 : i32
    %73 = vector.broadcast %c0_i32_70 : i32 to vector<63x1xi32>
    %74 = arith.cmpi ne, %72, %73 : vector<63x1xi32>
    %c0_i32_71 = arith.constant 0 : i32
    %75 = vector.broadcast %c0_i32_71 : i32 to vector<63x1xi32>
    %76 = arith.cmpi slt, %72, %75 : vector<63x1xi32>
    %c0_i32_72 = arith.constant 0 : i32
    %77 = arith.cmpi slt, %70, %c0_i32_72 : i32
    %78 = vector.broadcast %77 : i1 to vector<63x1xi1>
    %79 = vector.broadcast %78 : vector<63x1xi1> to vector<63x1xi1>
    %80 = arith.xori %76, %79 : vector<63x1xi1>
    %81 = arith.andi %80, %74 : vector<63x1xi1>
    %82 = vector.broadcast %70 : i32 to vector<63x1xi32>
    %83 = arith.addi %72, %82 : vector<63x1xi32>
    %84 = arith.select %81, %83, %72 : vector<63x1xi1>, vector<63x1xi32>
    %c7_i32 = arith.constant 7 : i32
    %85 = vector.broadcast %c7_i32 : i32 to vector<63x1xi32>
    %86 = arith.cmpi slt, %84, %85 : vector<63x1xi32>
    %cst_73 = arith.constant 0.000000e+00 : f32
    %87 = vector.shape_cast %86 : vector<63x1xi1> to vector<63x1xi1>
    %88 = vector.broadcast %87 : vector<63x1xi1> to vector<63x16xi1>
    %89 = vector.broadcast %cst_73 : f32 to vector<63x16xf32>
    %90 = arith.select %88, %67, %89 : vector<63x16xi1>, vector<63x16xf32>
    %cst_74 = arith.constant 0.000000e+00 : bf16
    %91 = vector.broadcast %cst_74 : bf16 to vector<90x16xbf16>
    %c0_75 = arith.constant 0 : index
    %c0_76 = arith.constant 0 : index
    %92 = vector.load %arg11[%c0_75, %c0_76] : memref<90x16xbf16, #tpu.memory_space<vmem>>, vector<90x16xbf16>
    tpu.vector_store %arg11[%c0_75, %c0_76], %91 {strides = array<i32>} : memref<90x16xbf16, #tpu.memory_space<vmem>>, vector<90x16xbf16>,
    %93 = arith.truncf %90 : vector<63x16xf32> to vector<63x16xbf16>
    %c10_77 = arith.constant 10 : index
    %c0_78 = arith.constant 0 : index
    %94 = vector.load %arg11[%c10_77, %c0_78] : memref<90x16xbf16, #tpu.memory_space<vmem>>, vector<63x16xbf16>
    tpu.vector_store %arg11[%c10_77, %c0_78], %93 {strides = array<i32>} : memref<90x16xbf16, #tpu.memory_space<vmem>>, vector<63x16xbf16>,
    %cst_79 = arith.constant 0.000000e+00 : f32
    %95 = vector.broadcast %cst_79 : f32 to vector<63x128xf32>
    %c0_80 = arith.constant 0 : index
    %c0_81 = arith.constant 0 : index
    %96 = vector.load %arg11[%c0_80, %c0_81] : memref<90x16xbf16, #tpu.memory_space<vmem>>, vector<63x16xbf16>
    %c0_82 = arith.constant 0 : index
    %c0_83 = arith.constant 0 : index
    %c0_84 = arith.constant 0 : index
    %97 = vector.load %arg6[%c0_82, %c0_83, %c0_84] : memref<9x16x128xbf16, #tpu.memory_space<vmem>>, vector<1x16x128xbf16>
    %98 = vector.shape_cast %97 : vector<1x16x128xbf16> to vector<16x128xbf16>
    %cst_85 = arith.constant dense<0.000000e+00> : vector<63x128xf32>
    %99 = tpu.matmul %96, %98, %cst_85 {dimension_numbers = #tpu.dot_dimension_numbers<[1], [0], [0], [1], [0, 0, 1, 1], [], []>} : vector<63x16xbf16>, vector<16x128xbf16>, vector<63x128xf32> -> vector<63x128xf32>
    %100 = arith.addf %95, %99 : vector<63x128xf32>
    %c1_86 = arith.constant 1 : index
    %c0_87 = arith.constant 0 : index
    %101 = vector.load %arg11[%c1_86, %c0_87] : memref<90x16xbf16, #tpu.memory_space<vmem>>, vector<63x16xbf16>
    %c1_88 = arith.constant 1 : index
    %c0_89 = arith.constant 0 : index
    %c0_90 = arith.constant 0 : index
    %102 = vector.load %arg6[%c1_88, %c0_89, %c0_90] : memref<9x16x128xbf16, #tpu.memory_space<vmem>>, vector<1x16x128xbf16>
    %103 = vector.shape_cast %102 : vector<1x16x128xbf16> to vector<16x128xbf16>
    %cst_91 = arith.constant dense<0.000000e+00> : vector<63x128xf32>
    %104 = tpu.matmul %101, %103, %cst_91 {dimension_numbers = #tpu.dot_dimension_numbers<[1], [0], [0], [1], [0, 0, 1, 1], [], []>} : vector<63x16xbf16>, vector<16x128xbf16>, vector<63x128xf32> -> vector<63x128xf32>
    %105 = arith.addf %100, %104 : vector<63x128xf32>
    %c2_92 = arith.constant 2 : index
    %c0_93 = arith.constant 0 : index
    %106 = vector.load %arg11[%c2_92, %c0_93] : memref<90x16xbf16, #tpu.memory_space<vmem>>, vector<63x16xbf16>
    %c2_94 = arith.constant 2 : index
    %c0_95 = arith.constant 0 : index
    %c0_96 = arith.constant 0 : index
    %107 = vector.load %arg6[%c2_94, %c0_95, %c0_96] : memref<9x16x128xbf16, #tpu.memory_space<vmem>>, vector<1x16x128xbf16>
    %108 = vector.shape_cast %107 : vector<1x16x128xbf16> to vector<16x128xbf16>
    %cst_97 = arith.constant dense<0.000000e+00> : vector<63x128xf32>
    %109 = tpu.matmul %106, %108, %cst_97 {dimension_numbers = #tpu.dot_dimension_numbers<[1], [0], [0], [1], [0, 0, 1, 1], [], []>} : vector<63x16xbf16>, vector<16x128xbf16>, vector<63x128xf32> -> vector<63x128xf32>
    %110 = arith.addf %105, %109 : vector<63x128xf32>
    %c9_98 = arith.constant 9 : index
    %c0_99 = arith.constant 0 : index
    %111 = vector.load %arg11[%c9_98, %c0_99] : memref<90x16xbf16, #tpu.memory_space<vmem>>, vector<63x16xbf16>
    %c3_100 = arith.constant 3 : index
    %c0_101 = arith.constant 0 : index
    %c0_102 = arith.constant 0 : index
    %112 = vector.load %arg6[%c3_100, %c0_101, %c0_102] : memref<9x16x128xbf16, #tpu.memory_space<vmem>>, vector<1x16x128xbf16>
    %113 = vector.shape_cast %112 : vector<1x16x128xbf16> to vector<16x128xbf16>
    %cst_103 = arith.constant dense<0.000000e+00> : vector<63x128xf32>
    %114 = tpu.matmul %111, %113, %cst_103 {dimension_numbers = #tpu.dot_dimension_numbers<[1], [0], [0], [1], [0, 0, 1, 1], [], []>} : vector<63x16xbf16>, vector<16x128xbf16>, vector<63x128xf32> -> vector<63x128xf32>
    %115 = arith.addf %110, %114 : vector<63x128xf32>
    %c10_104 = arith.constant 10 : index
    %c0_105 = arith.constant 0 : index
    %116 = vector.load %arg11[%c10_104, %c0_105] : memref<90x16xbf16, #tpu.memory_space<vmem>>, vector<63x16xbf16>
    %c4_106 = arith.constant 4 : index
    %c0_107 = arith.constant 0 : index
    %c0_108 = arith.constant 0 : index
    %117 = vector.load %arg6[%c4_106, %c0_107, %c0_108] : memref<9x16x128xbf16, #tpu.memory_space<vmem>>, vector<1x16x128xbf16>
    %118 = vector.shape_cast %117 : vector<1x16x128xbf16> to vector<16x128xbf16>
    %cst_109 = arith.constant dense<0.000000e+00> : vector<63x128xf32>
    %119 = tpu.matmul %116, %118, %cst_109 {dimension_numbers = #tpu.dot_dimension_numbers<[1], [0], [0], [1], [0, 0, 1, 1], [], []>} : vector<63x16xbf16>, vector<16x128xbf16>, vector<63x128xf32> -> vector<63x128xf32>
    %120 = arith.addf %115, %119 : vector<63x128xf32>
    %c11 = arith.constant 11 : index
    %c0_110 = arith.constant 0 : index
    %121 = vector.load %arg11[%c11, %c0_110] : memref<90x16xbf16, #tpu.memory_space<vmem>>, vector<63x16xbf16>
    %c5_111 = arith.constant 5 : index
    %c0_112 = arith.constant 0 : index
    %c0_113 = arith.constant 0 : index
    %122 = vector.load %arg6[%c5_111, %c0_112, %c0_113] : memref<9x16x128xbf16, #tpu.memory_space<vmem>>, vector<1x16x128xbf16>
    %123 = vector.shape_cast %122 : vector<1x16x128xbf16> to vector<16x128xbf16>
    %cst_114 = arith.constant dense<0.000000e+00> : vector<63x128xf32>
    %124 = tpu.matmul %121, %123, %cst_114 {dimension_numbers = #tpu.dot_dimension_numbers<[1], [0], [0], [1], [0, 0, 1, 1], [], []>} : vector<63x16xbf16>, vector<16x128xbf16>, vector<63x128xf32> -> vector<63x128xf32>
    %125 = arith.addf %120, %124 : vector<63x128xf32>
    %c18 = arith.constant 18 : index
    %c0_115 = arith.constant 0 : index
    %126 = vector.load %arg11[%c18, %c0_115] : memref<90x16xbf16, #tpu.memory_space<vmem>>, vector<63x16xbf16>
    %c6_116 = arith.constant 6 : index
    %c0_117 = arith.constant 0 : index
    %c0_118 = arith.constant 0 : index
    %127 = vector.load %arg6[%c6_116, %c0_117, %c0_118] : memref<9x16x128xbf16, #tpu.memory_space<vmem>>, vector<1x16x128xbf16>
    %128 = vector.shape_cast %127 : vector<1x16x128xbf16> to vector<16x128xbf16>
    %cst_119 = arith.constant dense<0.000000e+00> : vector<63x128xf32>
    %129 = tpu.matmul %126, %128, %cst_119 {dimension_numbers = #tpu.dot_dimension_numbers<[1], [0], [0], [1], [0, 0, 1, 1], [], []>} : vector<63x16xbf16>, vector<16x128xbf16>, vector<63x128xf32> -> vector<63x128xf32>
    %130 = arith.addf %125, %129 : vector<63x128xf32>
    %c19 = arith.constant 19 : index
    %c0_120 = arith.constant 0 : index
    %131 = vector.load %arg11[%c19, %c0_120] : memref<90x16xbf16, #tpu.memory_space<vmem>>, vector<63x16xbf16>
    %c7_121 = arith.constant 7 : index
    %c0_122 = arith.constant 0 : index
    %c0_123 = arith.constant 0 : index
    %132 = vector.load %arg6[%c7_121, %c0_122, %c0_123] : memref<9x16x128xbf16, #tpu.memory_space<vmem>>, vector<1x16x128xbf16>
    %133 = vector.shape_cast %132 : vector<1x16x128xbf16> to vector<16x128xbf16>
    %cst_124 = arith.constant dense<0.000000e+00> : vector<63x128xf32>
    %134 = tpu.matmul %131, %133, %cst_124 {dimension_numbers = #tpu.dot_dimension_numbers<[1], [0], [0], [1], [0, 0, 1, 1], [], []>} : vector<63x16xbf16>, vector<16x128xbf16>, vector<63x128xf32> -> vector<63x128xf32>
    %135 = arith.addf %130, %134 : vector<63x128xf32>
    %c20 = arith.constant 20 : index
    %c0_125 = arith.constant 0 : index
    %136 = vector.load %arg11[%c20, %c0_125] : memref<90x16xbf16, #tpu.memory_space<vmem>>, vector<63x16xbf16>
    %c8_126 = arith.constant 8 : index
    %c0_127 = arith.constant 0 : index
    %c0_128 = arith.constant 0 : index
    %137 = vector.load %arg6[%c8_126, %c0_127, %c0_128] : memref<9x16x128xbf16, #tpu.memory_space<vmem>>, vector<1x16x128xbf16>
    %138 = vector.shape_cast %137 : vector<1x16x128xbf16> to vector<16x128xbf16>
    %cst_129 = arith.constant dense<0.000000e+00> : vector<63x128xf32>
    %139 = tpu.matmul %136, %138, %cst_129 {dimension_numbers = #tpu.dot_dimension_numbers<[1], [0], [0], [1], [0, 0, 1, 1], [], []>} : vector<63x16xbf16>, vector<16x128xbf16>, vector<63x128xf32> -> vector<63x128xf32>
    %140 = arith.addf %135, %139 : vector<63x128xf32>
    %c0_130 = arith.constant 0 : index
    %c0_131 = arith.constant 0 : index
    %141 = vector.load %arg7[%c0_130, %c0_131] : memref<1x128xf32, #tpu.memory_space<vmem>>, vector<1x128xf32>
    %142 = vector.broadcast %141 : vector<1x128xf32> to vector<63x128xf32>
    %143 = arith.addf %140, %142 : vector<63x128xf32>
    %cst_132 = arith.constant 0.000000e+00 : f32
    %144 = vector.broadcast %cst_132 : f32 to vector<63x128xf32>
    %145 = arith.maximumf %143, %144 : vector<63x128xf32>
    %146 = arith.truncf %145 : vector<63x128xf32> to vector<63x128xbf16>
    %cst_133 = arith.constant 0.000000e+00 : f32
    %147 = vector.broadcast %cst_133 : f32 to vector<41x36xf32>
    %148 = vector.extract_strided_slice %146 {offsets = [0, 0], sizes = [41, 128], strides = [1, 1]} : vector<63x128xbf16> to vector<41x128xbf16>
    %c0_134 = arith.constant 0 : index
    %c0_135 = arith.constant 0 : index
    %c0_136 = arith.constant 0 : index
    %149 = vector.load %arg8[%c0_134, %c0_135, %c0_136] : memref<9x128x36xbf16, #tpu.memory_space<vmem>>, vector<1x128x36xbf16>
    %150 = vector.shape_cast %149 : vector<1x128x36xbf16> to vector<128x36xbf16>
    %cst_137 = arith.constant dense<0.000000e+00> : vector<41x36xf32>
    %151 = tpu.matmul %148, %150, %cst_137 {dimension_numbers = #tpu.dot_dimension_numbers<[1], [0], [0], [1], [0, 0, 1, 1], [], []>} : vector<41x128xbf16>, vector<128x36xbf16>, vector<41x36xf32> -> vector<41x36xf32>
    %152 = arith.addf %147, %151 : vector<41x36xf32>
    %153 = vector.extract_strided_slice %146 {offsets = [1, 0], sizes = [41, 128], strides = [1, 1]} : vector<63x128xbf16> to vector<41x128xbf16>
    %c1_138 = arith.constant 1 : index
    %c0_139 = arith.constant 0 : index
    %c0_140 = arith.constant 0 : index
    %154 = vector.load %arg8[%c1_138, %c0_139, %c0_140] : memref<9x128x36xbf16, #tpu.memory_space<vmem>>, vector<1x128x36xbf16>
    %155 = vector.shape_cast %154 : vector<1x128x36xbf16> to vector<128x36xbf16>
    %cst_141 = arith.constant dense<0.000000e+00> : vector<41x36xf32>
    %156 = tpu.matmul %153, %155, %cst_141 {dimension_numbers = #tpu.dot_dimension_numbers<[1], [0], [0], [1], [0, 0, 1, 1], [], []>} : vector<41x128xbf16>, vector<128x36xbf16>, vector<41x36xf32> -> vector<41x36xf32>
    %157 = arith.addf %152, %156 : vector<41x36xf32>
    %158 = vector.extract_strided_slice %146 {offsets = [2, 0], sizes = [41, 128], strides = [1, 1]} : vector<63x128xbf16> to vector<41x128xbf16>
    %c2_142 = arith.constant 2 : index
    %c0_143 = arith.constant 0 : index
    %c0_144 = arith.constant 0 : index
    %159 = vector.load %arg8[%c2_142, %c0_143, %c0_144] : memref<9x128x36xbf16, #tpu.memory_space<vmem>>, vector<1x128x36xbf16>
    %160 = vector.shape_cast %159 : vector<1x128x36xbf16> to vector<128x36xbf16>
    %cst_145 = arith.constant dense<0.000000e+00> : vector<41x36xf32>
    %161 = tpu.matmul %158, %160, %cst_145 {dimension_numbers = #tpu.dot_dimension_numbers<[1], [0], [0], [1], [0, 0, 1, 1], [], []>} : vector<41x128xbf16>, vector<128x36xbf16>, vector<41x36xf32> -> vector<41x36xf32>
    %162 = arith.addf %157, %161 : vector<41x36xf32>
    %163 = vector.extract_strided_slice %146 {offsets = [9, 0], sizes = [41, 128], strides = [1, 1]} : vector<63x128xbf16> to vector<41x128xbf16>
    %c3_146 = arith.constant 3 : index
    %c0_147 = arith.constant 0 : index
    %c0_148 = arith.constant 0 : index
    %164 = vector.load %arg8[%c3_146, %c0_147, %c0_148] : memref<9x128x36xbf16, #tpu.memory_space<vmem>>, vector<1x128x36xbf16>
    %165 = vector.shape_cast %164 : vector<1x128x36xbf16> to vector<128x36xbf16>
    %cst_149 = arith.constant dense<0.000000e+00> : vector<41x36xf32>
    %166 = tpu.matmul %163, %165, %cst_149 {dimension_numbers = #tpu.dot_dimension_numbers<[1], [0], [0], [1], [0, 0, 1, 1], [], []>} : vector<41x128xbf16>, vector<128x36xbf16>, vector<41x36xf32> -> vector<41x36xf32>
    %167 = arith.addf %162, %166 : vector<41x36xf32>
    %168 = vector.extract_strided_slice %146 {offsets = [10, 0], sizes = [41, 128], strides = [1, 1]} : vector<63x128xbf16> to vector<41x128xbf16>
    %c4_150 = arith.constant 4 : index
    %c0_151 = arith.constant 0 : index
    %c0_152 = arith.constant 0 : index
    %169 = vector.load %arg8[%c4_150, %c0_151, %c0_152] : memref<9x128x36xbf16, #tpu.memory_space<vmem>>, vector<1x128x36xbf16>
    %170 = vector.shape_cast %169 : vector<1x128x36xbf16> to vector<128x36xbf16>
    %cst_153 = arith.constant dense<0.000000e+00> : vector<41x36xf32>
    %171 = tpu.matmul %168, %170, %cst_153 {dimension_numbers = #tpu.dot_dimension_numbers<[1], [0], [0], [1], [0, 0, 1, 1], [], []>} : vector<41x128xbf16>, vector<128x36xbf16>, vector<41x36xf32> -> vector<41x36xf32>
    %172 = arith.addf %167, %171 : vector<41x36xf32>
    %173 = vector.extract_strided_slice %146 {offsets = [11, 0], sizes = [41, 128], strides = [1, 1]} : vector<63x128xbf16> to vector<41x128xbf16>
    %c5_154 = arith.constant 5 : index
    %c0_155 = arith.constant 0 : index
    %c0_156 = arith.constant 0 : index
    %174 = vector.load %arg8[%c5_154, %c0_155, %c0_156] : memref<9x128x36xbf16, #tpu.memory_space<vmem>>, vector<1x128x36xbf16>
    %175 = vector.shape_cast %174 : vector<1x128x36xbf16> to vector<128x36xbf16>
    %cst_157 = arith.constant dense<0.000000e+00> : vector<41x36xf32>
    %176 = tpu.matmul %173, %175, %cst_157 {dimension_numbers = #tpu.dot_dimension_numbers<[1], [0], [0], [1], [0, 0, 1, 1], [], []>} : vector<41x128xbf16>, vector<128x36xbf16>, vector<41x36xf32> -> vector<41x36xf32>
    %177 = arith.addf %172, %176 : vector<41x36xf32>
    %178 = vector.extract_strided_slice %146 {offsets = [18, 0], sizes = [41, 128], strides = [1, 1]} : vector<63x128xbf16> to vector<41x128xbf16>
    %c6_158 = arith.constant 6 : index
    %c0_159 = arith.constant 0 : index
    %c0_160 = arith.constant 0 : index
    %179 = vector.load %arg8[%c6_158, %c0_159, %c0_160] : memref<9x128x36xbf16, #tpu.memory_space<vmem>>, vector<1x128x36xbf16>
    %180 = vector.shape_cast %179 : vector<1x128x36xbf16> to vector<128x36xbf16>
    %cst_161 = arith.constant dense<0.000000e+00> : vector<41x36xf32>
    %181 = tpu.matmul %178, %180, %cst_161 {dimension_numbers = #tpu.dot_dimension_numbers<[1], [0], [0], [1], [0, 0, 1, 1], [], []>} : vector<41x128xbf16>, vector<128x36xbf16>, vector<41x36xf32> -> vector<41x36xf32>
    %182 = arith.addf %177, %181 : vector<41x36xf32>
    %183 = vector.extract_strided_slice %146 {offsets = [19, 0], sizes = [41, 128], strides = [1, 1]} : vector<63x128xbf16> to vector<41x128xbf16>
    %c7_162 = arith.constant 7 : index
    %c0_163 = arith.constant 0 : index
    %c0_164 = arith.constant 0 : index
    %184 = vector.load %arg8[%c7_162, %c0_163, %c0_164] : memref<9x128x36xbf16, #tpu.memory_space<vmem>>, vector<1x128x36xbf16>
    %185 = vector.shape_cast %184 : vector<1x128x36xbf16> to vector<128x36xbf16>
    %cst_165 = arith.constant dense<0.000000e+00> : vector<41x36xf32>
    %186 = tpu.matmul %183, %185, %cst_165 {dimension_numbers = #tpu.dot_dimension_numbers<[1], [0], [0], [1], [0, 0, 1, 1], [], []>} : vector<41x128xbf16>, vector<128x36xbf16>, vector<41x36xf32> -> vector<41x36xf32>
    %187 = arith.addf %182, %186 : vector<41x36xf32>
    %188 = vector.extract_strided_slice %146 {offsets = [20, 0], sizes = [41, 128], strides = [1, 1]} : vector<63x128xbf16> to vector<41x128xbf16>
    %c8_166 = arith.constant 8 : index
    %c0_167 = arith.constant 0 : index
    %c0_168 = arith.constant 0 : index
    %189 = vector.load %arg8[%c8_166, %c0_167, %c0_168] : memref<9x128x36xbf16, #tpu.memory_space<vmem>>, vector<1x128x36xbf16>
    %190 = vector.shape_cast %189 : vector<1x128x36xbf16> to vector<128x36xbf16>
    %cst_169 = arith.constant dense<0.000000e+00> : vector<41x36xf32>
    %191 = tpu.matmul %188, %190, %cst_169 {dimension_numbers = #tpu.dot_dimension_numbers<[1], [0], [0], [1], [0, 0, 1, 1], [], []>} : vector<41x128xbf16>, vector<128x36xbf16>, vector<41x36xf32> -> vector<41x36xf32>
    %192 = arith.addf %187, %191 : vector<41x36xf32>
    %c0_170 = arith.constant 0 : index
    %c0_171 = arith.constant 0 : index
    %193 = vector.load %arg9[%c0_170, %c0_171] : memref<1x36xf32, #tpu.memory_space<vmem>>, vector<1x36xf32>
    %194 = vector.broadcast %193 : vector<1x36xf32> to vector<41x36xf32>
    %195 = arith.addf %192, %194 : vector<41x36xf32>
    %cst_172 = arith.constant 0.000000e+00 : f32
    %196 = vector.broadcast %cst_172 : f32 to vector<41x36xf32>
    %197 = arith.maximumf %195, %196 : vector<41x36xf32>
    %198 = tpu.iota {dimensions = array<i32: 0>} : vector<41x1xi32>
    %c18_i32 = arith.constant 18 : i32
    %c0_i32_173 = arith.constant 0 : i32
    %199 = arith.cmpi eq, %c18_i32, %c0_i32_173 : i32
    %c1_i32_174 = arith.constant 1 : i32
    %200 = arith.select %199, %c1_i32_174, %c18_i32 : i32
    %201 = vector.broadcast %200 : i32 to vector<41x1xi32>
    %202 = arith.remsi %198, %201 : vector<41x1xi32>
    %c0_i32_175 = arith.constant 0 : i32
    %203 = vector.broadcast %c0_i32_175 : i32 to vector<41x1xi32>
    %204 = arith.cmpi ne, %202, %203 : vector<41x1xi32>
    %c0_i32_176 = arith.constant 0 : i32
    %205 = vector.broadcast %c0_i32_176 : i32 to vector<41x1xi32>
    %206 = arith.cmpi slt, %202, %205 : vector<41x1xi32>
    %c0_i32_177 = arith.constant 0 : i32
    %207 = arith.cmpi slt, %200, %c0_i32_177 : i32
    %208 = vector.broadcast %207 : i1 to vector<41x1xi1>
    %209 = vector.broadcast %208 : vector<41x1xi1> to vector<41x1xi1>
    %210 = arith.xori %206, %209 : vector<41x1xi1>
    %211 = arith.andi %210, %204 : vector<41x1xi1>
    %212 = vector.broadcast %200 : i32 to vector<41x1xi32>
    %213 = arith.addi %202, %212 : vector<41x1xi32>
    %214 = arith.select %211, %213, %202 : vector<41x1xi1>, vector<41x1xi32>
    %c6_i32 = arith.constant 6 : i32
    %215 = vector.broadcast %c6_i32 : i32 to vector<41x1xi32>
    %216 = arith.cmpi slt, %214, %215 : vector<41x1xi32>
    %c2_i32 = arith.constant 2 : i32
    %c0_i32_178 = arith.constant 0 : i32
    %217 = arith.cmpi eq, %c2_i32, %c0_i32_178 : i32
    %c1_i32_179 = arith.constant 1 : i32
    %218 = arith.select %217, %c1_i32_179, %c2_i32 : i32
    %219 = vector.broadcast %218 : i32 to vector<41x1xi32>
    %220 = arith.remsi %198, %219 : vector<41x1xi32>
    %c0_i32_180 = arith.constant 0 : i32
    %221 = vector.broadcast %c0_i32_180 : i32 to vector<41x1xi32>
    %222 = arith.cmpi ne, %220, %221 : vector<41x1xi32>
    %c0_i32_181 = arith.constant 0 : i32
    %223 = vector.broadcast %c0_i32_181 : i32 to vector<41x1xi32>
    %224 = arith.cmpi slt, %220, %223 : vector<41x1xi32>
    %c0_i32_182 = arith.constant 0 : i32
    %225 = arith.cmpi slt, %218, %c0_i32_182 : i32
    %226 = vector.broadcast %225 : i1 to vector<41x1xi1>
    %227 = vector.broadcast %226 : vector<41x1xi1> to vector<41x1xi1>
    %228 = arith.xori %224, %227 : vector<41x1xi1>
    %229 = arith.andi %228, %222 : vector<41x1xi1>
    %230 = vector.broadcast %218 : i32 to vector<41x1xi32>
    %231 = arith.addi %220, %230 : vector<41x1xi32>
    %232 = arith.select %229, %231, %220 : vector<41x1xi1>, vector<41x1xi32>
    %c0_i32_183 = arith.constant 0 : i32
    %233 = vector.broadcast %c0_i32_183 : i32 to vector<41x1xi32>
    %234 = arith.cmpi eq, %232, %233 : vector<41x1xi32>
    %235 = arith.andi %216, %234 : vector<41x1xi1>
    %cst_184 = arith.constant 0.000000e+00 : f32
    %236 = vector.shape_cast %235 : vector<41x1xi1> to vector<41x1xi1>
    %237 = vector.broadcast %236 : vector<41x1xi1> to vector<41x36xi1>
    %238 = vector.broadcast %cst_184 : f32 to vector<41x36xf32>
    %239 = arith.select %237, %197, %238 : vector<41x36xi1>, vector<41x36xf32>
    %cst_185 = arith.constant dense<0.000000e+00> : vector<36xf32>
    %240 = vector.multi_reduction <add>, %239, %cst_185 [0] : vector<41x36xf32> to vector<36xf32>
    %241 = vector.shape_cast %240 : vector<36xf32> to vector<1x36xf32>
    %cst_186 = arith.constant 0.111111112 : f32
    %242 = vector.broadcast %cst_186 : f32 to vector<1x36xf32>
    %243 = arith.mulf %241, %242 : vector<1x36xf32>
    %c0_187 = arith.constant 0 : index
    %c0_188 = arith.constant 0 : index
    %c0_189 = arith.constant 0 : index
    %244 = vector.load %arg10[%c0_187, %c0_188, %c0_189] : memref<1x1x36xf32, #tpu.memory_space<vmem>>, vector<1x1x36xf32>
    %245 = vector.shape_cast %244 : vector<1x1x36xf32> to vector<1x36xf32>
    %246 = vector.shape_cast %243 : vector<1x36xf32> to vector<1x1x36xf32>
    tpu.vector_store %arg10[%c0_187, %c0_188, %c0_189], %246 {strides = array<i32>} : memref<1x1x36xf32, #tpu.memory_space<vmem>>, vector<1x1x36xf32>,
    return
  }
  func.func @transform_0(%arg0: i32) -> (i32, i32, i32, i32) {
    %c0_i32 = arith.constant 0 : i32
    %c0_i32_0 = arith.constant 0 : i32
    %c0_i32_1 = arith.constant 0 : i32
    %c0_i32_2 = arith.constant 0 : i32
    return %arg0, %c0_i32, %c0_i32_0, %c0_i32_1 : i32, i32, i32, i32
  }
  func.func @transform_1(%arg0: i32) -> (i32, i32, i32) {
    %c0_i32 = arith.constant 0 : i32
    %c0_i32_0 = arith.constant 0 : i32
    %c0_i32_1 = arith.constant 0 : i32
    %c0_i32_2 = arith.constant 0 : i32
    return %c0_i32, %c0_i32_0, %c0_i32_1 : i32, i32, i32
  }
  func.func @transform_2(%arg0: i32) -> (i32, i32) {
    %c0_i32 = arith.constant 0 : i32
    %c0_i32_0 = arith.constant 0 : i32
    %c0_i32_1 = arith.constant 0 : i32
    return %c0_i32, %c0_i32_0 : i32, i32
  }
  func.func @transform_3(%arg0: i32) -> (i32, i32) {
    %c0_i32 = arith.constant 0 : i32
    %c0_i32_0 = arith.constant 0 : i32
    %c0_i32_1 = arith.constant 0 : i32
    return %c0_i32, %c0_i32_0 : i32, i32
  }
  func.func @transform_4(%arg0: i32) -> (i32, i32) {
    %c0_i32 = arith.constant 0 : i32
    %c0_i32_0 = arith.constant 0 : i32
    %c0_i32_1 = arith.constant 0 : i32
    return %c0_i32, %c0_i32_0 : i32, i32
  }
  func.func @transform_5(%arg0: i32) -> (i32, i32, i32) {
    %c0_i32 = arith.constant 0 : i32
    %c0_i32_0 = arith.constant 0 : i32
    %c0_i32_1 = arith.constant 0 : i32
    %c0_i32_2 = arith.constant 0 : i32
    return %c0_i32, %c0_i32_0, %c0_i32_1 : i32, i32, i32
  }
  func.func @transform_6(%arg0: i32) -> (i32, i32) {
    %c0_i32 = arith.constant 0 : i32
    %c0_i32_0 = arith.constant 0 : i32
    %c0_i32_1 = arith.constant 0 : i32
    return %c0_i32, %c0_i32_0 : i32, i32
  }
  func.func @transform_7(%arg0: i32) -> (i32, i32, i32) {
    %c0_i32 = arith.constant 0 : i32
    %c0_i32_0 = arith.constant 0 : i32
    %c0_i32_1 = arith.constant 0 : i32
    %c0_i32_2 = arith.constant 0 : i32
    return %c0_i32, %c0_i32_0, %c0_i32_1 : i32, i32, i32
  }
  func.func @transform_8(%arg0: i32) -> (i32, i32) {
    %c0_i32 = arith.constant 0 : i32
    %c0_i32_0 = arith.constant 0 : i32
    %c0_i32_1 = arith.constant 0 : i32
    return %c0_i32, %c0_i32_0 : i32, i32
  }
  func.func @transform_9(%arg0: i32) -> (i32, i32, i32) {
    %c0_i32 = arith.constant 0 : i32
    %c0_i32_0 = arith.constant 0 : i32
    %c0_i32_1 = arith.constant 0 : i32
    return %arg0, %c0_i32, %c0_i32_0 : i32, i32, i32
  }
}

</mosaic_0001>

<llo_original>
// kernel: squeezenet_forward.1
$region0: #{squeezenet_forward.1}
  #allocation0 [shape = 'u32[]', space=smem, size = 0x4, offset = 0x4, fixed_abs, tag = 'smem constant byte address 0x4 - core index']
  #allocation1 [shape = 'u32[144,128]{1,0:T(1,128)}', space=vmem, size = 0x12000, scoped, tag = 'internal scratch']
  #allocation2 [shape = 'bf16[90,16]{1,0:T(8,128)(2,1)}', space=vmem, size = 0x6000, scoped, tag = 'scratch operand']
  %s0 = inlined_call_operand.vmem [shape: bf16[2,4,81,3], index: 0, kind: input, shape index: {}]
  %s1 = inlined_call_operand.vmem [shape: bf16[9,3,64], index: 1, kind: input, shape index: {}]
  %s2 = inlined_call_operand.vmem [shape: f32[1,64], index: 2, kind: input, shape index: {}]
  %s3 = inlined_call_operand.vmem [shape: bf16[64,16], index: 3, kind: input, shape index: {}]
  %s4 = inlined_call_operand.vmem [shape: f32[1,16], index: 4, kind: input, shape index: {}]
  %s5 = inlined_call_operand.vmem [shape: bf16[9,16,128], index: 5, kind: input, shape index: {}]
  %s6 = inlined_call_operand.vmem [shape: f32[1,128], index: 6, kind: input, shape index: {}]
  %s7 = inlined_call_operand.vmem [shape: bf16[9,128,36], index: 7, kind: input, shape index: {}]
  %s8 = inlined_call_operand.vmem [shape: f32[1,36], index: 8, kind: input, shape index: {}]
  %s9 = inlined_call_operand.hbm [shape: f32[2,1,36], index: 9, kind: output, shape index: {}]
  %s10 = sld [smem:[#allocation0]]
  $region69: #{squeezenet_forward.1} parent=0
    _
  %s12 = ssub.s32 1, %s10
  %s13 = scalar_select 0, %s12, %s10
  $region1: #{squeezenet_forward.1} parent=0
    #allocation3 [shape = 'u8[1024]{0}', space=vmem, size = 0x400, scoped, tag = 'output window, operand 0']
    #allocation4 [shape = 's32[2]{0}', space=sflag, size = 0x8, scoped, tag = 'scoped memory for squeezenet_forward.1']
    %14 = vsyncpa [#allocation4], 0
    %s15 = scalar_lea.sflag [#allocation4], 1
    %16 = vsyncpa %s15, 0
    loop: start=0, step=1, limit=4
    $region2: #{squeezenet_forward.1} parent=1 // loop_pre_header
      _
    $region3: #{squeezenet_forward.1} parent=1 // loop_header
      %s18 = sphi 0, %s22
      %p19 = scmp.ge.s32.totalorder %s18, 4
      %s28 = sphi 0, %s30
      %s31 = sphi 0, %s28
      %s32 = sphi 0, %s31
      %s48 = sphi 0, %s32
      %s52 = sphi 0, %s52
      %s54 = sphi 0, %s52
      %s55 = sphi 0, %s54
      %s69 = sphi 0, %s55
      %s73 = sphi 0, %s73
      %s75 = sphi 0, %s73
      %s76 = sphi 0, %s75
      %s90 = sphi 0, %s76
      %s94 = sphi 0, %s94
      %s96 = sphi 0, %s94
      %s97 = sphi 0, %s96
      %s111 = sphi 0, %s97
      %s115 = sphi 0, %s115
      %s117 = sphi 0, %s115
      %s118 = sphi 0, %s117
      %s132 = sphi 0, %s118
      %s136 = sphi 0, %s136
      %s138 = sphi 0, %s136
      %s139 = sphi 0, %s138
      %s153 = sphi 0, %s139
      %s157 = sphi 0, %s157
      %s159 = sphi 0, %s157
      %s160 = sphi 0, %s159
      %s174 = sphi 0, %s160
      %s178 = sphi 0, %s178
      %s180 = sphi 0, %s178
      %s181 = sphi 0, %s180
      %s195 = sphi 0, %s181
      %s199 = sphi 0, %s199
      %s201 = sphi 0, %s199
      %s202 = sphi 0, %s201
      %s216 = sphi 0, %s202
      %s222 = sphi 0, %s224
      %s225 = sphi 0, %s222
      %s226 = sphi 0, %s225
      %s242 = sphi 0, %s226
    $region4: #{squeezenet_forward.1} parent=1 // loop_header_branch
      %21 = sbr.rel (%p19) target = $region8
    $region5: #{squeezenet_forward.1} parent=1 // loop_body
      %s23 = ssub.s32 %s18, 1
      %s24 = ssub.s32 %s18, 2
      %s25 = sadd.s32 %s18, 1
      %s26 = ssub.s32 %s18, %s25
      %p27 = scmp.eq.s32.totalorder %s26, 0
      %s29 = sadd.s32 %s28, 1
      %s30 = scalar_select %p27, %s28, %s29
      %p33 = pneg %p27
      %p34 = scmp.eq.s32.totalorder %s18, 1
      %p35 = por %p33, %p34
      %p36 = scmp.ne.s32.totalorder %s28, %s31
      %p37 = scmp.eq.s32.totalorder %s18, 0
      %p38 = por %p36, %p37
      %p39 = scmp.ne.s32.totalorder %s28, %s31
      %p40 = scmp.eq.s32.totalorder %s23, 1
      %p41 = por %p39, %p40
      %p42 = scmp.ne.s32.totalorder %s31, %s32
      %p43 = scmp.eq.s32.totalorder %s23, 0
      %p44 = por %p42, %p43
      %p45 = scmp.ne.s32.totalorder %s31, %s32
      %p46 = scmp.eq.s32.totalorder %s24, 1
      %p47 = por %p45, %p46
      %p49 = scmp.ne.s32.totalorder %s32, %s48
      %p50 = scmp.eq.s32.totalorder %s24, 0
      %p51 = por %p49, %p50
      %s53 = sadd.s32 %s52, 1
      %p56 = scmp.eq.s32.totalorder %s18, 1
      %p57 = scmp.ne.s32.totalorder %s52, %s54
      %p58 = scmp.eq.s32.totalorder %s18, 0
      %p59 = por %p57, %p58
      %p60 = scmp.ne.s32.totalorder %s52, %s54
      %p61 = scmp.eq.s32.totalorder %s23, 1
      %p62 = por %p60, %p61
      %p63 = scmp.ne.s32.totalorder %s54, %s55
      %p64 = scmp.eq.s32.totalorder %s23, 0
      %p65 = por %p63, %p64
      %p66 = scmp.ne.s32.totalorder %s54, %s55
      %p67 = scmp.eq.s32.totalorder %s24, 1
      %p68 = por %p66, %p67
      %p70 = scmp.ne.s32.totalorder %s55, %s69
      %p71 = scmp.eq.s32.totalorder %s24, 0
      %p72 = por %p70, %p71
      %s74 = sadd.s32 %s73, 1
      %p77 = scmp.eq.s32.totalorder %s18, 1
      %p78 = scmp.ne.s32.totalorder %s73, %s75
      %p79 = scmp.eq.s32.totalorder %s18, 0
      %p80 = por %p78, %p79
      %p81 = scmp.ne.s32.totalorder %s73, %s75
      %p82 = scmp.eq.s32.totalorder %s23, 1
      %p83 = por %p81, %p82
      %p84 = scmp.ne.s32.totalorder %s75, %s76
      %p85 = scmp.eq.s32.totalorder %s23, 0
      %p86 = por %p84, %p85
      %p87 = scmp.ne.s32.totalorder %s75, %s76
      %p88 = scmp.eq.s32.totalorder %s24, 1
      %p89 = por %p87, %p88
      %p91 = scmp.ne.s32.totalorder %s76, %s90
      %p92 = scmp.eq.s32.totalorder %s24, 0
      %p93 = por %p91, %p92
      %s95 = sadd.s32 %s94, 1
      %p98 = scmp.eq.s32.totalorder %s18, 1
      %p99 = scmp.ne.s32.totalorder %s94, %s96
      %p100 = scmp.eq.s32.totalorder %s18, 0
      %p101 = por %p99, %p100
      %p102 = scmp.ne.s32.totalorder %s94, %s96
      %p103 = scmp.eq.s32.totalorder %s23, 1
      %p104 = por %p102, %p103
      %p105 = scmp.ne.s32.totalorder %s96, %s97
      %p106 = scmp.eq.s32.totalorder %s23, 0
      %p107 = por %p105, %p106
      %p108 = scmp.ne.s32.totalorder %s96, %s97
      %p109 = scmp.eq.s32.totalorder %s24, 1
      %p110 = por %p108, %p109
      %p112 = scmp.ne.s32.totalorder %s97, %s111
      %p113 = scmp.eq.s32.totalorder %s24, 0
      %p114 = por %p112, %p113
      %s116 = sadd.s32 %s115, 1
      %p119 = scmp.eq.s32.totalorder %s18, 1
      %p120 = scmp.ne.s32.totalorder %s115, %s117
      %p121 = scmp.eq.s32.totalorder %s18, 0
      %p122 = por %p120, %p121
      %p123 = scmp.ne.s32.totalorder %s115, %s117
      %p124 = scmp.eq.s32.totalorder %s23, 1
      %p125 = por %p123, %p124
      %p126 = scmp.ne.s32.totalorder %s117, %s118
      %p127 = scmp.eq.s32.totalorder %s23, 0
      %p128 = por %p126, %p127
      %p129 = scmp.ne.s32.totalorder %s117, %s118
      %p130 = scmp.eq.s32.totalorder %s24, 1
      %p131 = por %p129, %p130
      %p133 = scmp.ne.s32.totalorder %s118, %s132
      %p134 = scmp.eq.s32.totalorder %s24, 0
      %p135 = por %p133, %p134
      %s137 = sadd.s32 %s136, 1
      %p140 = scmp.eq.s32.totalorder %s18, 1
      %p141 = scmp.ne.s32.totalorder %s136, %s138
      %p142 = scmp.eq.s32.totalorder %s18, 0
      %p143 = por %p141, %p142
      %p144 = scmp.ne.s32.totalorder %s136, %s138
      %p145 = scmp.eq.s32.totalorder %s23, 1
      %p146 = por %p144, %p145
      %p147 = scmp.ne.s32.totalorder %s138, %s139
      %p148 = scmp.eq.s32.totalorder %s23, 0
      %p149 = por %p147, %p148
      %p150 = scmp.ne.s32.totalorder %s138, %s139
      %p151 = scmp.eq.s32.totalorder %s24, 1
      %p152 = por %p150, %p151
      %p154 = scmp.ne.s32.totalorder %s139, %s153
      %p155 = scmp.eq.s32.totalorder %s24, 0
      %p156 = por %p154, %p155
      %s158 = sadd.s32 %s157, 1
      %p161 = scmp.eq.s32.totalorder %s18, 1
      %p162 = scmp.ne.s32.totalorder %s157, %s159
      %p163 = scmp.eq.s32.totalorder %s18, 0
      %p164 = por %p162, %p163
      %p165 = scmp.ne.s32.totalorder %s157, %s159
      %p166 = scmp.eq.s32.totalorder %s23, 1
      %p167 = por %p165, %p166
      %p168 = scmp.ne.s32.totalorder %s159, %s160
      %p169 = scmp.eq.s32.totalorder %s23, 0
      %p170 = por %p168, %p169
      %p171 = scmp.ne.s32.totalorder %s159, %s160
      %p172 = scmp.eq.s32.totalorder %s24, 1
      %p173 = por %p171, %p172
      %p175 = scmp.ne.s32.totalorder %s160, %s174
      %p176 = scmp.eq.s32.totalorder %s24, 0
      %p177 = por %p175, %p176
      %s179 = sadd.s32 %s178, 1
      %p182 = scmp.eq.s32.totalorder %s18, 1
      %p183 = scmp.ne.s32.totalorder %s178, %s180
      %p184 = scmp.eq.s32.totalorder %s18, 0
      %p185 = por %p183, %p184
      %p186 = scmp.ne.s32.totalorder %s178, %s180
      %p187 = scmp.eq.s32.totalorder %s23, 1
      %p188 = por %p186, %p187
      %p189 = scmp.ne.s32.totalorder %s180, %s181
      %p190 = scmp.eq.s32.totalorder %s23, 0
      %p191 = por %p189, %p190
      %p192 = scmp.ne.s32.totalorder %s180, %s181
      %p193 = scmp.eq.s32.totalorder %s24, 1
      %p194 = por %p192, %p193
      %p196 = scmp.ne.s32.totalorder %s181, %s195
      %p197 = scmp.eq.s32.totalorder %s24, 0
      %p198 = por %p196, %p197
      %s200 = sadd.s32 %s199, 1
      %p203 = scmp.eq.s32.totalorder %s18, 1
      %p204 = scmp.ne.s32.totalorder %s199, %s201
      %p205 = scmp.eq.s32.totalorder %s18, 0
      %p206 = por %p204, %p205
      %p207 = scmp.ne.s32.totalorder %s199, %s201
      %p208 = scmp.eq.s32.totalorder %s23, 1
      %p209 = por %p207, %p208
      %p210 = scmp.ne.s32.totalorder %s201, %s202
      %p211 = scmp.eq.s32.totalorder %s23, 0
      %p212 = por %p210, %p211
      %p213 = scmp.ne.s32.totalorder %s201, %s202
      %p214 = scmp.eq.s32.totalorder %s24, 1
      %p215 = por %p213, %p214
      %p217 = scmp.ne.s32.totalorder %s202, %s216
      %p218 = scmp.eq.s32.totalorder %s24, 0
      %p219 = por %p217, %p218
      %s220 = ssub.s32 %s18, %s25
      %p221 = scmp.eq.s32.totalorder %s220, 0
      %s223 = sadd.s32 %s222, 1
      %s224 = scalar_select %p221, %s222, %s223
      %p227 = pneg %p221
      %p228 = scmp.eq.s32.totalorder %s18, 1
      %p229 = por %p227, %p228
      %p230 = scmp.ne.s32.totalorder %s222, %s225
      %p231 = scmp.eq.s32.totalorder %s18, 0
      %p232 = por %p230, %p231
      %p233 = scmp.ne.s32.totalorder %s222, %s225
      %p234 = scmp.eq.s32.totalorder %s23, 1
      %p235 = por %p233, %p234
      %p236 = scmp.ne.s32.totalorder %s225, %s226
      %p237 = scmp.eq.s32.totalorder %s23, 0
      %p238 = por %p236, %p237
      %p239 = scmp.ne.s32.totalorder %s225, %s226
      %p240 = scmp.eq.s32.totalorder %s24, 1
      %p241 = por %p239, %p240
      %p243 = scmp.ne.s32.totalorder %s226, %s242
      %p244 = scmp.eq.s32.totalorder %s24, 0
      %p245 = por %p243, %p244
      %p246 = scmp.le.s32.totalorder 1, %s18
      %p247 = scmp.lt.s32.totalorder %s18, 3
      %p248 = pnand %p246, %p247
      %p249 = pneg %p248
      // Predicated region
      $region9: #{squeezenet_forward.1} parent=5 // pred_check
        _
      $region10: #{squeezenet_forward.1} parent=5 // pred_check_branch
        %251 = sbr.rel (%p248) target = $region12
      $region11: #{squeezenet_forward.1} parent=5 // pred_region
        %s252 = ssub.s32 %s18, 1
        // Predicated region
        $region13: #{squeezenet_forward.1} parent=11 // pred_check
          %p253 = pneg %p65
        $region14: #{squeezenet_forward.1} parent=11 // pred_check_branch
          %255 = sbr.rel (%p253) target = $region16
        $region15: #{squeezenet_forward.1} parent=11 // pred_region
          _
        $region16: #{squeezenet_forward.1} parent=11 // pred_fallthru
          _
        // Predicated region
        $region17: #{squeezenet_forward.1} parent=11 // pred_check
          %p256 = pneg %p86
        $region18: #{squeezenet_forward.1} parent=11 // pred_check_branch
          %258 = sbr.rel (%p256) target = $region20
        $region19: #{squeezenet_forward.1} parent=11 // pred_region
          _
        $region20: #{squeezenet_forward.1} parent=11 // pred_fallthru
          _
        // Predicated region
        $region21: #{squeezenet_forward.1} parent=11 // pred_check
          %p259 = pneg %p107
        $region22: #{squeezenet_forward.1} parent=11 // pred_check_branch
          %261 = sbr.rel (%p259) target = $region24
        $region23: #{squeezenet_forward.1} parent=11 // pred_region
          _
        $region24: #{squeezenet_forward.1} parent=11 // pred_fallthru
          _
        // Predicated region
        $region25: #{squeezenet_forward.1} parent=11 // pred_check
          %p262 = pneg %p128
        $region26: #{squeezenet_forward.1} parent=11 // pred_check_branch
          %264 = sbr.rel (%p262) target = $region28
        $region27: #{squeezenet_forward.1} parent=11 // pred_region
          _
        $region28: #{squeezenet_forward.1} parent=11 // pred_fallthru
          _
        // Predicated region
        $region29: #{squeezenet_forward.1} parent=11 // pred_check
          %p265 = pneg %p149
        $region30: #{squeezenet_forward.1} parent=11 // pred_check_branch
          %267 = sbr.rel (%p265) target = $region32
        $region31: #{squeezenet_forward.1} parent=11 // pred_region
          _
        $region32: #{squeezenet_forward.1} parent=11 // pred_fallthru
          _
        // Predicated region
        $region33: #{squeezenet_forward.1} parent=11 // pred_check
          %p268 = pneg %p170
        $region34: #{squeezenet_forward.1} parent=11 // pred_check_branch
          %270 = sbr.rel (%p268) target = $region36
        $region35: #{squeezenet_forward.1} parent=11 // pred_region
          _
        $region36: #{squeezenet_forward.1} parent=11 // pred_fallthru
          _
        // Predicated region
        $region37: #{squeezenet_forward.1} parent=11 // pred_check
          %p271 = pneg %p191
        $region38: #{squeezenet_forward.1} parent=11 // pred_check_branch
          %273 = sbr.rel (%p271) target = $region40
        $region39: #{squeezenet_forward.1} parent=11 // pred_region
          _
        $region40: #{squeezenet_forward.1} parent=11 // pred_fallthru
          _
        // Predicated region
        $region41: #{squeezenet_forward.1} parent=11 // pred_check
          %p274 = pneg %p212
        $region42: #{squeezenet_forward.1} parent=11 // pred_check_branch
          %276 = sbr.rel (%p274) target = $region44
        $region43: #{squeezenet_forward.1} parent=11 // pred_region
          _
        $region44: #{squeezenet_forward.1} parent=11 // pred_fallthru
          _
      $region12: #{squeezenet_forward.1} parent=5 // pred_fallthru
        _
      %p277 = scmp.lt.s32.totalorder %s18, 2
      // Predicated region
      $region45: #{squeezenet_forward.1} parent=5 // pred_check
        %p278 = pneg %p277
      $region46: #{squeezenet_forward.1} parent=5 // pred_check_branch
        %280 = sbr.rel (%p278) target = $region48
      $region47: #{squeezenet_forward.1} parent=5 // pred_region
        // Predicated region
        $region49: #{squeezenet_forward.1} parent=47 // pred_check
          %p281 = pneg %p38
        $region50: #{squeezenet_forward.1} parent=47 // pred_check_branch
          %283 = sbr.rel (%p281) target = $region52
        $region51: #{squeezenet_forward.1} parent=47 // pred_region
          %p284 = scmp.lt.s32.totalorder %s18, 1
          %s285 = scalar_select %p284, %s18, 1
          %s286 = smul.addr %s285, 44
          %s287 = smul.addr %s286, 4
          %s288 = scalar_lea.vmem %s0, %s287
        $region52: #{squeezenet_forward.1} parent=47 // pred_fallthru
          _
      $region48: #{squeezenet_forward.1} parent=5 // pred_fallthru
        _
      %p289 = scmp.le.s32.totalorder 1, %s18
      %p290 = scmp.lt.s32.totalorder %s18, 3
      %p291 = pnand %p289, %p290
      %p292 = pneg %p291
      // Predicated region
      $region53: #{squeezenet_forward.1} parent=5 // pred_check
        _
      $region54: #{squeezenet_forward.1} parent=5 // pred_check_branch
        %294 = sbr.rel (%p291) target = $region56
      $region55: #{squeezenet_forward.1} parent=5 // pred_region
        %s295 = ssub.s32 %s18, 1
        %p296 = scmp.lt.s32.totalorder %s23, 1
        %s297 = scalar_select %p296, %s23, 1
        %s298 = smul.addr %s297, 44
        %s299 = smul.addr %s298, 4
        %s300 = scalar_lea.vmem %s0, %s299
        %p301 = pneg %p44
        %p302 = pneg %p41
        %p303 = pneg %p65
        %p304 = pneg %p62
        %p305 = pneg %p86
        %p306 = pneg %p83
        %p307 = pneg %p107
        %p308 = pneg %p104
        %p309 = pneg %p128
        %p310 = pneg %p125
        %p311 = pneg %p149
        %p312 = pneg %p146
        %p313 = pneg %p170
        %p314 = pneg %p167
        %p315 = pneg %p191
        %p316 = pneg %p188
        %p317 = pneg %p212
        %p318 = pneg %p209
        %p319 = pneg %p238
        %p320 = pneg %p235
        %s321 = sand.u32 %s225, 1
        %s322 = scalar_lea.sflag [#allocation4], %s321
        %s323 = sand.u32 %s225, 1
        %s324 = scalar_lea.vmem [#allocation3], %s323
        %p325 = scmp.lt.s32.totalorder %s23, 1
        %s326 = scalar_select %p325, %s23, 1
        %s327 = smul.addr %s326, 44
        %s328 = smul.addr %s327, 4
        %s329 = scalar_lea.vmem %s0, %s328
        %v331 = vld [vmem:[%s329] sm:$0xf]
        %v332 = vld [vmem:[%s329 + $0x4] sm:$0xf]
        %v333 = vld [vmem:[%s329 + $0x8] sm:$0xf]
        %v334 = vld [vmem:[%s329 + $0xc] sm:$0xf]
        %v335 = vld [vmem:[%s329 + $0x10] sm:$0xf]
        %v336 = vld [vmem:[%s329 + $0x14] sm:$0xf]
        %v337 = vld [vmem:[%s329 + $0x18] sm:$0xf]
        %v338 = vld [vmem:[%s329 + $0x1c] sm:$0xf]
        %v339 = vld [vmem:[%s1] sm:$0x3]
        %s340 = scalar_lea.vmem %s329, 44
        %v341 = vld [vmem:[%s340] sm:$0xf]
        %v342 = vld [vmem:[%s340 + $0x4] sm:$0xf]
        %v343 = vld [vmem:[%s340 + $0x8] sm:$0xf]
        %v344 = vld [vmem:[%s340 + $0xc] sm:$0xf]
        %v345 = vld [vmem:[%s340 + $0x10] sm:$0xf]
        %v346 = vld [vmem:[%s340 + $0x14] sm:$0xf]
        %v347 = vld [vmem:[%s340 + $0x18] sm:$0xf]
        %v348 = vld [vmem:[%s340 + $0x1c] sm:$0xf]
        %s349 = scalar_lea.vmem %s1, 2
        %v350 = vld [vmem:[%s349] sm:$0x3]
        %v359 = vunpack.c.l.b16 %v341
        %v360 = vunpack.c.l.b16 %v342
        %v361 = vunpack.c.l.b16 %v343
        %v362 = vunpack.c.l.b16 %v344
        %v363 = vunpack.c.l.b16 %v345
        %v364 = vunpack.c.l.b16 %v346
        %v365 = vunpack.c.l.b16 %v347
        %v366 = vunpack.c.l.b16 %v348
        %v367 = vpack.c.b16 %v360, %v359
        %v368 = vpack.c.b16 %v362, %v361
        %v369 = vpack.c.b16 %v364, %v363
        %v370 = vpack.c.b16 %v366, %v365
        %vm371 = vcmask 23552
        %v373 = vsel %vm371, %v367, 0
        %v376 = vsel %vm371, %v368, 0
        %v379 = vsel %vm371, %v369, 0
        %v382 = vsel %vm371, %v370, 0
        %vm384 = vcmask 1040384
        %vm385 = vcmask 1041408
        %v386 = vsel %vm384, 4294967295, 65535
        %v387 = vsel %vm385, %v386, 0
        %v389 = vand.u32 %v350, %v387
        %391 = vmatprep.subr.bf16.mxu0 0
        %392 = vmatpush1.bf16.msra.mxu0 %v389
        %393 = vmatprep.subr.bf16.mxu0 0
        %394 = vmatpush1.bf16.msra.mxu0 0
        %395 = vmatprep.subr.bf16.mxu0 0
        %396 = vmatpush1.bf16.msra.mxu0 0
        %397 = vmatprep.subr.bf16.mxu0 0
        %398 = vmatpush1.bf16.msra.mxu0 0
        %399 = vmatprep.subr.bf16.mxu0 0
        %400 = vmatpush1.bf16.msra.mxu0 0
        %401 = vmatprep.subr.bf16.mxu0 0
        %402 = vmatpush1.bf16.msra.mxu0 0
        %403 = vmatprep.subr.bf16.mxu0 0
        %404 = vmatpush1.bf16.msra.mxu0 0
        %405 = vmatprep.subr.bf16.mxu0 0
        %406 = vmatpush1.bf16.msra.mxu0 0
        %407 = vmatprep.subr.bf16.mxu0 0
        %408 = vmatpush1.bf16.msra.mxu0 0
        %409 = vmatprep.subr.bf16.mxu0 0
        %410 = vmatpush1.bf16.msra.mxu0 0
        %411 = vmatprep.subr.bf16.mxu0 0
        %412 = vmatpush1.bf16.msra.mxu0 0
        %413 = vmatprep.subr.bf16.mxu0 0
        %414 = vmatpush1.bf16.msra.mxu0 0
        %415 = vmatprep.subr.bf16.mxu0 0
        %416 = vmatpush1.bf16.msra.mxu0 0
        %417 = vmatprep.subr.bf16.mxu0 0
        %418 = vmatpush1.bf16.msra.mxu0 0
        %419 = vmatprep.subr.bf16.mxu0 0
        %420 = vmatpush1.bf16.msra.mxu0 0
        %421 = vmatprep.subr.bf16.mxu0 0
        %422 = vmatpush1.bf16.msra.mxu0 0
        %423 = vmatprep.mubr.bf16.mxu0 0
        %424 = vmatmul.mubr.bf16.gmra.mrb[0].mxu0 %v373
        %v425 = vpop.f32.mrb[0].mxu0
        %v426 = vadd.f32 0.0, %v425
        %v427 = vpop.f32.mrb[0].mxu0
        %v428 = vpop.f32.mrb[0].mxu0
        %v429 = vadd.f32 0.0, %v428
        %v430 = vpop.f32.mrb[0].mxu0
        %431 = vmatprep.mubr.bf16.mxu0 0
        %432 = vmatmul.mubr.bf16.gmra.mrb[0].mxu0 %v376
        %v433 = vpop.f32.mrb[0].mxu0
        %v434 = vadd.f32 0.0, %v433
        %v435 = vpop.f32.mrb[0].mxu0
        %v436 = vpop.f32.mrb[0].mxu0
        %v437 = vadd.f32 0.0, %v436
        %v438 = vpop.f32.mrb[0].mxu0
        %439 = vmatprep.mubr.bf16.mxu0 0
        %440 = vmatmul.mubr.bf16.gmra.mrb[0].mxu0 %v379
        %v441 = vpop.f32.mrb[0].mxu0
        %v442 = vadd.f32 0.0, %v441
        %v443 = vpop.f32.mrb[0].mxu0
        %v444 = vpop.f32.mrb[0].mxu0
        %v445 = vadd.f32 0.0, %v444
        %v446 = vpop.f32.mrb[0].mxu0
        %447 = vmatprep.mubr.bf16.mxu0 0
        %448 = vmatmul.mubr.bf16.gmra.mrb[0].mxu0 %v382
        %v449 = vpop.f32.mrb[0].mxu0
        %v450 = vadd.f32 0.0, %v449
        %v451 = vpop.f32.mrb[0].mxu0
        %v452 = vpop.f32.mrb[0].mxu0
        %v453 = vadd.f32 0.0, %v452
        %v454 = vpop.f32.mrb[0].mxu0
        %455 = vdwg.mxu0
        %v464 = vunpack.c.l.b16 %v331
        %v465 = vunpack.c.l.b16 %v332
        %v466 = vunpack.c.l.b16 %v333
        %v467 = vunpack.c.l.b16 %v334
        %v468 = vunpack.c.l.b16 %v335
        %v469 = vunpack.c.l.b16 %v336
        %v470 = vunpack.c.l.b16 %v337
        %v471 = vunpack.c.l.b16 %v338
        %v472 = vpack.c.b16 %v465, %v464
        %v473 = vpack.c.b16 %v467, %v466
        %v474 = vpack.c.b16 %v469, %v468
        %v475 = vpack.c.b16 %v471, %v470
        %v477 = vsel %vm371, %v472, 0
        %v480 = vsel %vm371, %v473, 0
        %v483 = vsel %vm371, %v474, 0
        %v486 = vsel %vm371, %v475, 0
        %v489 = vand.u32 %v339, %v387
        %491 = vmatprep.subr.bf16.mxu0 0
        %492 = vmatpush1.bf16.msra.mxu0 %v489
        %493 = vmatprep.subr.bf16.mxu0 0
        %494 = vmatpush1.bf16.msra.mxu0 0
        %495 = vmatprep.subr.bf16.mxu0 0
        %496 = vmatpush1.bf16.msra.mxu0 0
        %497 = vmatprep.subr.bf16.mxu0 0
        %498 = vmatpush1.bf16.msra.mxu0 0
        %499 = vmatprep.subr.bf16.mxu0 0
        %500 = vmatpush1.bf16.msra.mxu0 0
        %501 = vmatprep.subr.bf16.mxu0 0
        %502 = vmatpush1.bf16.msra.mxu0 0
        %503 = vmatprep.subr.bf16.mxu0 0
        %504 = vmatpush1.bf16.msra.mxu0 0
        %505 = vmatprep.subr.bf16.mxu0 0
        %506 = vmatpush1.bf16.msra.mxu0 0
        %507 = vmatprep.subr.bf16.mxu0 0
        %508 = vmatpush1.bf16.msra.mxu0 0
        %509 = vmatprep.subr.bf16.mxu0 0
        %510 = vmatpush1.bf16.msra.mxu0 0
        %511 = vmatprep.subr.bf16.mxu0 0
        %512 = vmatpush1.bf16.msra.mxu0 0
        %513 = vmatprep.subr.bf16.mxu0 0
        %514 = vmatpush1.bf16.msra.mxu0 0
        %515 = vmatprep.subr.bf16.mxu0 0
        %516 = vmatpush1.bf16.msra.mxu0 0
        %517 = vmatprep.subr.bf16.mxu0 0
        %518 = vmatpush1.bf16.msra.mxu0 0
        %519 = vmatprep.subr.bf16.mxu0 0
        %520 = vmatpush1.bf16.msra.mxu0 0
        %521 = vmatprep.subr.bf16.mxu0 0
        %522 = vmatpush1.bf16.msra.mxu0 0
        %523 = vmatprep.mubr.bf16.mxu0 0
        %524 = vmatmul.mubr.bf16.gmra.mrb[0].mxu0 %v477
        %v525 = vpop.f32.mrb[0].mxu0
        %v526 = vadd.f32 %v426, %v525
        %v527 = vpop.f32.mrb[0].mxu0
        %v528 = vpop.f32.mrb[0].mxu0
        %v529 = vadd.f32 %v429, %v528
        %v530 = vpop.f32.mrb[0].mxu0
        %531 = vmatprep.mubr.bf16.mxu0 0
        %532 = vmatmul.mubr.bf16.gmra.mrb[0].mxu0 %v480
        %v533 = vpop.f32.mrb[0].mxu0
        %v534 = vadd.f32 %v434, %v533
        %v535 = vpop.f32.mrb[0].mxu0
        %v536 = vpop.f32.mrb[0].mxu0
        %v537 = vadd.f32 %v437, %v536
        %v538 = vpop.f32.mrb[0].mxu0
        %539 = vmatprep.mubr.bf16.mxu0 0
        %540 = vmatmul.mubr.bf16.gmra.mrb[0].mxu0 %v483
        %v541 = vpop.f32.mrb[0].mxu0
        %v542 = vadd.f32 %v442, %v541
        %v543 = vpop.f32.mrb[0].mxu0
        %v544 = vpop.f32.mrb[0].mxu0
        %v545 = vadd.f32 %v445, %v544
        %v546 = vpop.f32.mrb[0].mxu0
        %547 = vmatprep.mubr.bf16.mxu0 0
        %548 = vmatmul.mubr.bf16.gmra.mrb[0].mxu0 %v486
        %v549 = vpop.f32.mrb[0].mxu0
        %v550 = vadd.f32 %v450, %v549
        %v551 = vpop.f32.mrb[0].mxu0
        %v552 = vpop.f32.mrb[0].mxu0
        %v553 = vadd.f32 %v453, %v552
        %v554 = vpop.f32.mrb[0].mxu0
        %555 = vdwg.mxu0
        %s556 = scalar_lea.vmem %s1, 4
        %v557 = vld [vmem:[%s556] sm:$0x3]
        %vm558 = vsmask.f32 7424
        %v559 = vshrl.u32 %v472, 16
        %v561 = vshll.u32 %v472, 16
        %v563 = vrot.slane %v561, 1
        %v564 = vor.u32 %v559, %v563
        %v565 = vshll.u32 %v473, 16
        %v567 = vrot.slane %v565, 1
        %v568 = vsel %vm558, %v564, %v567
        %v569 = vshrl.u32 %v473, 16
        %v571 = vor.u32 %v569, %v567
        %v572 = vshll.u32 %v474, 16
        %v574 = vrot.slane %v572, 1
        %v575 = vsel %vm558, %v571, %v574
        %v576 = vshrl.u32 %v474, 16
        %v578 = vor.u32 %v576, %v574
        %v579 = vshll.u32 %v475, 16
        %v581 = vrot.slane %v579, 1
        %v582 = vsel %vm558, %v578, %v581
        %v583 = vshrl.u32 %v475, 16
        %v585 = vor.u32 %v583, %v581
        %v587 = vsel %vm371, %v568, 0
        %v590 = vsel %vm371, %v575, 0
        %v593 = vsel %vm371, %v582, 0
        %v596 = vsel %vm371, %v585, 0
        %v599 = vand.u32 %v557, %v387
        %601 = vmatprep.subr.bf16.mxu0 0
        %602 = vmatpush1.bf16.msra.mxu0 %v599
        %603 = vmatprep.subr.bf16.mxu0 0
        %604 = vmatpush1.bf16.msra.mxu0 0
        %605 = vmatprep.subr.bf16.mxu0 0
        %606 = vmatpush1.bf16.msra.mxu0 0
        %607 = vmatprep.subr.bf16.mxu0 0
        %608 = vmatpush1.bf16.msra.mxu0 0
        %609 = vmatprep.subr.bf16.mxu0 0
        %610 = vmatpush1.bf16.msra.mxu0 0
        %611 = vmatprep.subr.bf16.mxu0 0
        %612 = vmatpush1.bf16.msra.mxu0 0
        %613 = vmatprep.subr.bf16.mxu0 0
        %614 = vmatpush1.bf16.msra.mxu0 0
        %615 = vmatprep.subr.bf16.mxu0 0
        %616 = vmatpush1.bf16.msra.mxu0 0
        %617 = vmatprep.subr.bf16.mxu0 0
        %618 = vmatpush1.bf16.msra.mxu0 0
        %619 = vmatprep.subr.bf16.mxu0 0
        %620 = vmatpush1.bf16.msra.mxu0 0
        %621 = vmatprep.subr.bf16.mxu0 0
        %622 = vmatpush1.bf16.msra.mxu0 0
        %623 = vmatprep.subr.bf16.mxu0 0
        %624 = vmatpush1.bf16.msra.mxu0 0
        %625 = vmatprep.subr.bf16.mxu0 0
        %626 = vmatpush1.bf16.msra.mxu0 0
        %627 = vmatprep.subr.bf16.mxu0 0
        %628 = vmatpush1.bf16.msra.mxu0 0
        %629 = vmatprep.subr.bf16.mxu0 0
        %630 = vmatpush1.bf16.msra.mxu0 0
        %631 = vmatprep.subr.bf16.mxu0 0
        %632 = vmatpush1.bf16.msra.mxu0 0
        %633 = vmatprep.mubr.bf16.mxu0 0
        %634 = vmatmul.mubr.bf16.gmra.mrb[0].mxu0 %v587
        %v635 = vpop.f32.mrb[0].mxu0
        %v636 = vadd.f32 0.0, %v635
        %v637 = vpop.f32.mrb[0].mxu0
        %v638 = vpop.f32.mrb[0].mxu0
        %v639 = vadd.f32 0.0, %v638
        %v640 = vpop.f32.mrb[0].mxu0
        %641 = vmatprep.mubr.bf16.mxu0 0
        %642 = vmatmul.mubr.bf16.gmra.mrb[0].mxu0 %v590
        %v643 = vpop.f32.mrb[0].mxu0
        %v644 = vadd.f32 0.0, %v643
        %v645 = vpop.f32.mrb[0].mxu0
        %v646 = vpop.f32.mrb[0].mxu0
        %v647 = vadd.f32 0.0, %v646
        %v648 = vpop.f32.mrb[0].mxu0
        %649 = vmatprep.mubr.bf16.mxu0 0
        %650 = vmatmul.mubr.bf16.gmra.mrb[0].mxu0 %v593
        %v651 = vpop.f32.mrb[0].mxu0
        %v652 = vadd.f32 0.0, %v651
        %v653 = vpop.f32.mrb[0].mxu0
        %v654 = vpop.f32.mrb[0].mxu0
        %v655 = vadd.f32 0.0, %v654
        %v656 = vpop.f32.mrb[0].mxu0
        %657 = vmatprep.mubr.bf16.mxu0 0
        %658 = vmatmul.mubr.bf16.gmra.mrb[0].mxu0 %v596
        %v659 = vpop.f32.mrb[0].mxu0
        %v660 = vadd.f32 0.0, %v659
        %v661 = vpop.f32.mrb[0].mxu0
        %v662 = vpop.f32.mrb[0].mxu0
        %v663 = vadd.f32 0.0, %v662
        %v664 = vpop.f32.mrb[0].mxu0
        %665 = vdwg.mxu0
        %v666 = vadd.f32 %v526, %v636
        %v667 = vadd.f32 %v529, %v639
        %v668 = vadd.f32 %v534, %v644
        %v669 = vadd.f32 %v537, %v647
        %v670 = vadd.f32 %v542, %v652
        %v671 = vadd.f32 %v545, %v655
        %v672 = vadd.f32 %v550, %v660
        %v673 = vadd.f32 %v553, %v663
        %s674 = scalar_lea.vmem %s329, 88
        %v675 = vld [vmem:[%s674] sm:$0xf]
        %v676 = vld [vmem:[%s674 + $0x4] sm:$0xf]
        %v677 = vld [vmem:[%s674 + $0x8] sm:$0xf]
        %v678 = vld [vmem:[%s674 + $0xc] sm:$0xf]
        %v679 = vld [vmem:[%s674 + $0x10] sm:$0xf]
        %v680 = vld [vmem:[%s674 + $0x14] sm:$0xf]
        %v681 = vld [vmem:[%s674 + $0x18] sm:$0xf]
        %v682 = vld [vmem:[%s674 + $0x1c] sm:$0xf]
        %s683 = scalar_lea.vmem %s1, 6
        %v684 = vld [vmem:[%s683] sm:$0x3]
        %v693 = vunpack.c.l.b16 %v675
        %v694 = vunpack.c.l.b16 %v676
        %v695 = vunpack.c.l.b16 %v677
        %v696 = vunpack.c.l.b16 %v678
        %v697 = vunpack.c.l.b16 %v679
        %v698 = vunpack.c.l.b16 %v680
        %v699 = vunpack.c.l.b16 %v681
        %v700 = vunpack.c.l.b16 %v682
        %v701 = vpack.c.b16 %v694, %v693
        %v702 = vpack.c.b16 %v696, %v695
        %v703 = vpack.c.b16 %v698, %v697
        %v704 = vpack.c.b16 %v700, %v699
        %v706 = vsel %vm371, %v701, 0
        %v709 = vsel %vm371, %v702, 0
        %v712 = vsel %vm371, %v703, 0
        %v715 = vsel %vm371, %v704, 0
        %v718 = vand.u32 %v684, %v387
        %720 = vmatprep.subr.bf16.mxu0 0
        %721 = vmatpush1.bf16.msra.mxu0 %v718
        %722 = vmatprep.subr.bf16.mxu0 0
        %723 = vmatpush1.bf16.msra.mxu0 0
        %724 = vmatprep.subr.bf16.mxu0 0
        %725 = vmatpush1.bf16.msra.mxu0 0
        %726 = vmatprep.subr.bf16.mxu0 0
        %727 = vmatpush1.bf16.msra.mxu0 0
        %728 = vmatprep.subr.bf16.mxu0 0
        %729 = vmatpush1.bf16.msra.mxu0 0
        %730 = vmatprep.subr.bf16.mxu0 0
        %731 = vmatpush1.bf16.msra.mxu0 0
        %732 = vmatprep.subr.bf16.mxu0 0
        %733 = vmatpush1.bf16.msra.mxu0 0
        %734 = vmatprep.subr.bf16.mxu0 0
        %735 = vmatpush1.bf16.msra.mxu0 0
        %736 = vmatprep.subr.bf16.mxu0 0
        %737 = vmatpush1.bf16.msra.mxu0 0
        %738 = vmatprep.subr.bf16.mxu0 0
        %739 = vmatpush1.bf16.msra.mxu0 0
        %740 = vmatprep.subr.bf16.mxu0 0
        %741 = vmatpush1.bf16.msra.mxu0 0
        %742 = vmatprep.subr.bf16.mxu0 0
        %743 = vmatpush1.bf16.msra.mxu0 0
        %744 = vmatprep.subr.bf16.mxu0 0
        %745 = vmatpush1.bf16.msra.mxu0 0
        %746 = vmatprep.subr.bf16.mxu0 0
        %747 = vmatpush1.bf16.msra.mxu0 0
        %748 = vmatprep.subr.bf16.mxu0 0
        %749 = vmatpush1.bf16.msra.mxu0 0
        %750 = vmatprep.subr.bf16.mxu0 0
        %751 = vmatpush1.bf16.msra.mxu0 0
        %752 = vmatprep.mubr.bf16.mxu0 0
        %753 = vmatmul.mubr.bf16.gmra.mrb[0].mxu0 %v706
        %v754 = vpop.f32.mrb[0].mxu0
        %v755 = vadd.f32 0.0, %v754
        %v756 = vpop.f32.mrb[0].mxu0
        %v757 = vpop.f32.mrb[0].mxu0
        %v758 = vadd.f32 0.0, %v757
        %v759 = vpop.f32.mrb[0].mxu0
        %760 = vmatprep.mubr.bf16.mxu0 0
        %761 = vmatmul.mubr.bf16.gmra.mrb[0].mxu0 %v709
        %v762 = vpop.f32.mrb[0].mxu0
        %v763 = vadd.f32 0.0, %v762
        %v764 = vpop.f32.mrb[0].mxu0
        %v765 = vpop.f32.mrb[0].mxu0
        %v766 = vadd.f32 0.0, %v765
        %v767 = vpop.f32.mrb[0].mxu0
        %768 = vmatprep.mubr.bf16.mxu0 0
        %769 = vmatmul.mubr.bf16.gmra.mrb[0].mxu0 %v712
        %v770 = vpop.f32.mrb[0].mxu0
        %v771 = vadd.f32 0.0, %v770
        %v772 = vpop.f32.mrb[0].mxu0
        %v773 = vpop.f32.mrb[0].mxu0
        %v774 = vadd.f32 0.0, %v773
        %v775 = vpop.f32.mrb[0].mxu0
        %776 = vmatprep.mubr.bf16.mxu0 0
        %777 = vmatmul.mubr.bf16.gmra.mrb[0].mxu0 %v715
        %v778 = vpop.f32.mrb[0].mxu0
        %v779 = vadd.f32 0.0, %v778
        %v780 = vpop.f32.mrb[0].mxu0
        %v781 = vpop.f32.mrb[0].mxu0
        %v782 = vadd.f32 0.0, %v781
        %v783 = vpop.f32.mrb[0].mxu0
        %784 = vdwg.mxu0
        %v785 = vadd.f32 %v666, %v755
        %v786 = vadd.f32 %v667, %v758
        %v787 = vadd.f32 %v668, %v763
        %v788 = vadd.f32 %v669, %v766
        %v789 = vadd.f32 %v670, %v771
        %v790 = vadd.f32 %v671, %v774
        %v791 = vadd.f32 %v672, %v779
        %v792 = vadd.f32 %v673, %v782
        %s793 = scalar_lea.vmem %s329, 132
        %v794 = vld [vmem:[%s793] sm:$0xf]
        %v795 = vld [vmem:[%s793 + $0x4] sm:$0xf]
        %v796 = vld [vmem:[%s793 + $0x8] sm:$0xf]
        %v797 = vld [vmem:[%s793 + $0xc] sm:$0xf]
        %v798 = vld [vmem:[%s793 + $0x10] sm:$0xf]
        %v799 = vld [vmem:[%s793 + $0x14] sm:$0xf]
        %v800 = vld [vmem:[%s793 + $0x18] sm:$0xf]
        %v801 = vld [vmem:[%s793 + $0x1c] sm:$0xf]
        %s802 = scalar_lea.vmem %s1, 8
        %v803 = vld [vmem:[%s802] sm:$0x3]
        %v812 = vunpack.c.l.b16 %v794
        %v813 = vunpack.c.l.b16 %v795
        %v814 = vunpack.c.l.b16 %v796
        %v815 = vunpack.c.l.b16 %v797
        %v816 = vunpack.c.l.b16 %v798
        %v817 = vunpack.c.l.b16 %v799
        %v818 = vunpack.c.l.b16 %v800
        %v819 = vunpack.c.l.b16 %v801
        %v820 = vpack.c.b16 %v813, %v812
        %v821 = vpack.c.b16 %v815, %v814
        %v822 = vpack.c.b16 %v817, %v816
        %v823 = vpack.c.b16 %v819, %v818
        %v825 = vsel %vm371, %v820, 0
        %v828 = vsel %vm371, %v821, 0
        %v831 = vsel %vm371, %v822, 0
        %v834 = vsel %vm371, %v823, 0
        %v837 = vand.u32 %v803, %v387
        %839 = vmatprep.subr.bf16.mxu0 0
        %840 = vmatpush1.bf16.msra.mxu0 %v837
        %841 = vmatprep.subr.bf16.mxu0 0
        %842 = vmatpush1.bf16.msra.mxu0 0
        %843 = vmatprep.subr.bf16.mxu0 0
        %844 = vmatpush1.bf16.msra.mxu0 0
        %845 = vmatprep.subr.bf16.mxu0 0
        %846 = vmatpush1.bf16.msra.mxu0 0
        %847 = vmatprep.subr.bf16.mxu0 0
        %848 = vmatpush1.bf16.msra.mxu0 0
        %849 = vmatprep.subr.bf16.mxu0 0
        %850 = vmatpush1.bf16.msra.mxu0 0
        %851 = vmatprep.subr.bf16.mxu0 0
        %852 = vmatpush1.bf16.msra.mxu0 0
        %853 = vmatprep.subr.bf16.mxu0 0
        %854 = vmatpush1.bf16.msra.mxu0 0
        %855 = vmatprep.subr.bf16.mxu0 0
        %856 = vmatpush1.bf16.msra.mxu0 0
        %857 = vmatprep.subr.bf16.mxu0 0
        %858 = vmatpush1.bf16.msra.mxu0 0
        %859 = vmatprep.subr.bf16.mxu0 0
        %860 = vmatpush1.bf16.msra.mxu0 0
        %861 = vmatprep.subr.bf16.mxu0 0
        %862 = vmatpush1.bf16.msra.mxu0 0
        %863 = vmatprep.subr.bf16.mxu0 0
        %864 = vmatpush1.bf16.msra.mxu0 0
        %865 = vmatprep.subr.bf16.mxu0 0
        %866 = vmatpush1.bf16.msra.mxu0 0
        %867 = vmatprep.subr.bf16.mxu0 0
        %868 = vmatpush1.bf16.msra.mxu0 0
        %869 = vmatprep.subr.bf16.mxu0 0
        %870 = vmatpush1.bf16.msra.mxu0 0
        %871 = vmatprep.mubr.bf16.mxu0 0
        %872 = vmatmul.mubr.bf16.gmra.mrb[0].mxu0 %v825
        %v873 = vpop.f32.mrb[0].mxu0
        %v874 = vadd.f32 0.0, %v873
        %v875 = vpop.f32.mrb[0].mxu0
        %v876 = vpop.f32.mrb[0].mxu0
        %v877 = vadd.f32 0.0, %v876
        %v878 = vpop.f32.mrb[0].mxu0
        %879 = vmatprep.mubr.bf16.mxu0 0
        %880 = vmatmul.mubr.bf16.gmra.mrb[0].mxu0 %v828
        %v881 = vpop.f32.mrb[0].mxu0
        %v882 = vadd.f32 0.0, %v881
        %v883 = vpop.f32.mrb[0].mxu0
        %v884 = vpop.f32.mrb[0].mxu0
        %v885 = vadd.f32 0.0, %v884
        %v886 = vpop.f32.mrb[0].mxu0
        %887 = vmatprep.mubr.bf16.mxu0 0
        %888 = vmatmul.mubr.bf16.gmra.mrb[0].mxu0 %v831
        %v889 = vpop.f32.mrb[0].mxu0
        %v890 = vadd.f32 0.0, %v889
        %v891 = vpop.f32.mrb[0].mxu0
        %v892 = vpop.f32.mrb[0].mxu0
        %v893 = vadd.f32 0.0, %v892
        %v894 = vpop.f32.mrb[0].mxu0
        %895 = vmatprep.mubr.bf16.mxu0 0
        %896 = vmatmul.mubr.bf16.gmra.mrb[0].mxu0 %v834
        %v897 = vpop.f32.mrb[0].mxu0
        %v898 = vadd.f32 0.0, %v897
        %v899 = vpop.f32.mrb[0].mxu0
        %v900 = vpop.f32.mrb[0].mxu0
        %v901 = vadd.f32 0.0, %v900
        %v902 = vpop.f32.mrb[0].mxu0
        %903 = vdwg.mxu0
        %v904 = vadd.f32 %v785, %v874
        %v905 = vadd.f32 %v786, %v877
        %v906 = vadd.f32 %v787, %v882
        %v907 = vadd.f32 %v788, %v885
        %v908 = vadd.f32 %v789, %v890
        %v909 = vadd.f32 %v790, %v893
        %v910 = vadd.f32 %v791, %v898
        %v911 = vadd.f32 %v792, %v901
        %s912 = scalar_lea.vmem %s1, 10
        %v913 = vld [vmem:[%s912] sm:$0x3]
        %v914 = vshrl.u32 %v701, 16
        %v916 = vshll.u32 %v701, 16
        %v918 = vrot.slane %v916, 1
        %v919 = vor.u32 %v914, %v918
        %v920 = vshll.u32 %v702, 16
        %v922 = vrot.slane %v920, 1
        %v923 = vsel %vm558, %v919, %v922
        %v924 = vshrl.u32 %v702, 16
        %v926 = vor.u32 %v924, %v922
        %v927 = vshll.u32 %v703, 16
        %v929 = vrot.slane %v927, 1
        %v930 = vsel %vm558, %v926, %v929
        %v931 = vshrl.u32 %v703, 16
        %v933 = vor.u32 %v931, %v929
        %v934 = vshll.u32 %v704, 16
        %v936 = vrot.slane %v934, 1
        %v937 = vsel %vm558, %v933, %v936
        %v938 = vshrl.u32 %v704, 16
        %v940 = vor.u32 %v938, %v936
        %v942 = vsel %vm371, %v923, 0
        %v945 = vsel %vm371, %v930, 0
        %v948 = vsel %vm371, %v937, 0
        %v951 = vsel %vm371, %v940, 0
        %v954 = vand.u32 %v913, %v387
        %956 = vmatprep.subr.bf16.mxu0 0
        %957 = vmatpush1.bf16.msra.mxu0 %v954
        %958 = vmatprep.subr.bf16.mxu0 0
        %959 = vmatpush1.bf16.msra.mxu0 0
        %960 = vmatprep.subr.bf16.mxu0 0
        %961 = vmatpush1.bf16.msra.mxu0 0
        %962 = vmatprep.subr.bf16.mxu0 0
        %963 = vmatpush1.bf16.msra.mxu0 0
        %964 = vmatprep.subr.bf16.mxu0 0
        %965 = vmatpush1.bf16.msra.mxu0 0
        %966 = vmatprep.subr.bf16.mxu0 0
        %967 = vmatpush1.bf16.msra.mxu0 0
        %968 = vmatprep.subr.bf16.mxu0 0
        %969 = vmatpush1.bf16.msra.mxu0 0
        %970 = vmatprep.subr.bf16.mxu0 0
        %971 = vmatpush1.bf16.msra.mxu0 0
        %972 = vmatprep.subr.bf16.mxu0 0
        %973 = vmatpush1.bf16.msra.mxu0 0
        %974 = vmatprep.subr.bf16.mxu0 0
        %975 = vmatpush1.bf16.msra.mxu0 0
        %976 = vmatprep.subr.bf16.mxu0 0
        %977 = vmatpush1.bf16.msra.mxu0 0
        %978 = vmatprep.subr.bf16.mxu0 0
        %979 = vmatpush1.bf16.msra.mxu0 0
        %980 = vmatprep.subr.bf16.mxu0 0
        %981 = vmatpush1.bf16.msra.mxu0 0
        %982 = vmatprep.subr.bf16.mxu0 0
        %983 = vmatpush1.bf16.msra.mxu0 0
        %984 = vmatprep.subr.bf16.mxu0 0
        %985 = vmatpush1.bf16.msra.mxu0 0
        %986 = vmatprep.subr.bf16.mxu0 0
        %987 = vmatpush1.bf16.msra.mxu0 0
        %988 = vmatprep.mubr.bf16.mxu0 0
        %989 = vmatmul.mubr.bf16.gmra.mrb[0].mxu0 %v942
        %v990 = vpop.f32.mrb[0].mxu0
        %v991 = vadd.f32 0.0, %v990
        %v992 = vpop.f32.mrb[0].mxu0
        %v993 = vpop.f32.mrb[0].mxu0
        %v994 = vadd.f32 0.0, %v993
        %v995 = vpop.f32.mrb[0].mxu0
        %996 = vmatprep.mubr.bf16.mxu0 0
        %997 = vmatmul.mubr.bf16.gmra.mrb[0].mxu0 %v945
        %v998 = vpop.f32.mrb[0].mxu0
        %v999 = vadd.f32 0.0, %v998
        %v1000 = vpop.f32.mrb[0].mxu0
        %v1001 = vpop.f32.mrb[0].mxu0
        %v1002 = vadd.f32 0.0, %v1001
        %v1003 = vpop.f32.mrb[0].mxu0
        %1004 = vmatprep.mubr.bf16.mxu0 0
        %1005 = vmatmul.mubr.bf16.gmra.mrb[0].mxu0 %v948
        %v1006 = vpop.f32.mrb[0].mxu0
        %v1007 = vadd.f32 0.0, %v1006
        %v1008 = vpop.f32.mrb[0].mxu0
        %v1009 = vpop.f32.mrb[0].mxu0
        %v1010 = vadd.f32 0.0, %v1009
        %v1011 = vpop.f32.mrb[0].mxu0
        %1012 = vmatprep.mubr.bf16.mxu0 0
        %1013 = vmatmul.mubr.bf16.gmra.mrb[0].mxu0 %v951
        %v1014 = vpop.f32.mrb[0].mxu0
        %v1015 = vadd.f32 0.0, %v1014
        %v1016 = vpop.f32.mrb[0].mxu0
        %v1017 = vpop.f32.mrb[0].mxu0
        %v1018 = vadd.f32 0.0, %v1017
        %v1019 = vpop.f32.mrb[0].mxu0
        %1020 = vdwg.mxu0
        %v1021 = vadd.f32 %v904, %v991
        %v1022 = vadd.f32 %v905, %v994
        %v1023 = vadd.f32 %v906, %v999
        %v1024 = vadd.f32 %v907, %v1002
        %v1025 = vadd.f32 %v908, %v1007
        %v1026 = vadd.f32 %v909, %v1010
        %v1027 = vadd.f32 %v910, %v1015
        %v1028 = vadd.f32 %v911, %v1018
        %v1029 = vld [vmem:[%s329 + $0x4] sm:$0xf]
        %v1030 = vld [vmem:[%s329 + $0x8] sm:$0xf]
        %v1031 = vld [vmem:[%s329 + $0xc] sm:$0xf]
        %v1032 = vld [vmem:[%s329 + $0x10] sm:$0xf]
        %v1033 = vld [vmem:[%s329 + $0x14] sm:$0xf]
        %v1034 = vld [vmem:[%s329 + $0x18] sm:$0xf]
        %v1035 = vld [vmem:[%s329 + $0x1c] sm:$0xf]
        %v1036 = vld [vmem:[%s329 + $0x20] sm:$0xf]
        %s1037 = scalar_lea.vmem %s1, 12
        %v1038 = vld [vmem:[%s1037] sm:$0x3]
        %v1047 = vunpack.c.l.b16 %v1029
        %v1048 = vunpack.c.l.b16 %v1030
        %v1049 = vunpack.c.l.b16 %v1031
        %v1050 = vunpack.c.l.b16 %v1032
        %v1051 = vunpack.c.l.b16 %v1033
        %v1052 = vunpack.c.l.b16 %v1034
        %v1053 = vunpack.c.l.b16 %v1035
        %v1054 = vunpack.c.l.b16 %v1036
        %v1055 = vpack.c.b16 %v1048, %v1047
        %v1056 = vpack.c.b16 %v1050, %v1049
        %v1057 = vpack.c.b16 %v1052, %v1051
        %v1058 = vpack.c.b16 %v1054, %v1053
        %v1060 = vshrl.u32 %v1055, 16
        %v1062 = vshll.u32 %v1055, 16
        %v1064 = vrot.slane %v1062, 1
        %v1065 = vor.u32 %v1060, %v1064
        %v1067 = vshll.u32 %v1056, 16
        %v1069 = vrot.slane %v1067, 1
        %v1070 = vsel %vm558, %v1065, %v1069
        %v1071 = vshrl.u32 %v1056, 16
        %v1073 = vor.u32 %v1071, %v1069
        %v1075 = vshll.u32 %v1057, 16
        %v1077 = vrot.slane %v1075, 1
        %v1078 = vsel %vm558, %v1073, %v1077
        %v1079 = vshrl.u32 %v1057, 16
        %v1081 = vor.u32 %v1079, %v1077
        %v1083 = vshll.u32 %v1058, 16
        %v1085 = vrot.slane %v1083, 1
        %v1086 = vsel %vm558, %v1081, %v1085
        %v1087 = vshrl.u32 %v1058, 16
        %v1089 = vor.u32 %v1087, %v1085
        %v1091 = vsel %vm371, %v1070, 0
        %v1094 = vsel %vm371, %v1078, 0
        %v1097 = vsel %vm371, %v1086, 0
        %v1100 = vsel %vm371, %v1089, 0
        %v1103 = vand.u32 %v1038, %v387
        %1105 = vmatprep.subr.bf16.mxu0 0
        %1106 = vmatpush1.bf16.msra.mxu0 %v1103
        %1107 = vmatprep.subr.bf16.mxu0 0
        %1108 = vmatpush1.bf16.msra.mxu0 0
        %1109 = vmatprep.subr.bf16.mxu0 0
        %1110 = vmatpush1.bf16.msra.mxu0 0
        %1111 = vmatprep.subr.bf16.mxu0 0
        %1112 = vmatpush1.bf16.msra.mxu0 0
        %1113 = vmatprep.subr.bf16.mxu0 0
        %1114 = vmatpush1.bf16.msra.mxu0 0
        %1115 = vmatprep.subr.bf16.mxu0 0
        %1116 = vmatpush1.bf16.msra.mxu0 0
        %1117 = vmatprep.subr.bf16.mxu0 0
        %1118 = vmatpush1.bf16.msra.mxu0 0
        %1119 = vmatprep.subr.bf16.mxu0 0
        %1120 = vmatpush1.bf16.msra.mxu0 0
        %1121 = vmatprep.subr.bf16.mxu0 0
        %1122 = vmatpush1.bf16.msra.mxu0 0
        %1123 = vmatprep.subr.bf16.mxu0 0
        %1124 = vmatpush1.bf16.msra.mxu0 0
        %1125 = vmatprep.subr.bf16.mxu0 0
        %1126 = vmatpush1.bf16.msra.mxu0 0
        %1127 = vmatprep.subr.bf16.mxu0 0
        %1128 = vmatpush1.bf16.msra.mxu0 0
        %1129 = vmatprep.subr.bf16.mxu0 0
        %1130 = vmatpush1.bf16.msra.mxu0 0
        %1131 = vmatprep.subr.bf16.mxu0 0
        %1132 = vmatpush1.bf16.msra.mxu0 0
        %1133 = vmatprep.subr.bf16.mxu0 0
        %1134 = vmatpush1.bf16.msra.mxu0 0
        %1135 = vmatprep.subr.bf16.mxu0 0
        %1136 = vmatpush1.bf16.msra.mxu0 0
        %1137 = vmatprep.mubr.bf16.mxu0 0
        %1138 = vmatmul.mubr.bf16.gmra.mrb[0].mxu0 %v1091
        %v1139 = vpop.f32.mrb[0].mxu0
        %v1140 = vadd.f32 0.0, %v1139
        %v1141 = vpop.f32.mrb[0].mxu0
        %v1142 = vpop.f32.mrb[0].mxu0
        %v1143 = vadd.f32 0.0, %v1142
        %v1144 = vpop.f32.mrb[0].mxu0
        %1145 = vmatprep.mubr.bf16.mxu0 0
        %1146 = vmatmul.mubr.bf16.gmra.mrb[0].mxu0 %v1094
        %v1147 = vpop.f32.mrb[0].mxu0
        %v1148 = vadd.f32 0.0, %v1147
        %v1149 = vpop.f32.mrb[0].mxu0
        %v1150 = vpop.f32.mrb[0].mxu0
        %v1151 = vadd.f32 0.0, %v1150
        %v1152 = vpop.f32.mrb[0].mxu0
        %1153 = vmatprep.mubr.bf16.mxu0 0
        %1154 = vmatmul.mubr.bf16.gmra.mrb[0].mxu0 %v1097
        %v1155 = vpop.f32.mrb[0].mxu0
        %v1156 = vadd.f32 0.0, %v1155
        %v1157 = vpop.f32.mrb[0].mxu0
        %v1158 = vpop.f32.mrb[0].mxu0
        %v1159 = vadd.f32 0.0, %v1158
        %v1160 = vpop.f32.mrb[0].mxu0
        %1161 = vmatprep.mubr.bf16.mxu0 0
        %1162 = vmatmul.mubr.bf16.gmra.mrb[0].mxu0 %v1100
        %v1163 = vpop.f32.mrb[0].mxu0
        %v1164 = vadd.f32 0.0, %v1163
        %v1165 = vpop.f32.mrb[0].mxu0
        %v1166 = vpop.f32.mrb[0].mxu0
        %v1167 = vadd.f32 0.0, %v1166
        %v1168 = vpop.f32.mrb[0].mxu0
        %1169 = vdwg.mxu0
        %v1170 = vadd.f32 %v1021, %v1140
        %v1171 = vadd.f32 %v1022, %v1143
        %v1172 = vadd.f32 %v1023, %v1148
        %v1173 = vadd.f32 %v1024, %v1151
        %v1174 = vadd.f32 %v1025, %v1156
        %v1175 = vadd.f32 %v1026, %v1159
        %v1176 = vadd.f32 %v1027, %v1164
        %v1177 = vadd.f32 %v1028, %v1167
        %v1178 = vld [vmem:[%s340 + $0x4] sm:$0xf]
        %v1179 = vld [vmem:[%s340 + $0x8] sm:$0xf]
        %v1180 = vld [vmem:[%s340 + $0xc] sm:$0xf]
        %v1181 = vld [vmem:[%s340 + $0x10] sm:$0xf]
        %v1182 = vld [vmem:[%s340 + $0x14] sm:$0xf]
        %v1183 = vld [vmem:[%s340 + $0x18] sm:$0xf]
        %v1184 = vld [vmem:[%s340 + $0x1c] sm:$0xf]
        %v1185 = vld [vmem:[%s340 + $0x20] sm:$0xf]
        %s1186 = scalar_lea.vmem %s1, 14
        %v1187 = vld [vmem:[%s1186] sm:$0x3]
        %v1196 = vunpack.c.l.b16 %v1178
        %v1197 = vunpack.c.l.b16 %v1179
        %v1198 = vunpack.c.l.b16 %v1180
        %v1199 = vunpack.c.l.b16 %v1181
        %v1200 = vunpack.c.l.b16 %v1182
        %v1201 = vunpack.c.l.b16 %v1183
        %v1202 = vunpack.c.l.b16 %v1184
        %v1203 = vunpack.c.l.b16 %v1185
        %v1204 = vpack.c.b16 %v1197, %v1196
        %v1205 = vpack.c.b16 %v1199, %v1198
        %v1206 = vpack.c.b16 %v1201, %v1200
        %v1207 = vpack.c.b16 %v1203, %v1202
        %v1209 = vshrl.u32 %v1204, 16
        %v1211 = vshll.u32 %v1204, 16
        %v1213 = vrot.slane %v1211, 1
        %v1214 = vor.u32 %v1209, %v1213
        %v1216 = vshll.u32 %v1205, 16
        %v1218 = vrot.slane %v1216, 1
        %v1219 = vsel %vm558, %v1214, %v1218
        %v1220 = vshrl.u32 %v1205, 16
        %v1222 = vor.u32 %v1220, %v1218
        %v1224 = vshll.u32 %v1206, 16
        %v1226 = vrot.slane %v1224, 1
        %v1227 = vsel %vm558, %v1222, %v1226
        %v1228 = vshrl.u32 %v1206, 16
        %v1230 = vor.u32 %v1228, %v1226
        %v1232 = vshll.u32 %v1207, 16
        %v1234 = vrot.slane %v1232, 1
        %v1235 = vsel %vm558, %v1230, %v1234
        %v1236 = vshrl.u32 %v1207, 16
        %v1238 = vor.u32 %v1236, %v1234
        %v1240 = vsel %vm371, %v1219, 0
        %v1243 = vsel %vm371, %v1227, 0
        %v1246 = vsel %vm371, %v1235, 0
        %v1249 = vsel %vm371, %v1238, 0
        %v1252 = vand.u32 %v1187, %v387
        %1254 = vmatprep.subr.bf16.mxu0 0
        %1255 = vmatpush1.bf16.msra.mxu0 %v1252
        %1256 = vmatprep.subr.bf16.mxu0 0
        %1257 = vmatpush1.bf16.msra.mxu0 0
        %1258 = vmatprep.subr.bf16.mxu0 0
        %1259 = vmatpush1.bf16.msra.mxu0 0
        %1260 = vmatprep.subr.bf16.mxu0 0
        %1261 = vmatpush1.bf16.msra.mxu0 0
        %1262 = vmatprep.subr.bf16.mxu0 0
        %1263 = vmatpush1.bf16.msra.mxu0 0
        %1264 = vmatprep.subr.bf16.mxu0 0
        %1265 = vmatpush1.bf16.msra.mxu0 0
        %1266 = vmatprep.subr.bf16.mxu0 0
        %1267 = vmatpush1.bf16.msra.mxu0 0
        %1268 = vmatprep.subr.bf16.mxu0 0
        %1269 = vmatpush1.bf16.msra.mxu0 0
        %1270 = vmatprep.subr.bf16.mxu0 0
        %1271 = vmatpush1.bf16.msra.mxu0 0
        %1272 = vmatprep.subr.bf16.mxu0 0
        %1273 = vmatpush1.bf16.msra.mxu0 0
        %1274 = vmatprep.subr.bf16.mxu0 0
        %1275 = vmatpush1.bf16.msra.mxu0 0
        %1276 = vmatprep.subr.bf16.mxu0 0
        %1277 = vmatpush1.bf16.msra.mxu0 0
        %1278 = vmatprep.subr.bf16.mxu0 0
        %1279 = vmatpush1.bf16.msra.mxu0 0
        %1280 = vmatprep.subr.bf16.mxu0 0
        %1281 = vmatpush1.bf16.msra.mxu0 0
        %1282 = vmatprep.subr.bf16.mxu0 0
        %1283 = vmatpush1.bf16.msra.mxu0 0
        %1284 = vmatprep.subr.bf16.mxu0 0
        %1285 = vmatpush1.bf16.msra.mxu0 0
        %1286 = vmatprep.mubr.bf16.mxu0 0
        %1287 = vmatmul.mubr.bf16.gmra.mrb[0].mxu0 %v1240
        %v1288 = vpop.f32.mrb[0].mxu0
        %v1289 = vadd.f32 0.0, %v1288
        %v1290 = vpop.f32.mrb[0].mxu0
        %v1291 = vpop.f32.mrb[0].mxu0
        %v1292 = vadd.f32 0.0, %v1291
        %v1293 = vpop.f32.mrb[0].mxu0
        %1294 = vmatprep.mubr.bf16.mxu0 0
        %1295 = vmatmul.mubr.bf16.gmra.mrb[0].mxu0 %v1243
        %v1296 = vpop.f32.mrb[0].mxu0
        %v1297 = vadd.f32 0.0, %v1296
        %v1298 = vpop.f32.mrb[0].mxu0
        %v1299 = vpop.f32.mrb[0].mxu0
        %v1300 = vadd.f32 0.0, %v1299
        %v1301 = vpop.f32.mrb[0].mxu0
        %1302 = vmatprep.mubr.bf16.mxu0 0
        %1303 = vmatmul.mubr.bf16.gmra.mrb[0].mxu0 %v1246
        %v1304 = vpop.f32.mrb[0].mxu0
        %v1305 = vadd.f32 0.0, %v1304
        %v1306 = vpop.f32.mrb[0].mxu0
        %v1307 = vpop.f32.mrb[0].mxu0
        %v1308 = vadd.f32 0.0, %v1307
        %v1309 = vpop.f32.mrb[0].mxu0
        %1310 = vmatprep.mubr.bf16.mxu0 0
        %1311 = vmatmul.mubr.bf16.gmra.mrb[0].mxu0 %v1249
        %v1312 = vpop.f32.mrb[0].mxu0
        %v1313 = vadd.f32 0.0, %v1312
        %v1314 = vpop.f32.mrb[0].mxu0
        %v1315 = vpop.f32.mrb[0].mxu0
        %v1316 = vadd.f32 0.0, %v1315
        %v1317 = vpop.f32.mrb[0].mxu0
        %1318 = vdwg.mxu0
        %v1319 = vadd.f32 %v1170, %v1289
        %v1320 = vadd.f32 %v1171, %v1292
        %v1321 = vadd.f32 %v1172, %v1297
        %v1322 = vadd.f32 %v1173, %v1300
        %v1323 = vadd.f32 %v1174, %v1305
        %v1324 = vadd.f32 %v1175, %v1308
        %v1325 = vadd.f32 %v1176, %v1313
        %v1326 = vadd.f32 %v1177, %v1316
        %v1327 = vld [vmem:[%s329 + $0x4] sm:$0xe]
        %v1328 = vld [vmem:[%s329 + $0x8] sm:$0xf]
        %v1329 = vld [vmem:[%s329 + $0xc] sm:$0xf]
        %v1330 = vld [vmem:[%s329 + $0x10] sm:$0xf]
        %v1331 = vld [vmem:[%s329 + $0x14] sm:$0xf]
        %v1332 = vld [vmem:[%s329 + $0x18] sm:$0xf]
        %v1333 = vld [vmem:[%s329 + $0x1c] sm:$0xf]
        %v1334 = vld [vmem:[%s329 + $0x20] sm:$0xf]
        %v1335 = vld [vmem:[%s329 + $0x24] sm:$0x1]
        %s1336 = scalar_lea.vmem %s1, 16
        %v1337 = vld [vmem:[%s1336] sm:$0x3]
        %v1347 = vunpack.c.l.b16 %v1327
        %v1348 = vunpack.c.l.b16 %v1328
        %v1349 = vunpack.c.l.b16 %v1329
        %v1350 = vunpack.c.l.b16 %v1330
        %v1351 = vunpack.c.l.b16 %v1331
        %v1352 = vunpack.c.l.b16 %v1332
        %v1353 = vunpack.c.l.b16 %v1333
        %v1354 = vunpack.c.l.b16 %v1334
        %v1355 = vunpack.c.l.b16 %v1335
        %v1356 = vpack.c.b16 %v1348, %v1347
        %v1357 = vpack.c.b16 %v1350, %v1349
        %v1358 = vpack.c.b16 %v1352, %v1351
        %v1359 = vpack.c.b16 %v1354, %v1353
        %v1360 = vpack.c.b16 %v1355, %v1355
        %vm1361 = vcmask 1046528
        %v1362 = vrot.slane %v1356, 1
        %v1363 = vrot.slane %v1357, 1
        %v1364 = vsel %vm1361, %v1362, %v1363
        %v1365 = vrot.slane %v1358, 1
        %v1366 = vsel %vm1361, %v1363, %v1365
        %v1367 = vrot.slane %v1359, 1
        %v1368 = vsel %vm1361, %v1365, %v1367
        %v1369 = vrot.slane %v1360, 1
        %v1370 = vsel %vm1361, %v1367, %v1369
        %v1372 = vsel %vm371, %v1364, 0
        %v1375 = vsel %vm371, %v1366, 0
        %v1378 = vsel %vm371, %v1368, 0
        %v1381 = vsel %vm371, %v1370, 0
        %v1384 = vand.u32 %v1337, %v387
        %1386 = vmatprep.subr.bf16.mxu0 0
        %1387 = vmatpush1.bf16.msra.mxu0 %v1384
        %1388 = vmatprep.subr.bf16.mxu0 0
        %1389 = vmatpush1.bf16.msra.mxu0 0
        %1390 = vmatprep.subr.bf16.mxu0 0
        %1391 = vmatpush1.bf16.msra.mxu0 0
        %1392 = vmatprep.subr.bf16.mxu0 0
        %1393 = vmatpush1.bf16.msra.mxu0 0
        %1394 = vmatprep.subr.bf16.mxu0 0
        %1395 = vmatpush1.bf16.msra.mxu0 0
        %1396 = vmatprep.subr.bf16.mxu0 0
        %1397 = vmatpush1.bf16.msra.mxu0 0
        %1398 = vmatprep.subr.bf16.mxu0 0
        %1399 = vmatpush1.bf16.msra.mxu0 0
        %1400 = vmatprep.subr.bf16.mxu0 0
        %1401 = vmatpush1.bf16.msra.mxu0 0
        %1402 = vmatprep.subr.bf16.mxu0 0
        %1403 = vmatpush1.bf16.msra.mxu0 0
        %1404 = vmatprep.subr.bf16.mxu0 0
        %1405 = vmatpush1.bf16.msra.mxu0 0
        %1406 = vmatprep.subr.bf16.mxu0 0
        %1407 = vmatpush1.bf16.msra.mxu0 0
        %1408 = vmatprep.subr.bf16.mxu0 0
        %1409 = vmatpush1.bf16.msra.mxu0 0
        %1410 = vmatprep.subr.bf16.mxu0 0
        %1411 = vmatpush1.bf16.msra.mxu0 0
        %1412 = vmatprep.subr.bf16.mxu0 0
        %1413 = vmatpush1.bf16.msra.mxu0 0
        %1414 = vmatprep.subr.bf16.mxu0 0
        %1415 = vmatpush1.bf16.msra.mxu0 0
        %1416 = vmatprep.subr.bf16.mxu0 0
        %1417 = vmatpush1.bf16.msra.mxu0 0
        %1418 = vmatprep.mubr.bf16.mxu0 0
        %1419 = vmatmul.mubr.bf16.gmra.mrb[0].mxu0 %v1372
        %v1420 = vpop.f32.mrb[0].mxu0
        %v1421 = vadd.f32 0.0, %v1420
        %v1422 = vpop.f32.mrb[0].mxu0
        %v1423 = vpop.f32.mrb[0].mxu0
        %v1424 = vadd.f32 0.0, %v1423
        %v1425 = vpop.f32.mrb[0].mxu0
        %1426 = vmatprep.mubr.bf16.mxu0 0
        %1427 = vmatmul.mubr.bf16.gmra.mrb[0].mxu0 %v1375
        %v1428 = vpop.f32.mrb[0].mxu0
        %v1429 = vadd.f32 0.0, %v1428
        %v1430 = vpop.f32.mrb[0].mxu0
        %v1431 = vpop.f32.mrb[0].mxu0
        %v1432 = vadd.f32 0.0, %v1431
        %v1433 = vpop.f32.mrb[0].mxu0
        %1434 = vmatprep.mubr.bf16.mxu0 0
        %1435 = vmatmul.mubr.bf16.gmra.mrb[0].mxu0 %v1378
        %v1436 = vpop.f32.mrb[0].mxu0
        %v1437 = vadd.f32 0.0, %v1436
        %v1438 = vpop.f32.mrb[0].mxu0
        %v1439 = vpop.f32.mrb[0].mxu0
        %v1440 = vadd.f32 0.0, %v1439
        %v1441 = vpop.f32.mrb[0].mxu0
        %1442 = vmatprep.mubr.bf16.mxu0 0
        %1443 = vmatmul.mubr.bf16.gmra.mrb[0].mxu0 %v1381
        %v1444 = vpop.f32.mrb[0].mxu0
        %v1445 = vadd.f32 0.0, %v1444
        %v1446 = vpop.f32.mrb[0].mxu0
        %v1447 = vpop.f32.mrb[0].mxu0
        %v1448 = vadd.f32 0.0, %v1447
        %v1449 = vpop.f32.mrb[0].mxu0
        %1450 = vdwg.mxu0
        %v1451 = vadd.f32 %v1319, %v1421
        %v1452 = vadd.f32 %v1320, %v1424
        %v1453 = vadd.f32 %v1321, %v1429
        %v1454 = vadd.f32 %v1322, %v1432
        %v1455 = vadd.f32 %v1323, %v1437
        %v1456 = vadd.f32 %v1324, %v1440
        %v1457 = vadd.f32 %v1325, %v1445
        %v1458 = vadd.f32 %v1326, %v1448
        %v1459 = vld [vmem:[%s2] sm:$0x1]
        %v1461 = vlaneseq
        %v1462 = vshrl.u32 %v1461, 7
        %v1463 = vsub.s32 0, %v1462
        %v1464 = vrot.slane %v1459, %v1463
        %v1466 = vadd.f32 %v1451, %v1464
        %v1467 = vadd.f32 %v1452, %v1464
        %v1468 = vadd.f32 %v1453, %v1464
        %v1469 = vadd.f32 %v1454, %v1464
        %v1470 = vadd.f32 %v1455, %v1464
        %v1471 = vadd.f32 %v1456, %v1464
        %v1472 = vadd.f32 %v1457, %v1464
        %v1473 = vadd.f32 %v1458, %v1464
        %v1474 = vmax.f32 %v1466, 0.0
        %v1475 = vmax.f32 %v1467, 0.0
        %v1476 = vmax.f32 %v1468, 0.0
        %v1477 = vmax.f32 %v1469, 0.0
        %v1478 = vmax.f32 %v1470, 0.0
        %v1479 = vmax.f32 %v1471, 0.0
        %v1480 = vmax.f32 %v1472, 0.0
        %v1481 = vmax.f32 %v1473, 0.0
        %v1482 = vpack.c.bf16 %v1475, %v1474
        %v1483 = vpack.c.bf16 %v1477, %v1476
        %v1484 = vpack.c.bf16 %v1479, %v1478
        %v1485 = vpack.c.bf16 %v1481, %v1480
        %v1486 = vld [vmem:[%s3] sm:$0xf]
        %v1487 = vld [vmem:[%s3 + $0x4] sm:$0xf]
        %v1488 = vld [vmem:[%s3 + $0x8] sm:$0xf]
        %v1489 = vld [vmem:[%s3 + $0xc] sm:$0xf]
        %v1490 = vld [vmem:[%s3 + $0x10] sm:$0xf]
        %v1491 = vld [vmem:[%s3 + $0x14] sm:$0xf]
        %v1492 = vld [vmem:[%s3 + $0x18] sm:$0xf]
        %v1493 = vld [vmem:[%s3 + $0x1c] sm:$0xf]
        %v1494 = vld [vmem:[%s4] sm:$0x1]
        %v1496 = vlaneseq
        %v1497 = vshrl.u32 %v1496, 7
        %v1498 = vsub.s32 0, %v1497
        %v1499 = vrot.slane %v1494, %v1498
        %v1509 = vunpack.c.l.b16 %v1486
        %v1510 = vunpack.c.l.b16 %v1487
        %v1511 = vunpack.c.l.b16 %v1488
        %v1512 = vunpack.c.l.b16 %v1489
        %v1513 = vunpack.c.l.b16 %v1490
        %v1514 = vunpack.c.l.b16 %v1491
        %v1515 = vunpack.c.l.b16 %v1492
        %v1516 = vunpack.c.l.b16 %v1493
        %v1517 = vpack.c.b16 %v1510, %v1509
        %v1518 = vpack.c.b16 %v1512, %v1511
        %v1519 = vpack.c.b16 %v1514, %v1513
        %v1520 = vpack.c.b16 %v1516, %v1515
        %vm1525 = vcmask 523264
        %v1527 = vsel %vm1525, %v1482, 0
        %v1530 = vsel %vm1525, %v1483, 0
        %v1533 = vsel %vm1525, %v1484, 0
        %v1536 = vsel %vm1525, %v1485, 0
        %1538 = vmatprep.subr.bf16.mxu0 0
        %1539 = vmatpush1.bf16.msra.mxu0 %v1517
        %1540 = vmatprep.subr.bf16.mxu0 0
        %1541 = vmatpush1.bf16.msra.mxu0 %v1518
        %1542 = vmatprep.subr.bf16.mxu0 0
        %1543 = vmatpush1.bf16.msra.mxu0 %v1519
        %1544 = vmatprep.subr.bf16.mxu0 0
        %1545 = vmatpush1.bf16.msra.mxu0 %v1520
        %1546 = vmatprep.subr.bf16.mxu0 0
        %1547 = vmatpush1.bf16.msra.mxu0 0
        %1548 = vmatprep.subr.bf16.mxu0 0
        %1549 = vmatpush1.bf16.msra.mxu0 0
        %1550 = vmatprep.subr.bf16.mxu0 0
        %1551 = vmatpush1.bf16.msra.mxu0 0
        %1552 = vmatprep.subr.bf16.mxu0 0
        %1553 = vmatpush1.bf16.msra.mxu0 0
        %1554 = vmatprep.subr.bf16.mxu0 0
        %1555 = vmatpush1.bf16.msra.mxu0 0
        %1556 = vmatprep.subr.bf16.mxu0 0
        %1557 = vmatpush1.bf16.msra.mxu0 0
        %1558 = vmatprep.subr.bf16.mxu0 0
        %1559 = vmatpush1.bf16.msra.mxu0 0
        %1560 = vmatprep.subr.bf16.mxu0 0
        %1561 = vmatpush1.bf16.msra.mxu0 0
        %1562 = vmatprep.subr.bf16.mxu0 0
        %1563 = vmatpush1.bf16.msra.mxu0 0
        %1564 = vmatprep.subr.bf16.mxu0 0
        %1565 = vmatpush1.bf16.msra.mxu0 0
        %1566 = vmatprep.subr.bf16.mxu0 0
        %1567 = vmatpush1.bf16.msra.mxu0 0
        %1568 = vmatprep.subr.bf16.mxu0 0
        %1569 = vmatpush1.bf16.msra.mxu0 0
        %1570 = vmatprep.mubr.bf16.mxu0 0
        %1571 = vmatmul.mubr.bf16.gmra.mrb[0].mxu0 %v1527
        %v1572 = vpop.f32.mrb[0].mxu0
        %v1573 = vadd.f32 %v1499, %v1572
        %v1574 = vpop.f32.mrb[0].mxu0
        %v1575 = vpop.f32.mrb[0].mxu0
        %v1576 = vadd.f32 %v1499, %v1575
        %v1577 = vpop.f32.mrb[0].mxu0
        %1578 = vmatprep.mubr.bf16.mxu0 0
        %1579 = vmatmul.mubr.bf16.gmra.mrb[0].mxu0 %v1530
        %v1580 = vpop.f32.mrb[0].mxu0
        %v1581 = vadd.f32 %v1499, %v1580
        %v1582 = vpop.f32.mrb[0].mxu0
        %v1583 = vpop.f32.mrb[0].mxu0
        %v1584 = vadd.f32 %v1499, %v1583
        %v1585 = vpop.f32.mrb[0].mxu0
        %1586 = vmatprep.mubr.bf16.mxu0 0
        %1587 = vmatmul.mubr.bf16.gmra.mrb[0].mxu0 %v1533
        %v1588 = vpop.f32.mrb[0].mxu0
        %v1589 = vadd.f32 %v1499, %v1588
        %v1590 = vpop.f32.mrb[0].mxu0
        %v1591 = vpop.f32.mrb[0].mxu0
        %v1592 = vadd.f32 %v1499, %v1591
        %v1593 = vpop.f32.mrb[0].mxu0
        %1594 = vmatprep.mubr.bf16.mxu0 0
        %1595 = vmatmul.mubr.bf16.gmra.mrb[0].mxu0 %v1536
        %v1596 = vpop.f32.mrb[0].mxu0
        %v1597 = vadd.f32 %v1499, %v1596
        %v1598 = vpop.f32.mrb[0].mxu0
        %v1599 = vpop.f32.mrb[0].mxu0
        %v1600 = vadd.f32 %v1499, %v1599
        %v1601 = vpop.f32.mrb[0].mxu0
        %1602 = vdwg.mxu0
        %v1603 = vmax.f32 %v1573, 0.0
        %v1604 = vmax.f32 %v1576, 0.0
        %v1605 = vmax.f32 %v1581, 0.0
        %v1606 = vmax.f32 %v1584, 0.0
        %v1607 = vmax.f32 %v1589, 0.0
        %v1608 = vmax.f32 %v1592, 0.0
        %v1609 = vmax.f32 %v1597, 0.0
        %v1610 = vmax.f32 %v1600, 0.0
        %v1611 = vlaneseq
        %v1612 = vshrl.u32 %v1611, 7
        %v1613 = vadd.s32 %v1612, 8
        %v1614 = vadd.s32 %v1612, 16
        %v1615 = vadd.s32 %v1612, 24
        %v1616 = vadd.s32 %v1612, 32
        %v1617 = vadd.s32 %v1612, 40
        %v1618 = vadd.s32 %v1612, 48
        %v1619 = vadd.s32 %v1612, 56
        %vm1620 = vcmp.lt.s32.totalorder %v1612, 0
        %v1621 = vsub.s32 0, %v1612
        %v1622 = vsel %vm1620, %v1621, %v1612
        %v1623 = vmul.u32.u64.compose %v1622, 3817748708
        %v1624 = vextract.low.u32 %v1623
        %v1625 = vextract.high.u32 %v1623
        %v1626 = vshrl.u32 %v1625, 3
        %v1627 = vmul.u32 %v1626, 9
        %v1628 = vsub.s32 %v1622, %v1627
        %v1629 = vsub.s32 0, %v1628
        %v1630 = vsel %vm1620, %v1629, %v1628
        %vm1631 = vcmp.lt.s32.totalorder %v1613, 0
        %v1632 = vsub.s32 0, %v1613
        %v1633 = vsel %vm1631, %v1632, %v1613
        %v1634 = vmul.u32.u64.compose %v1633, 3817748708
        %v1635 = vextract.low.u32 %v1634
        %v1636 = vextract.high.u32 %v1634
        %v1637 = vshrl.u32 %v1636, 3
        %v1638 = vmul.u32 %v1637, 9
        %v1639 = vsub.s32 %v1633, %v1638
        %v1640 = vsub.s32 0, %v1639
        %v1641 = vsel %vm1631, %v1640, %v1639
        %vm1642 = vcmp.lt.s32.totalorder %v1614, 0
        %v1643 = vsub.s32 0, %v1614
        %v1644 = vsel %vm1642, %v1643, %v1614
        %v1645 = vmul.u32.u64.compose %v1644, 3817748708
        %v1646 = vextract.low.u32 %v1645
        %v1647 = vextract.high.u32 %v1645
        %v1648 = vshrl.u32 %v1647, 3
        %v1649 = vmul.u32 %v1648, 9
        %v1650 = vsub.s32 %v1644, %v1649
        %v1651 = vsub.s32 0, %v1650
        %v1652 = vsel %vm1642, %v1651, %v1650
        %vm1653 = vcmp.lt.s32.totalorder %v1615, 0
        %v1654 = vsub.s32 0, %v1615
        %v1655 = vsel %vm1653, %v1654, %v1615
        %v1656 = vmul.u32.u64.compose %v1655, 3817748708
        %v1657 = vextract.low.u32 %v1656
        %v1658 = vextract.high.u32 %v1656
        %v1659 = vshrl.u32 %v1658, 3
        %v1660 = vmul.u32 %v1659, 9
        %v1661 = vsub.s32 %v1655, %v1660
        %v1662 = vsub.s32 0, %v1661
        %v1663 = vsel %vm1653, %v1662, %v1661
        %vm1664 = vcmp.lt.s32.totalorder %v1616, 0
        %v1665 = vsub.s32 0, %v1616
        %v1666 = vsel %vm1664, %v1665, %v1616
        %v1667 = vmul.u32.u64.compose %v1666, 3817748708
        %v1668 = vextract.low.u32 %v1667
        %v1669 = vextract.high.u32 %v1667
        %v1670 = vshrl.u32 %v1669, 3
        %v1671 = vmul.u32 %v1670, 9
        %v1672 = vsub.s32 %v1666, %v1671
        %v1673 = vsub.s32 0, %v1672
        %v1674 = vsel %vm1664, %v1673, %v1672
        %vm1675 = vcmp.lt.s32.totalorder %v1617, 0
        %v1676 = vsub.s32 0, %v1617
        %v1677 = vsel %vm1675, %v1676, %v1617
        %v1678 = vmul.u32.u64.compose %v1677, 3817748708
        %v1679 = vextract.low.u32 %v1678
        %v1680 = vextract.high.u32 %v1678
        %v1681 = vshrl.u32 %v1680, 3
        %v1682 = vmul.u32 %v1681, 9
        %v1683 = vsub.s32 %v1677, %v1682
        %v1684 = vsub.s32 0, %v1683
        %v1685 = vsel %vm1675, %v1684, %v1683
        %vm1686 = vcmp.lt.s32.totalorder %v1618, 0
        %v1687 = vsub.s32 0, %v1618
        %v1688 = vsel %vm1686, %v1687, %v1618
        %v1689 = vmul.u32.u64.compose %v1688, 3817748708
        %v1690 = vextract.low.u32 %v1689
        %v1691 = vextract.high.u32 %v1689
        %v1692 = vshrl.u32 %v1691, 3
        %v1693 = vmul.u32 %v1692, 9
        %v1694 = vsub.s32 %v1688, %v1693
        %v1695 = vsub.s32 0, %v1694
        %v1696 = vsel %vm1686, %v1695, %v1694
        %vm1697 = vcmp.lt.s32.totalorder %v1619, 0
        %v1698 = vsub.s32 0, %v1619
        %v1699 = vsel %vm1697, %v1698, %v1619
        %v1700 = vmul.u32.u64.compose %v1699, 3817748708
        %v1701 = vextract.low.u32 %v1700
        %v1702 = vextract.high.u32 %v1700
        %v1703 = vshrl.u32 %v1702, 3
        %v1704 = vmul.u32 %v1703, 9
        %v1705 = vsub.s32 %v1699, %v1704
        %v1706 = vsub.s32 0, %v1705
        %v1707 = vsel %vm1697, %v1706, %v1705
        %vm1708 = vcmp.ne.s32.totalorder %v1630, 0
        %vm1709 = vcmp.ne.s32.totalorder %v1641, 0
        %vm1710 = vcmp.ne.s32.totalorder %v1652, 0
        %vm1711 = vcmp.ne.s32.totalorder %v1663, 0
        %vm1712 = vcmp.ne.s32.totalorder %v1674, 0
        %vm1713 = vcmp.ne.s32.totalorder %v1685, 0
        %vm1714 = vcmp.ne.s32.totalorder %v1696, 0
        %vm1715 = vcmp.ne.s32.totalorder %v1707, 0
        %vm1716 = vcmp.lt.s32.totalorder %v1630, 0
        %vm1717 = vcmp.lt.s32.totalorder %v1641, 0
        %vm1718 = vcmp.lt.s32.totalorder %v1652, 0
        %vm1719 = vcmp.lt.s32.totalorder %v1663, 0
        %vm1720 = vcmp.lt.s32.totalorder %v1674, 0
        %vm1721 = vcmp.lt.s32.totalorder %v1685, 0
        %vm1722 = vcmp.lt.s32.totalorder %v1696, 0
        %vm1723 = vcmp.lt.s32.totalorder %v1707, 0
        %vm1724 = vmand %vm1716, %vm1708
        %vm1725 = vmand %vm1717, %vm1709
        %vm1726 = vmand %vm1718, %vm1710
        %vm1727 = vmand %vm1719, %vm1711
        %vm1728 = vmand %vm1720, %vm1712
        %vm1729 = vmand %vm1721, %vm1713
        %vm1730 = vmand %vm1722, %vm1714
        %vm1731 = vmand %vm1723, %vm1715
        %v1732 = vadd.s32 %v1630, 9
        %v1733 = vadd.s32 %v1641, 9
        %v1734 = vadd.s32 %v1652, 9
        %v1735 = vadd.s32 %v1663, 9
        %v1736 = vadd.s32 %v1674, 9
        %v1737 = vadd.s32 %v1685, 9
        %v1738 = vadd.s32 %v1696, 9
        %v1739 = vadd.s32 %v1707, 9
        %v1740 = vsel %vm1724, %v1732, %v1630
        %v1741 = vsel %vm1725, %v1733, %v1641
        %v1742 = vsel %vm1726, %v1734, %v1652
        %v1743 = vsel %vm1727, %v1735, %v1663
        %v1744 = vsel %vm1728, %v1736, %v1674
        %v1745 = vsel %vm1729, %v1737, %v1685
        %v1746 = vsel %vm1730, %v1738, %v1696
        %v1747 = vsel %vm1731, %v1739, %v1707
        %vm1748 = vcmp.lt.s32.totalorder %v1740, 7
        %vm1749 = vcmp.lt.s32.totalorder %v1741, 7
        %vm1750 = vcmp.lt.s32.totalorder %v1742, 7
        %vm1751 = vcmp.lt.s32.totalorder %v1743, 7
        %vm1752 = vcmp.lt.s32.totalorder %v1744, 7
        %vm1753 = vcmp.lt.s32.totalorder %v1745, 7
        %vm1754 = vcmp.lt.s32.totalorder %v1746, 7
        %vm1755 = vcmp.lt.s32.totalorder %v1747, 7
        %v1756 = vsel %vm1748, 1, 0
        %v1757 = vsel %vm1749, 1, 0
        %v1758 = vsel %vm1750, 1, 0
        %v1759 = vsel %vm1751, 1, 0
        %v1760 = vsel %vm1752, 1, 0
        %v1761 = vsel %vm1753, 1, 0
        %v1762 = vsel %vm1754, 1, 0
        %v1763 = vsel %vm1755, 1, 0
        %vm1764 = vcmp.eq.s32.totalorder %v1756, 1
        %vm1765 = vcmp.eq.s32.totalorder %v1757, 1
        %vm1766 = vcmp.eq.s32.totalorder %v1758, 1
        %vm1767 = vcmp.eq.s32.totalorder %v1759, 1
        %vm1768 = vcmp.eq.s32.totalorder %v1760, 1
        %vm1769 = vcmp.eq.s32.totalorder %v1761, 1
        %vm1770 = vcmp.eq.s32.totalorder %v1762, 1
        %vm1771 = vcmp.eq.s32.totalorder %v1763, 1
        %v1772 = vsel %vm1764, %v1603, 0.0
        %v1773 = vsel %vm1765, %v1604, 0.0
        %v1774 = vsel %vm1766, %v1605, 0.0
        %v1775 = vsel %vm1767, %v1606, 0.0
        %v1776 = vsel %vm1768, %v1607, 0.0
        %v1777 = vsel %vm1769, %v1608, 0.0
        %v1778 = vsel %vm1770, %v1609, 0.0
        %v1779 = vsel %vm1771, %v1610, 0.0
        %vm1780 = vcmask 125952
        %1781 = vst.msk [vmem:[#allocation2] sm:$0xf] %vm1780, 0
        %1782 = vst.msk [vmem:[#allocation2 + $0x4] sm:$0xf] %vm1780, 0
        %1783 = vst.msk [vmem:[#allocation2 + $0x8] sm:$0xf] %vm1780, 0
        %1784 = vst.msk [vmem:[#allocation2 + $0xc] sm:$0xf] %vm1780, 0
        %1785 = vst.msk [vmem:[#allocation2 + $0x10] sm:$0xf] %vm1780, 0
        %1786 = vst.msk [vmem:[#allocation2 + $0x14] sm:$0xf] %vm1780, 0
        %1787 = vst.msk [vmem:[#allocation2 + $0x18] sm:$0xf] %vm1780, 0
        %1788 = vst.msk [vmem:[#allocation2 + $0x1c] sm:$0xf] %vm1780, 0
        %1789 = vst.msk [vmem:[#allocation2 + $0x20] sm:$0xf] %vm1780, 0
        %1790 = vst.msk [vmem:[#allocation2 + $0x24] sm:$0xf] %vm1780, 0
        %1791 = vst.msk [vmem:[#allocation2 + $0x28] sm:$0xf] %vm1780, 0
        %vm1792 = vcmask 122880
        %1793 = vst.msk [vmem:[#allocation2 + $0x2c] sm:$0x1] %vm1792, 0
        %v1794 = vpack.c.bf16 %v1773, %v1772
        %v1795 = vpack.c.bf16 %v1775, %v1774
        %v1796 = vpack.c.bf16 %v1777, %v1776
        %v1797 = vpack.c.bf16 %v1779, %v1778
        %v1802 = vunpack.c.l.b16 %v1794
        %v1803 = vunpack.c.h.b16 %v1794
        %v1804 = vunpack.c.l.b16 %v1795
        %v1805 = vunpack.c.h.b16 %v1795
        %v1806 = vunpack.c.l.b16 %v1796
        %v1807 = vunpack.c.h.b16 %v1796
        %v1808 = vunpack.c.l.b16 %v1797
        %v1809 = vunpack.c.h.b16 %v1797
        %v1810 = vpack.c.b16 %v1802, %v1802
        %v1811 = vpack.c.b16 %v1803, %v1803
        %v1812 = vpack.c.b16 %v1804, %v1804
        %v1813 = vpack.c.b16 %v1805, %v1805
        %v1814 = vpack.c.b16 %v1806, %v1806
        %v1815 = vpack.c.b16 %v1807, %v1807
        %v1816 = vpack.c.b16 %v1808, %v1808
        %v1817 = vpack.c.b16 %v1809, %v1809
        %vm1818 = vcmask 1040384
        %vm1819 = vcmask 1044484
        %vm1820 = vmor %vm1818, %vm1819
        %v1821 = vrot.slane %v1810, 7
        %v1822 = vrot.slane %v1821, 4
        %v1823 = vrot.slane %v1811, 7
        %v1824 = vsel %vm1820, %v1822, %v1823
        %v1825 = vrot.slane %v1823, 4
        %v1826 = vrot.slane %v1812, 7
        %v1827 = vsel %vm1820, %v1825, %v1826
        %v1828 = vrot.slane %v1826, 4
        %v1829 = vrot.slane %v1813, 7
        %v1830 = vsel %vm1820, %v1828, %v1829
        %v1831 = vrot.slane %v1829, 4
        %v1832 = vrot.slane %v1814, 7
        %v1833 = vsel %vm1820, %v1831, %v1832
        %v1834 = vrot.slane %v1832, 4
        %v1835 = vrot.slane %v1815, 7
        %v1836 = vsel %vm1820, %v1834, %v1835
        %v1837 = vrot.slane %v1835, 4
        %v1838 = vrot.slane %v1816, 7
        %v1839 = vsel %vm1820, %v1837, %v1838
        %v1840 = vrot.slane %v1838, 4
        %v1841 = vrot.slane %v1817, 7
        %v1842 = vsel %vm1820, %v1840, %v1841
        %v1843 = vrot.slane %v1841, 4
        %vm1853 = vcmask 125953
        %1854 = vst.msk [vmem:[#allocation2 + $0x4] sm:$0xe] %vm1853, %v1821
        %1855 = vst.msk [vmem:[#allocation2 + $0x8] sm:$0xf] %vm1780, %v1824
        %1856 = vst.msk [vmem:[#allocation2 + $0xc] sm:$0xf] %vm1780, %v1827
        %1857 = vst.msk [vmem:[#allocation2 + $0x10] sm:$0xf] %vm1780, %v1830
        %1858 = vst.msk [vmem:[#allocation2 + $0x14] sm:$0xf] %vm1780, %v1833
        %1859 = vst.msk [vmem:[#allocation2 + $0x18] sm:$0xf] %vm1780, %v1836
        %1860 = vst.msk [vmem:[#allocation2 + $0x1c] sm:$0xf] %vm1780, %v1839
        %1861 = vst.msk [vmem:[#allocation2 + $0x20] sm:$0xf] %vm1780, %v1842
        %vm1862 = vcmask 122880
        %vm1863 = vsmask.f32 256
        %vm1864 = vmand %vm1862, %vm1863
        %v1865 = vld [vmem:[#allocation2 + $0x24] sm:$0x1]
        %v1866 = vsel %vm1864, %v1843, %v1865
        %1867 = vst [vmem:[#allocation2 + $0x24] sm:$0x1] %v1866
        %v1868 = vld [vmem:[#allocation2] sm:$0xf]
        %v1869 = vld [vmem:[#allocation2 + $0x4] sm:$0xf]
        %v1870 = vld [vmem:[#allocation2 + $0x8] sm:$0xf]
        %v1871 = vld [vmem:[#allocation2 + $0xc] sm:$0xf]
        %v1872 = vld [vmem:[#allocation2 + $0x10] sm:$0xf]
        %v1873 = vld [vmem:[#allocation2 + $0x14] sm:$0xf]
        %v1874 = vld [vmem:[#allocation2 + $0x18] sm:$0xf]
        %v1875 = vld [vmem:[#allocation2 + $0x1c] sm:$0xf]
        %v1876 = vld [vmem:[%s5] sm:$0xf]
        %v1877 = vld [vmem:[%s5 + $0x4] sm:$0xf]
        %s1878 = scalar_lea.vmem %s5, 8
        %v1879 = vld [vmem:[%s1878] sm:$0xf]
        %v1880 = vld [vmem:[%s1878 + $0x4] sm:$0xf]
        %v1889 = vunpack.c.l.b16 %v1868
        %v1890 = vunpack.c.l.b16 %v1869
        %v1891 = vunpack.c.l.b16 %v1870
        %v1892 = vunpack.c.l.b16 %v1871
        %v1893 = vunpack.c.l.b16 %v1872
        %v1894 = vunpack.c.l.b16 %v1873
        %v1895 = vunpack.c.l.b16 %v1874
        %v1896 = vunpack.c.l.b16 %v1875
        %v1897 = vpack.c.b16 %v1890, %v1889
        %v1898 = vpack.c.b16 %v1892, %v1891
        %v1899 = vpack.c.b16 %v1894, %v1893
        %v1900 = vpack.c.b16 %v1896, %v1895
        %v1902 = vshrl.u32 %v1897, 16
        %v1904 = vshll.u32 %v1897, 16
        %v1906 = vrot.slane %v1904, 1
        %v1907 = vor.u32 %v1902, %v1906
        %v1909 = vshll.u32 %v1898, 16
        %v1911 = vrot.slane %v1909, 1
        %v1912 = vsel %vm558, %v1907, %v1911
        %v1913 = vshrl.u32 %v1898, 16
        %v1915 = vor.u32 %v1913, %v1911
        %v1917 = vshll.u32 %v1899, 16
        %v1919 = vrot.slane %v1917, 1
        %v1920 = vsel %vm558, %v1915, %v1919
        %v1921 = vshrl.u32 %v1899, 16
        %v1923 = vor.u32 %v1921, %v1919
        %v1925 = vshll.u32 %v1900, 16
        %v1927 = vrot.slane %v1925, 1
        %v1928 = vsel %vm558, %v1923, %v1927
        %v1929 = vshrl.u32 %v1900, 16
        %v1931 = vor.u32 %v1929, %v1927
        %v1934 = vunpack.c.l.b16 %v1879
        %v1935 = vunpack.c.l.b16 %v1880
        %v1936 = vpack.c.b16 %v1935, %v1934
        %vm1938 = vcmask 130048
        %v1940 = vsel %vm1938, %v1912, 0
        %v1943 = vsel %vm1938, %v1920, 0
        %v1946 = vsel %vm1938, %v1928, 0
        %v1949 = vsel %vm1938, %v1931, 0
        %1951 = vmatprep.subr.bf16.mxu0 0
        %1952 = vmatpush1.bf16.msra.mxu0 %v1936
        %1953 = vmatprep.subr.bf16.mxu0 0
        %1954 = vmatpush1.bf16.msra.mxu0 0
        %1955 = vmatprep.subr.bf16.mxu0 0
        %1956 = vmatpush1.bf16.msra.mxu0 0
        %1957 = vmatprep.subr.bf16.mxu0 0
        %1958 = vmatpush1.bf16.msra.mxu0 0
        %1959 = vmatprep.subr.bf16.mxu0 0
        %1960 = vmatpush1.bf16.msra.mxu0 0
        %1961 = vmatprep.subr.bf16.mxu0 0
        %1962 = vmatpush1.bf16.msra.mxu0 0
        %1963 = vmatprep.subr.bf16.mxu0 0
        %1964 = vmatpush1.bf16.msra.mxu0 0
        %1965 = vmatprep.subr.bf16.mxu0 0
        %1966 = vmatpush1.bf16.msra.mxu0 0
        %1967 = vmatprep.subr.bf16.mxu0 0
        %1968 = vmatpush1.bf16.msra.mxu0 0
        %1969 = vmatprep.subr.bf16.mxu0 0
        %1970 = vmatpush1.bf16.msra.mxu0 0
        %1971 = vmatprep.subr.bf16.mxu0 0
        %1972 = vmatpush1.bf16.msra.mxu0 0
        %1973 = vmatprep.subr.bf16.mxu0 0
        %1974 = vmatpush1.bf16.msra.mxu0 0
        %1975 = vmatprep.subr.bf16.mxu0 0
        %1976 = vmatpush1.bf16.msra.mxu0 0
        %1977 = vmatprep.subr.bf16.mxu0 0
        %1978 = vmatpush1.bf16.msra.mxu0 0
        %1979 = vmatprep.subr.bf16.mxu0 0
        %1980 = vmatpush1.bf16.msra.mxu0 0
        %1981 = vmatprep.subr.bf16.mxu0 0
        %1982 = vmatpush1.bf16.msra.mxu0 0
        %1983 = vmatprep.mubr.bf16.mxu0 0
        %1984 = vmatmul.mubr.bf16.gmra.mrb[0].mxu0 %v1940
        %v1985 = vpop.f32.mrb[0].mxu0
        %v1986 = vadd.f32 0.0, %v1985
        %v1987 = vpop.f32.mrb[0].mxu0
        %v1988 = vpop.f32.mrb[0].mxu0
        %v1989 = vadd.f32 0.0, %v1988
        %v1990 = vpop.f32.mrb[0].mxu0
        %1991 = vmatprep.mubr.bf16.mxu0 0
        %1992 = vmatmul.mubr.bf16.gmra.mrb[0].mxu0 %v1943
        %v1993 = vpop.f32.mrb[0].mxu0
        %v1994 = vadd.f32 0.0, %v1993
        %v1995 = vpop.f32.mrb[0].mxu0
        %v1996 = vpop.f32.mrb[0].mxu0
        %v1997 = vadd.f32 0.0, %v1996
        %v1998 = vpop.f32.mrb[0].mxu0
        %1999 = vmatprep.mubr.bf16.mxu0 0
        %2000 = vmatmul.mubr.bf16.gmra.mrb[0].mxu0 %v1946
        %v2001 = vpop.f32.mrb[0].mxu0
        %v2002 = vadd.f32 0.0, %v2001
        %v2003 = vpop.f32.mrb[0].mxu0
        %v2004 = vpop.f32.mrb[0].mxu0
        %v2005 = vadd.f32 0.0, %v2004
        %v2006 = vpop.f32.mrb[0].mxu0
        %2007 = vmatprep.mubr.bf16.mxu0 0
        %2008 = vmatmul.mubr.bf16.gmra.mrb[0].mxu0 %v1949
        %v2009 = vpop.f32.mrb[0].mxu0
        %v2010 = vadd.f32 0.0, %v2009
        %v2011 = vpop.f32.mrb[0].mxu0
        %v2012 = vpop.f32.mrb[0].mxu0
        %v2013 = vadd.f32 0.0, %v2012
        %v2014 = vpop.f32.mrb[0].mxu0
        %2015 = vdwg.mxu0
        %v2018 = vunpack.c.l.b16 %v1876
        %v2019 = vunpack.c.l.b16 %v1877
        %v2020 = vpack.c.b16 %v2019, %v2018
        %v2022 = vsel %vm1938, %v1897, 0
        %v2024 = vsel %vm1938, %v1898, 0
        %v2026 = vsel %vm1938, %v1899, 0
        %v2028 = vsel %vm1938, %v1900, 0
        %2030 = vmatprep.subr.bf16.mxu0 0
        %2031 = vmatpush1.bf16.msra.mxu0 %v2020
        %2032 = vmatprep.subr.bf16.mxu0 0
        %2033 = vmatpush1.bf16.msra.mxu0 0
        %2034 = vmatprep.subr.bf16.mxu0 0
        %2035 = vmatpush1.bf16.msra.mxu0 0
        %2036 = vmatprep.subr.bf16.mxu0 0
        %2037 = vmatpush1.bf16.msra.mxu0 0
        %2038 = vmatprep.subr.bf16.mxu0 0
        %2039 = vmatpush1.bf16.msra.mxu0 0
        %2040 = vmatprep.subr.bf16.mxu0 0
        %2041 = vmatpush1.bf16.msra.mxu0 0
        %2042 = vmatprep.subr.bf16.mxu0 0
        %2043 = vmatpush1.bf16.msra.mxu0 0
        %2044 = vmatprep.subr.bf16.mxu0 0
        %2045 = vmatpush1.bf16.msra.mxu0 0
        %2046 = vmatprep.subr.bf16.mxu0 0
        %2047 = vmatpush1.bf16.msra.mxu0 0
        %2048 = vmatprep.subr.bf16.mxu0 0
        %2049 = vmatpush1.bf16.msra.mxu0 0
        %2050 = vmatprep.subr.bf16.mxu0 0
        %2051 = vmatpush1.bf16.msra.mxu0 0
        %2052 = vmatprep.subr.bf16.mxu0 0
        %2053 = vmatpush1.bf16.msra.mxu0 0
        %2054 = vmatprep.subr.bf16.mxu0 0
        %2055 = vmatpush1.bf16.msra.mxu0 0
        %2056 = vmatprep.subr.bf16.mxu0 0
        %2057 = vmatpush1.bf16.msra.mxu0 0
        %2058 = vmatprep.subr.bf16.mxu0 0
        %2059 = vmatpush1.bf16.msra.mxu0 0
        %2060 = vmatprep.subr.bf16.mxu0 0
        %2061 = vmatpush1.bf16.msra.mxu0 0
        %2062 = vmatprep.mubr.bf16.mxu0 0
        %2063 = vmatmul.mubr.bf16.gmra.mrb[0].mxu0 %v2022
        %v2064 = vpop.f32.mrb[0].mxu0
        %v2065 = vadd.f32 %v1986, %v2064
        %v2066 = vpop.f32.mrb[0].mxu0
        %v2067 = vpop.f32.mrb[0].mxu0
        %v2068 = vadd.f32 %v1989, %v2067
        %v2069 = vpop.f32.mrb[0].mxu0
        %2070 = vmatprep.mubr.bf16.mxu0 0
        %2071 = vmatmul.mubr.bf16.gmra.mrb[0].mxu0 %v2024
        %v2072 = vpop.f32.mrb[0].mxu0
        %v2073 = vadd.f32 %v1994, %v2072
        %v2074 = vpop.f32.mrb[0].mxu0
        %v2075 = vpop.f32.mrb[0].mxu0
        %v2076 = vadd.f32 %v1997, %v2075
        %v2077 = vpop.f32.mrb[0].mxu0
        %2078 = vmatprep.mubr.bf16.mxu0 0
        %2079 = vmatmul.mubr.bf16.gmra.mrb[0].mxu0 %v2026
        %v2080 = vpop.f32.mrb[0].mxu0
        %v2081 = vadd.f32 %v2002, %v2080
        %v2082 = vpop.f32.mrb[0].mxu0
        %v2083 = vpop.f32.mrb[0].mxu0
        %v2084 = vadd.f32 %v2005, %v2083
        %v2085 = vpop.f32.mrb[0].mxu0
        %2086 = vmatprep.mubr.bf16.mxu0 0
        %2087 = vmatmul.mubr.bf16.gmra.mrb[0].mxu0 %v2028
        %v2088 = vpop.f32.mrb[0].mxu0
        %v2089 = vadd.f32 %v2010, %v2088
        %v2090 = vpop.f32.mrb[0].mxu0
        %v2091 = vpop.f32.mrb[0].mxu0
        %v2092 = vadd.f32 %v2013, %v2091
        %v2093 = vpop.f32.mrb[0].mxu0
        %2094 = vdwg.mxu0
        %v2095 = vld [vmem:[#allocation2] sm:$0xe]
        %v2096 = vld [vmem:[#allocation2 + $0x4] sm:$0xf]
        %v2097 = vld [vmem:[#allocation2 + $0x8] sm:$0xf]
        %v2098 = vld [vmem:[#allocation2 + $0xc] sm:$0xf]
        %v2099 = vld [vmem:[#allocation2 + $0x10] sm:$0xf]
        %v2100 = vld [vmem:[#allocation2 + $0x14] sm:$0xf]
        %v2101 = vld [vmem:[#allocation2 + $0x18] sm:$0xf]
        %v2102 = vld [vmem:[#allocation2 + $0x1c] sm:$0xf]
        %v2103 = vld [vmem:[#allocation2 + $0x20] sm:$0x1]
        %s2104 = scalar_lea.vmem %s5, 16
        %v2105 = vld [vmem:[%s2104] sm:$0xf]
        %v2106 = vld [vmem:[%s2104 + $0x4] sm:$0xf]
        %v2116 = vunpack.c.l.b16 %v2095
        %v2117 = vunpack.c.l.b16 %v2096
        %v2118 = vunpack.c.l.b16 %v2097
        %v2119 = vunpack.c.l.b16 %v2098
        %v2120 = vunpack.c.l.b16 %v2099
        %v2121 = vunpack.c.l.b16 %v2100
        %v2122 = vunpack.c.l.b16 %v2101
        %v2123 = vunpack.c.l.b16 %v2102
        %v2124 = vunpack.c.l.b16 %v2103
        %v2125 = vpack.c.b16 %v2117, %v2116
        %v2126 = vpack.c.b16 %v2119, %v2118
        %v2127 = vpack.c.b16 %v2121, %v2120
        %v2128 = vpack.c.b16 %v2123, %v2122
        %v2129 = vpack.c.b16 %v2124, %v2124
        %v2130 = vrot.slane %v2125, 1
        %v2131 = vrot.slane %v2126, 1
        %v2132 = vsel %vm1361, %v2130, %v2131
        %v2133 = vrot.slane %v2127, 1
        %v2134 = vsel %vm1361, %v2131, %v2133
        %v2135 = vrot.slane %v2128, 1
        %v2136 = vsel %vm1361, %v2133, %v2135
        %v2137 = vrot.slane %v2129, 1
        %v2138 = vsel %vm1361, %v2135, %v2137
        %v2141 = vunpack.c.l.b16 %v2105
        %v2142 = vunpack.c.l.b16 %v2106
        %v2143 = vpack.c.b16 %v2142, %v2141
        %v2146 = vsel %vm1938, %v2132, 0
        %v2149 = vsel %vm1938, %v2134, 0
        %v2152 = vsel %vm1938, %v2136, 0
        %v2155 = vsel %vm1938, %v2138, 0
        %2157 = vmatprep.subr.bf16.mxu0 0
        %2158 = vmatpush1.bf16.msra.mxu0 %v2143
        %2159 = vmatprep.subr.bf16.mxu0 0
        %2160 = vmatpush1.bf16.msra.mxu0 0
        %2161 = vmatprep.subr.bf16.mxu0 0
        %2162 = vmatpush1.bf16.msra.mxu0 0
        %2163 = vmatprep.subr.bf16.mxu0 0
        %2164 = vmatpush1.bf16.msra.mxu0 0
        %2165 = vmatprep.subr.bf16.mxu0 0
        %2166 = vmatpush1.bf16.msra.mxu0 0
        %2167 = vmatprep.subr.bf16.mxu0 0
        %2168 = vmatpush1.bf16.msra.mxu0 0
        %2169 = vmatprep.subr.bf16.mxu0 0
        %2170 = vmatpush1.bf16.msra.mxu0 0
        %2171 = vmatprep.subr.bf16.mxu0 0
        %2172 = vmatpush1.bf16.msra.mxu0 0
        %2173 = vmatprep.subr.bf16.mxu0 0
        %2174 = vmatpush1.bf16.msra.mxu0 0
        %2175 = vmatprep.subr.bf16.mxu0 0
        %2176 = vmatpush1.bf16.msra.mxu0 0
        %2177 = vmatprep.subr.bf16.mxu0 0
        %2178 = vmatpush1.bf16.msra.mxu0 0
        %2179 = vmatprep.subr.bf16.mxu0 0
        %2180 = vmatpush1.bf16.msra.mxu0 0
        %2181 = vmatprep.subr.bf16.mxu0 0
        %2182 = vmatpush1.bf16.msra.mxu0 0
        %2183 = vmatprep.subr.bf16.mxu0 0
        %2184 = vmatpush1.bf16.msra.mxu0 0
        %2185 = vmatprep.subr.bf16.mxu0 0
        %2186 = vmatpush1.bf16.msra.mxu0 0
        %2187 = vmatprep.subr.bf16.mxu0 0
        %2188 = vmatpush1.bf16.msra.mxu0 0
        %2189 = vmatprep.mubr.bf16.mxu0 0
        %2190 = vmatmul.mubr.bf16.gmra.mrb[0].mxu0 %v2146
        %v2191 = vpop.f32.mrb[0].mxu0
        %v2192 = vadd.f32 0.0, %v2191
        %v2193 = vpop.f32.mrb[0].mxu0
        %v2194 = vpop.f32.mrb[0].mxu0
        %v2195 = vadd.f32 0.0, %v2194
        %v2196 = vpop.f32.mrb[0].mxu0
        %2197 = vmatprep.mubr.bf16.mxu0 0
        %2198 = vmatmul.mubr.bf16.gmra.mrb[0].mxu0 %v2149
        %v2199 = vpop.f32.mrb[0].mxu0
        %v2200 = vadd.f32 0.0, %v2199
        %v2201 = vpop.f32.mrb[0].mxu0
        %v2202 = vpop.f32.mrb[0].mxu0
        %v2203 = vadd.f32 0.0, %v2202
        %v2204 = vpop.f32.mrb[0].mxu0
        %2205 = vmatprep.mubr.bf16.mxu0 0
        %2206 = vmatmul.mubr.bf16.gmra.mrb[0].mxu0 %v2152
        %v2207 = vpop.f32.mrb[0].mxu0
        %v2208 = vadd.f32 0.0, %v2207
        %v2209 = vpop.f32.mrb[0].mxu0
        %v2210 = vpop.f32.mrb[0].mxu0
        %v2211 = vadd.f32 0.0, %v2210
        %v2212 = vpop.f32.mrb[0].mxu0
        %2213 = vmatprep.mubr.bf16.mxu0 0
        %2214 = vmatmul.mubr.bf16.gmra.mrb[0].mxu0 %v2155
        %v2215 = vpop.f32.mrb[0].mxu0
        %v2216 = vadd.f32 0.0, %v2215
        %v2217 = vpop.f32.mrb[0].mxu0
        %v2218 = vpop.f32.mrb[0].mxu0
        %v2219 = vadd.f32 0.0, %v2218
        %v2220 = vpop.f32.mrb[0].mxu0
        %2221 = vdwg.mxu0
        %v2222 = vadd.f32 %v2065, %v2192
        %v2223 = vadd.f32 %v2068, %v2195
        %v2224 = vadd.f32 %v2073, %v2200
        %v2225 = vadd.f32 %v2076, %v2203
        %v2226 = vadd.f32 %v2081, %v2208
        %v2227 = vadd.f32 %v2084, %v2211
        %v2228 = vadd.f32 %v2089, %v2216
        %v2229 = vadd.f32 %v2092, %v2219
        %v2230 = vld [vmem:[#allocation2 + $0x20] sm:$0xf]
        %s2231 = scalar_lea.vmem %s5, 24
        %v2232 = vld [vmem:[%s2231] sm:$0xf]
        %v2233 = vld [vmem:[%s2231 + $0x4] sm:$0xf]
        %v2235 = vunpack.c.l.b16 %v2230
        %v2236 = vpack.c.b16 %v2118, %v2117
        %v2237 = vpack.c.b16 %v2120, %v2119
        %v2238 = vpack.c.b16 %v2122, %v2121
        %v2239 = vpack.c.b16 %v2235, %v2123
        %v2241 = vshrl.u32 %v2236, 16
        %v2243 = vshll.u32 %v2236, 16
        %v2245 = vrot.slane %v2243, 1
        %v2246 = vor.u32 %v2241, %v2245
        %v2248 = vshll.u32 %v2237, 16
        %v2250 = vrot.slane %v2248, 1
        %v2251 = vsel %vm558, %v2246, %v2250
        %v2252 = vshrl.u32 %v2237, 16
        %v2254 = vor.u32 %v2252, %v2250
        %v2256 = vshll.u32 %v2238, 16
        %v2258 = vrot.slane %v2256, 1
        %v2259 = vsel %vm558, %v2254, %v2258
        %v2260 = vshrl.u32 %v2238, 16
        %v2262 = vor.u32 %v2260, %v2258
        %v2264 = vshll.u32 %v2239, 16
        %v2266 = vrot.slane %v2264, 1
        %v2267 = vsel %vm558, %v2262, %v2266
        %v2268 = vshrl.u32 %v2239, 16
        %v2270 = vor.u32 %v2268, %v2266
        %v2273 = vunpack.c.l.b16 %v2232
        %v2274 = vunpack.c.l.b16 %v2233
        %v2275 = vpack.c.b16 %v2274, %v2273
        %v2278 = vsel %vm1938, %v2251, 0
        %v2281 = vsel %vm1938, %v2259, 0
        %v2284 = vsel %vm1938, %v2267, 0
        %v2287 = vsel %vm1938, %v2270, 0
        %2289 = vmatprep.subr.bf16.mxu0 0
        %2290 = vmatpush1.bf16.msra.mxu0 %v2275
        %2291 = vmatprep.subr.bf16.mxu0 0
        %2292 = vmatpush1.bf16.msra.mxu0 0
        %2293 = vmatprep.subr.bf16.mxu0 0
        %2294 = vmatpush1.bf16.msra.mxu0 0
        %2295 = vmatprep.subr.bf16.mxu0 0
        %2296 = vmatpush1.bf16.msra.mxu0 0
        %2297 = vmatprep.subr.bf16.mxu0 0
        %2298 = vmatpush1.bf16.msra.mxu0 0
        %2299 = vmatprep.subr.bf16.mxu0 0
        %2300 = vmatpush1.bf16.msra.mxu0 0
        %2301 = vmatprep.subr.bf16.mxu0 0
        %2302 = vmatpush1.bf16.msra.mxu0 0
        %2303 = vmatprep.subr.bf16.mxu0 0
        %2304 = vmatpush1.bf16.msra.mxu0 0
        %2305 = vmatprep.subr.bf16.mxu0 0
        %2306 = vmatpush1.bf16.msra.mxu0 0
        %2307 = vmatprep.subr.bf16.mxu0 0
        %2308 = vmatpush1.bf16.msra.mxu0 0
        %2309 = vmatprep.subr.bf16.mxu0 0
        %2310 = vmatpush1.bf16.msra.mxu0 0
        %2311 = vmatprep.subr.bf16.mxu0 0
        %2312 = vmatpush1.bf16.msra.mxu0 0
        %2313 = vmatprep.subr.bf16.mxu0 0
        %2314 = vmatpush1.bf16.msra.mxu0 0
        %2315 = vmatprep.subr.bf16.mxu0 0
        %2316 = vmatpush1.bf16.msra.mxu0 0
        %2317 = vmatprep.subr.bf16.mxu0 0
        %2318 = vmatpush1.bf16.msra.mxu0 0
        %2319 = vmatprep.subr.bf16.mxu0 0
        %2320 = vmatpush1.bf16.msra.mxu0 0
        %2321 = vmatprep.mubr.bf16.mxu0 0
        %2322 = vmatmul.mubr.bf16.gmra.mrb[0].mxu0 %v2278
        %v2323 = vpop.f32.mrb[0].mxu0
        %v2324 = vadd.f32 0.0, %v2323
        %v2325 = vpop.f32.mrb[0].mxu0
        %v2326 = vpop.f32.mrb[0].mxu0
        %v2327 = vadd.f32 0.0, %v2326
        %v2328 = vpop.f32.mrb[0].mxu0
        %2329 = vmatprep.mubr.bf16.mxu0 0
        %2330 = vmatmul.mubr.bf16.gmra.mrb[0].mxu0 %v2281
        %v2331 = vpop.f32.mrb[0].mxu0
        %v2332 = vadd.f32 0.0, %v2331
        %v2333 = vpop.f32.mrb[0].mxu0
        %v2334 = vpop.f32.mrb[0].mxu0
        %v2335 = vadd.f32 0.0, %v2334
        %v2336 = vpop.f32.mrb[0].mxu0
        %2337 = vmatprep.mubr.bf16.mxu0 0
        %2338 = vmatmul.mubr.bf16.gmra.mrb[0].mxu0 %v2284
        %v2339 = vpop.f32.mrb[0].mxu0
        %v2340 = vadd.f32 0.0, %v2339
        %v2341 = vpop.f32.mrb[0].mxu0
        %v2342 = vpop.f32.mrb[0].mxu0
        %v2343 = vadd.f32 0.0, %v2342
        %v2344 = vpop.f32.mrb[0].mxu0
        %2345 = vmatprep.mubr.bf16.mxu0 0
        %2346 = vmatmul.mubr.bf16.gmra.mrb[0].mxu0 %v2287
        %v2347 = vpop.f32.mrb[0].mxu0
        %v2348 = vadd.f32 0.0, %v2347
        %v2349 = vpop.f32.mrb[0].mxu0
        %v2350 = vpop.f32.mrb[0].mxu0
        %v2351 = vadd.f32 0.0, %v2350
        %v2352 = vpop.f32.mrb[0].mxu0
        %2353 = vdwg.mxu0
        %v2354 = vadd.f32 %v2222, %v2324
        %v2355 = vadd.f32 %v2223, %v2327
        %v2356 = vadd.f32 %v2224, %v2332
        %v2357 = vadd.f32 %v2225, %v2335
        %v2358 = vadd.f32 %v2226, %v2340
        %v2359 = vadd.f32 %v2227, %v2343
        %v2360 = vadd.f32 %v2228, %v2348
        %v2361 = vadd.f32 %v2229, %v2351
        %v2362 = vld [vmem:[#allocation2 + $0x4] sm:$0xe]
        %v2363 = vld [vmem:[#allocation2 + $0x8] sm:$0xf]
        %v2364 = vld [vmem:[#allocation2 + $0xc] sm:$0xf]
        %v2365 = vld [vmem:[#allocation2 + $0x10] sm:$0xf]
        %v2366 = vld [vmem:[#allocation2 + $0x14] sm:$0xf]
        %v2367 = vld [vmem:[#allocation2 + $0x18] sm:$0xf]
        %v2368 = vld [vmem:[#allocation2 + $0x1c] sm:$0xf]
        %v2369 = vld [vmem:[#allocation2 + $0x20] sm:$0xf]
        %v2370 = vld [vmem:[#allocation2 + $0x24] sm:$0x1]
        %s2371 = scalar_lea.vmem %s5, 32
        %v2372 = vld [vmem:[%s2371] sm:$0xf]
        %v2373 = vld [vmem:[%s2371 + $0x4] sm:$0xf]
        %v2383 = vunpack.c.l.b16 %v2362
        %v2384 = vunpack.c.l.b16 %v2363
        %v2385 = vunpack.c.l.b16 %v2364
        %v2386 = vunpack.c.l.b16 %v2365
        %v2387 = vunpack.c.l.b16 %v2366
        %v2388 = vunpack.c.l.b16 %v2367
        %v2389 = vunpack.c.l.b16 %v2368
        %v2390 = vunpack.c.l.b16 %v2369
        %v2391 = vunpack.c.l.b16 %v2370
        %v2392 = vpack.c.b16 %v2384, %v2383
        %v2393 = vpack.c.b16 %v2386, %v2385
        %v2394 = vpack.c.b16 %v2388, %v2387
        %v2395 = vpack.c.b16 %v2390, %v2389
        %v2396 = vpack.c.b16 %v2391, %v2391
        %v2397 = vrot.slane %v2392, 1
        %v2398 = vrot.slane %v2393, 1
        %v2399 = vsel %vm1361, %v2397, %v2398
        %v2400 = vrot.slane %v2394, 1
        %v2401 = vsel %vm1361, %v2398, %v2400
        %v2402 = vrot.slane %v2395, 1
        %v2403 = vsel %vm1361, %v2400, %v2402
        %v2404 = vrot.slane %v2396, 1
        %v2405 = vsel %vm1361, %v2402, %v2404
        %v2408 = vunpack.c.l.b16 %v2372
        %v2409 = vunpack.c.l.b16 %v2373
        %v2410 = vpack.c.b16 %v2409, %v2408
        %v2413 = vsel %vm1938, %v2399, 0
        %v2416 = vsel %vm1938, %v2401, 0
        %v2419 = vsel %vm1938, %v2403, 0
        %v2422 = vsel %vm1938, %v2405, 0
        %2424 = vmatprep.subr.bf16.mxu0 0
        %2425 = vmatpush1.bf16.msra.mxu0 %v2410
        %2426 = vmatprep.subr.bf16.mxu0 0
        %2427 = vmatpush1.bf16.msra.mxu0 0
        %2428 = vmatprep.subr.bf16.mxu0 0
        %2429 = vmatpush1.bf16.msra.mxu0 0
        %2430 = vmatprep.subr.bf16.mxu0 0
        %2431 = vmatpush1.bf16.msra.mxu0 0
        %2432 = vmatprep.subr.bf16.mxu0 0
        %2433 = vmatpush1.bf16.msra.mxu0 0
        %2434 = vmatprep.subr.bf16.mxu0 0
        %2435 = vmatpush1.bf16.msra.mxu0 0
        %2436 = vmatprep.subr.bf16.mxu0 0
        %2437 = vmatpush1.bf16.msra.mxu0 0
        %2438 = vmatprep.subr.bf16.mxu0 0
        %2439 = vmatpush1.bf16.msra.mxu0 0
        %2440 = vmatprep.subr.bf16.mxu0 0
        %2441 = vmatpush1.bf16.msra.mxu0 0
        %2442 = vmatprep.subr.bf16.mxu0 0
        %2443 = vmatpush1.bf16.msra.mxu0 0
        %2444 = vmatprep.subr.bf16.mxu0 0
        %2445 = vmatpush1.bf16.msra.mxu0 0
        %2446 = vmatprep.subr.bf16.mxu0 0
        %2447 = vmatpush1.bf16.msra.mxu0 0
        %2448 = vmatprep.subr.bf16.mxu0 0
        %2449 = vmatpush1.bf16.msra.mxu0 0
        %2450 = vmatprep.subr.bf16.mxu0 0
        %2451 = vmatpush1.bf16.msra.mxu0 0
        %2452 = vmatprep.subr.bf16.mxu0 0
        %2453 = vmatpush1.bf16.msra.mxu0 0
        %2454 = vmatprep.subr.bf16.mxu0 0
        %2455 = vmatpush1.bf16.msra.mxu0 0
        %2456 = vmatprep.mubr.bf16.mxu0 0
        %2457 = vmatmul.mubr.bf16.gmra.mrb[0].mxu0 %v2413
        %v2458 = vpop.f32.mrb[0].mxu0
        %v2459 = vadd.f32 0.0, %v2458
        %v2460 = vpop.f32.mrb[0].mxu0
        %v2461 = vpop.f32.mrb[0].mxu0
        %v2462 = vadd.f32 0.0, %v2461
        %v2463 = vpop.f32.mrb[0].mxu0
        %2464 = vmatprep.mubr.bf16.mxu0 0
        %2465 = vmatmul.mubr.bf16.gmra.mrb[0].mxu0 %v2416
        %v2466 = vpop.f32.mrb[0].mxu0
        %v2467 = vadd.f32 0.0, %v2466
        %v2468 = vpop.f32.mrb[0].mxu0
        %v2469 = vpop.f32.mrb[0].mxu0
        %v2470 = vadd.f32 0.0, %v2469
        %v2471 = vpop.f32.mrb[0].mxu0
        %2472 = vmatprep.mubr.bf16.mxu0 0
        %2473 = vmatmul.mubr.bf16.gmra.mrb[0].mxu0 %v2419
        %v2474 = vpop.f32.mrb[0].mxu0
        %v2475 = vadd.f32 0.0, %v2474
        %v2476 = vpop.f32.mrb[0].mxu0
        %v2477 = vpop.f32.mrb[0].mxu0
        %v2478 = vadd.f32 0.0, %v2477
        %v2479 = vpop.f32.mrb[0].mxu0
        %2480 = vmatprep.mubr.bf16.mxu0 0
        %2481 = vmatmul.mubr.bf16.gmra.mrb[0].mxu0 %v2422
        %v2482 = vpop.f32.mrb[0].mxu0
        %v2483 = vadd.f32 0.0, %v2482
        %v2484 = vpop.f32.mrb[0].mxu0
        %v2485 = vpop.f32.mrb[0].mxu0
        %v2486 = vadd.f32 0.0, %v2485
        %v2487 = vpop.f32.mrb[0].mxu0
        %2488 = vdwg.mxu0
        %v2489 = vadd.f32 %v2354, %v2459
        %v2490 = vadd.f32 %v2355, %v2462
        %v2491 = vadd.f32 %v2356, %v2467
        %v2492 = vadd.f32 %v2357, %v2470
        %v2493 = vadd.f32 %v2358, %v2475
        %v2494 = vadd.f32 %v2359, %v2478
        %v2495 = vadd.f32 %v2360, %v2483
        %v2496 = vadd.f32 %v2361, %v2486
        %s2497 = scalar_lea.vmem %s5, 40
        %v2498 = vld [vmem:[%s2497] sm:$0xf]
        %v2499 = vld [vmem:[%s2497 + $0x4] sm:$0xf]
        %vm2500 = vsmask.f32 6400
        %v2502 = vshrl.u32 %v2392, 16
        %v2504 = vrot.slane %v2502, 1
        %v2505 = vshll.u32 %v2392, 16
        %v2507 = vrot.slane %v2505, 2
        %v2508 = vor.u32 %v2504, %v2507
        %v2510 = vshrl.u32 %v2393, 16
        %v2512 = vrot.slane %v2510, 1
        %v2513 = vshll.u32 %v2393, 16
        %v2515 = vrot.slane %v2513, 2
        %v2516 = vor.u32 %v2512, %v2515
        %v2517 = vsel %vm2500, %v2508, %v2516
        %v2519 = vshrl.u32 %v2394, 16
        %v2521 = vrot.slane %v2519, 1
        %v2522 = vshll.u32 %v2394, 16
        %v2524 = vrot.slane %v2522, 2
        %v2525 = vor.u32 %v2521, %v2524
        %v2526 = vsel %vm2500, %v2516, %v2525
        %v2528 = vshrl.u32 %v2395, 16
        %v2530 = vrot.slane %v2528, 1
        %v2531 = vshll.u32 %v2395, 16
        %v2533 = vrot.slane %v2531, 2
        %v2534 = vor.u32 %v2530, %v2533
        %v2535 = vsel %vm2500, %v2525, %v2534
        %v2537 = vshrl.u32 %v2396, 16
        %v2539 = vrot.slane %v2537, 1
        %v2540 = vshll.u32 %v2396, 16
        %v2542 = vrot.slane %v2540, 2
        %v2543 = vor.u32 %v2539, %v2542
        %v2544 = vsel %vm2500, %v2534, %v2543
        %v2547 = vunpack.c.l.b16 %v2498
        %v2548 = vunpack.c.l.b16 %v2499
        %v2549 = vpack.c.b16 %v2548, %v2547
        %v2552 = vsel %vm1938, %v2517, 0
        %v2555 = vsel %vm1938, %v2526, 0
        %v2558 = vsel %vm1938, %v2535, 0
        %v2561 = vsel %vm1938, %v2544, 0
        %2563 = vmatprep.subr.bf16.mxu0 0
        %2564 = vmatpush1.bf16.msra.mxu0 %v2549
        %2565 = vmatprep.subr.bf16.mxu0 0
        %2566 = vmatpush1.bf16.msra.mxu0 0
        %2567 = vmatprep.subr.bf16.mxu0 0
        %2568 = vmatpush1.bf16.msra.mxu0 0
        %2569 = vmatprep.subr.bf16.mxu0 0
        %2570 = vmatpush1.bf16.msra.mxu0 0
        %2571 = vmatprep.subr.bf16.mxu0 0
        %2572 = vmatpush1.bf16.msra.mxu0 0
        %2573 = vmatprep.subr.bf16.mxu0 0
        %2574 = vmatpush1.bf16.msra.mxu0 0
        %2575 = vmatprep.subr.bf16.mxu0 0
        %2576 = vmatpush1.bf16.msra.mxu0 0
        %2577 = vmatprep.subr.bf16.mxu0 0
        %2578 = vmatpush1.bf16.msra.mxu0 0
        %2579 = vmatprep.subr.bf16.mxu0 0
        %2580 = vmatpush1.bf16.msra.mxu0 0
        %2581 = vmatprep.subr.bf16.mxu0 0
        %2582 = vmatpush1.bf16.msra.mxu0 0
        %2583 = vmatprep.subr.bf16.mxu0 0
        %2584 = vmatpush1.bf16.msra.mxu0 0
        %2585 = vmatprep.subr.bf16.mxu0 0
        %2586 = vmatpush1.bf16.msra.mxu0 0
        %2587 = vmatprep.subr.bf16.mxu0 0
        %2588 = vmatpush1.bf16.msra.mxu0 0
        %2589 = vmatprep.subr.bf16.mxu0 0
        %2590 = vmatpush1.bf16.msra.mxu0 0
        %2591 = vmatprep.subr.bf16.mxu0 0
        %2592 = vmatpush1.bf16.msra.mxu0 0
        %2593 = vmatprep.subr.bf16.mxu0 0
        %2594 = vmatpush1.bf16.msra.mxu0 0
        %2595 = vmatprep.mubr.bf16.mxu0 0
        %2596 = vmatmul.mubr.bf16.gmra.mrb[0].mxu0 %v2552
        %v2597 = vpop.f32.mrb[0].mxu0
        %v2598 = vadd.f32 0.0, %v2597
        %v2599 = vpop.f32.mrb[0].mxu0
        %v2600 = vpop.f32.mrb[0].mxu0
        %v2601 = vadd.f32 0.0, %v2600
        %v2602 = vpop.f32.mrb[0].mxu0
        %2603 = vmatprep.mubr.bf16.mxu0 0
        %2604 = vmatmul.mubr.bf16.gmra.mrb[0].mxu0 %v2555
        %v2605 = vpop.f32.mrb[0].mxu0
        %v2606 = vadd.f32 0.0, %v2605
        %v2607 = vpop.f32.mrb[0].mxu0
        %v2608 = vpop.f32.mrb[0].mxu0
        %v2609 = vadd.f32 0.0, %v2608
        %v2610 = vpop.f32.mrb[0].mxu0
        %2611 = vmatprep.mubr.bf16.mxu0 0
        %2612 = vmatmul.mubr.bf16.gmra.mrb[0].mxu0 %v2558
        %v2613 = vpop.f32.mrb[0].mxu0
        %v2614 = vadd.f32 0.0, %v2613
        %v2615 = vpop.f32.mrb[0].mxu0
        %v2616 = vpop.f32.mrb[0].mxu0
        %v2617 = vadd.f32 0.0, %v2616
        %v2618 = vpop.f32.mrb[0].mxu0
        %2619 = vmatprep.mubr.bf16.mxu0 0
        %2620 = vmatmul.mubr.bf16.gmra.mrb[0].mxu0 %v2561
        %v2621 = vpop.f32.mrb[0].mxu0
        %v2622 = vadd.f32 0.0, %v2621
        %v2623 = vpop.f32.mrb[0].mxu0
        %v2624 = vpop.f32.mrb[0].mxu0
        %v2625 = vadd.f32 0.0, %v2624
        %v2626 = vpop.f32.mrb[0].mxu0
        %2627 = vdwg.mxu0
        %v2628 = vadd.f32 %v2489, %v2598
        %v2629 = vadd.f32 %v2490, %v2601
        %v2630 = vadd.f32 %v2491, %v2606
        %v2631 = vadd.f32 %v2492, %v2609
        %v2632 = vadd.f32 %v2493, %v2614
        %v2633 = vadd.f32 %v2494, %v2617
        %v2634 = vadd.f32 %v2495, %v2622
        %v2635 = vadd.f32 %v2496, %v2625
        %v2636 = vld [vmem:[#allocation2 + $0x8] sm:$0xe]
        %v2637 = vld [vmem:[#allocation2 + $0xc] sm:$0xf]
        %v2638 = vld [vmem:[#allocation2 + $0x10] sm:$0xf]
        %v2639 = vld [vmem:[#allocation2 + $0x14] sm:$0xf]
        %v2640 = vld [vmem:[#allocation2 + $0x18] sm:$0xf]
        %v2641 = vld [vmem:[#allocation2 + $0x1c] sm:$0xf]
        %v2642 = vld [vmem:[#allocation2 + $0x20] sm:$0xf]
        %v2643 = vld [vmem:[#allocation2 + $0x24] sm:$0xf]
        %v2644 = vld [vmem:[#allocation2 + $0x28] sm:$0x1]
        %s2645 = scalar_lea.vmem %s5, 48
        %v2646 = vld [vmem:[%s2645] sm:$0xf]
        %v2647 = vld [vmem:[%s2645 + $0x4] sm:$0xf]
        %v2657 = vunpack.c.l.b16 %v2636
        %v2658 = vunpack.c.l.b16 %v2637
        %v2659 = vunpack.c.l.b16 %v2638
        %v2660 = vunpack.c.l.b16 %v2639
        %v2661 = vunpack.c.l.b16 %v2640
        %v2662 = vunpack.c.l.b16 %v2641
        %v2663 = vunpack.c.l.b16 %v2642
        %v2664 = vunpack.c.l.b16 %v2643
        %v2665 = vunpack.c.l.b16 %v2644
        %v2666 = vpack.c.b16 %v2658, %v2657
        %v2667 = vpack.c.b16 %v2660, %v2659
        %v2668 = vpack.c.b16 %v2662, %v2661
        %v2669 = vpack.c.b16 %v2664, %v2663
        %v2670 = vpack.c.b16 %v2665, %v2665
        %v2671 = vrot.slane %v2666, 1
        %v2672 = vrot.slane %v2667, 1
        %v2673 = vsel %vm1361, %v2671, %v2672
        %v2674 = vrot.slane %v2668, 1
        %v2675 = vsel %vm1361, %v2672, %v2674
        %v2676 = vrot.slane %v2669, 1
        %v2677 = vsel %vm1361, %v2674, %v2676
        %v2678 = vrot.slane %v2670, 1
        %v2679 = vsel %vm1361, %v2676, %v2678
        %v2682 = vunpack.c.l.b16 %v2646
        %v2683 = vunpack.c.l.b16 %v2647
        %v2684 = vpack.c.b16 %v2683, %v2682
        %v2687 = vsel %vm1938, %v2673, 0
        %v2690 = vsel %vm1938, %v2675, 0
        %v2693 = vsel %vm1938, %v2677, 0
        %v2696 = vsel %vm1938, %v2679, 0
        %2698 = vmatprep.subr.bf16.mxu0 0
        %2699 = vmatpush1.bf16.msra.mxu0 %v2684
        %2700 = vmatprep.subr.bf16.mxu0 0
        %2701 = vmatpush1.bf16.msra.mxu0 0
        %2702 = vmatprep.subr.bf16.mxu0 0
        %2703 = vmatpush1.bf16.msra.mxu0 0
        %2704 = vmatprep.subr.bf16.mxu0 0
        %2705 = vmatpush1.bf16.msra.mxu0 0
        %2706 = vmatprep.subr.bf16.mxu0 0
        %2707 = vmatpush1.bf16.msra.mxu0 0
        %2708 = vmatprep.subr.bf16.mxu0 0
        %2709 = vmatpush1.bf16.msra.mxu0 0
        %2710 = vmatprep.subr.bf16.mxu0 0
        %2711 = vmatpush1.bf16.msra.mxu0 0
        %2712 = vmatprep.subr.bf16.mxu0 0
        %2713 = vmatpush1.bf16.msra.mxu0 0
        %2714 = vmatprep.subr.bf16.mxu0 0
        %2715 = vmatpush1.bf16.msra.mxu0 0
        %2716 = vmatprep.subr.bf16.mxu0 0
        %2717 = vmatpush1.bf16.msra.mxu0 0
        %2718 = vmatprep.subr.bf16.mxu0 0
        %2719 = vmatpush1.bf16.msra.mxu0 0
        %2720 = vmatprep.subr.bf16.mxu0 0
        %2721 = vmatpush1.bf16.msra.mxu0 0
        %2722 = vmatprep.subr.bf16.mxu0 0
        %2723 = vmatpush1.bf16.msra.mxu0 0
        %2724 = vmatprep.subr.bf16.mxu0 0
        %2725 = vmatpush1.bf16.msra.mxu0 0
        %2726 = vmatprep.subr.bf16.mxu0 0
        %2727 = vmatpush1.bf16.msra.mxu0 0
        %2728 = vmatprep.subr.bf16.mxu0 0
        %2729 = vmatpush1.bf16.msra.mxu0 0
        %2730 = vmatprep.mubr.bf16.mxu0 0
        %2731 = vmatmul.mubr.bf16.gmra.mrb[0].mxu0 %v2687
        %v2732 = vpop.f32.mrb[0].mxu0
        %v2733 = vadd.f32 0.0, %v2732
        %v2734 = vpop.f32.mrb[0].mxu0
        %v2735 = vpop.f32.mrb[0].mxu0
        %v2736 = vadd.f32 0.0, %v2735
        %v2737 = vpop.f32.mrb[0].mxu0
        %2738 = vmatprep.mubr.bf16.mxu0 0
        %2739 = vmatmul.mubr.bf16.gmra.mrb[0].mxu0 %v2690
        %v2740 = vpop.f32.mrb[0].mxu0
        %v2741 = vadd.f32 0.0, %v2740
        %v2742 = vpop.f32.mrb[0].mxu0
        %v2743 = vpop.f32.mrb[0].mxu0
        %v2744 = vadd.f32 0.0, %v2743
        %v2745 = vpop.f32.mrb[0].mxu0
        %2746 = vmatprep.mubr.bf16.mxu0 0
        %2747 = vmatmul.mubr.bf16.gmra.mrb[0].mxu0 %v2693
        %v2748 = vpop.f32.mrb[0].mxu0
        %v2749 = vadd.f32 0.0, %v2748
        %v2750 = vpop.f32.mrb[0].mxu0
        %v2751 = vpop.f32.mrb[0].mxu0
        %v2752 = vadd.f32 0.0, %v2751
        %v2753 = vpop.f32.mrb[0].mxu0
        %2754 = vmatprep.mubr.bf16.mxu0 0
        %2755 = vmatmul.mubr.bf16.gmra.mrb[0].mxu0 %v2696
        %v2756 = vpop.f32.mrb[0].mxu0
        %v2757 = vadd.f32 0.0, %v2756
        %v2758 = vpop.f32.mrb[0].mxu0
        %v2759 = vpop.f32.mrb[0].mxu0
        %v2760 = vadd.f32 0.0, %v2759
        %v2761 = vpop.f32.mrb[0].mxu0
        %2762 = vdwg.mxu0
        %v2763 = vadd.f32 %v2628, %v2733
        %v2764 = vadd.f32 %v2629, %v2736
        %v2765 = vadd.f32 %v2630, %v2741
        %v2766 = vadd.f32 %v2631, %v2744
        %v2767 = vadd.f32 %v2632, %v2749
        %v2768 = vadd.f32 %v2633, %v2752
        %v2769 = vadd.f32 %v2634, %v2757
        %v2770 = vadd.f32 %v2635, %v2760
        %s2771 = scalar_lea.vmem %s5, 56
        %v2772 = vld [vmem:[%s2771] sm:$0xf]
        %v2773 = vld [vmem:[%s2771 + $0x4] sm:$0xf]
        %v2775 = vshrl.u32 %v2666, 16
        %v2777 = vrot.slane %v2775, 1
        %v2778 = vshll.u32 %v2666, 16
        %v2780 = vrot.slane %v2778, 2
        %v2781 = vor.u32 %v2777, %v2780
        %v2783 = vshrl.u32 %v2667, 16
        %v2785 = vrot.slane %v2783, 1
        %v2786 = vshll.u32 %v2667, 16
        %v2788 = vrot.slane %v2786, 2
        %v2789 = vor.u32 %v2785, %v2788
        %v2790 = vsel %vm2500, %v2781, %v2789
        %v2792 = vshrl.u32 %v2668, 16
        %v2794 = vrot.slane %v2792, 1
        %v2795 = vshll.u32 %v2668, 16
        %v2797 = vrot.slane %v2795, 2
        %v2798 = vor.u32 %v2794, %v2797
        %v2799 = vsel %vm2500, %v2789, %v2798
        %v2801 = vshrl.u32 %v2669, 16
        %v2803 = vrot.slane %v2801, 1
        %v2804 = vshll.u32 %v2669, 16
        %v2806 = vrot.slane %v2804, 2
        %v2807 = vor.u32 %v2803, %v2806
        %v2808 = vsel %vm2500, %v2798, %v2807
        %v2810 = vshrl.u32 %v2670, 16
        %v2812 = vrot.slane %v2810, 1
        %v2813 = vshll.u32 %v2670, 16
        %v2815 = vrot.slane %v2813, 2
        %v2816 = vor.u32 %v2812, %v2815
        %v2817 = vsel %vm2500, %v2807, %v2816
        %v2820 = vunpack.c.l.b16 %v2772
        %v2821 = vunpack.c.l.b16 %v2773
        %v2822 = vpack.c.b16 %v2821, %v2820
        %v2825 = vsel %vm1938, %v2790, 0
        %v2828 = vsel %vm1938, %v2799, 0
        %v2831 = vsel %vm1938, %v2808, 0
        %v2834 = vsel %vm1938, %v2817, 0
        %2836 = vmatprep.subr.bf16.mxu0 0
        %2837 = vmatpush1.bf16.msra.mxu0 %v2822
        %2838 = vmatprep.subr.bf16.mxu0 0
        %2839 = vmatpush1.bf16.msra.mxu0 0
        %2840 = vmatprep.subr.bf16.mxu0 0
        %2841 = vmatpush1.bf16.msra.mxu0 0
        %2842 = vmatprep.subr.bf16.mxu0 0
        %2843 = vmatpush1.bf16.msra.mxu0 0
        %2844 = vmatprep.subr.bf16.mxu0 0
        %2845 = vmatpush1.bf16.msra.mxu0 0
        %2846 = vmatprep.subr.bf16.mxu0 0
        %2847 = vmatpush1.bf16.msra.mxu0 0
        %2848 = vmatprep.subr.bf16.mxu0 0
        %2849 = vmatpush1.bf16.msra.mxu0 0
        %2850 = vmatprep.subr.bf16.mxu0 0
        %2851 = vmatpush1.bf16.msra.mxu0 0
        %2852 = vmatprep.subr.bf16.mxu0 0
        %2853 = vmatpush1.bf16.msra.mxu0 0
        %2854 = vmatprep.subr.bf16.mxu0 0
        %2855 = vmatpush1.bf16.msra.mxu0 0
        %2856 = vmatprep.subr.bf16.mxu0 0
        %2857 = vmatpush1.bf16.msra.mxu0 0
        %2858 = vmatprep.subr.bf16.mxu0 0
        %2859 = vmatpush1.bf16.msra.mxu0 0
        %2860 = vmatprep.subr.bf16.mxu0 0
        %2861 = vmatpush1.bf16.msra.mxu0 0
        %2862 = vmatprep.subr.bf16.mxu0 0
        %2863 = vmatpush1.bf16.msra.mxu0 0
        %2864 = vmatprep.subr.bf16.mxu0 0
        %2865 = vmatpush1.bf16.msra.mxu0 0
        %2866 = vmatprep.subr.bf16.mxu0 0
        %2867 = vmatpush1.bf16.msra.mxu0 0
        %2868 = vmatprep.mubr.bf16.mxu0 0
        %2869 = vmatmul.mubr.bf16.gmra.mrb[0].mxu0 %v2825
        %v2870 = vpop.f32.mrb[0].mxu0
        %v2871 = vadd.f32 0.0, %v2870
        %v2872 = vpop.f32.mrb[0].mxu0
        %v2873 = vpop.f32.mrb[0].mxu0
        %v2874 = vadd.f32 0.0, %v2873
        %v2875 = vpop.f32.mrb[0].mxu0
        %2876 = vmatprep.mubr.bf16.mxu0 0
        %2877 = vmatmul.mubr.bf16.gmra.mrb[0].mxu0 %v2828
        %v2878 = vpop.f32.mrb[0].mxu0
        %v2879 = vadd.f32 0.0, %v2878
        %v2880 = vpop.f32.mrb[0].mxu0
        %v2881 = vpop.f32.mrb[0].mxu0
        %v2882 = vadd.f32 0.0, %v2881
        %v2883 = vpop.f32.mrb[0].mxu0
        %2884 = vmatprep.mubr.bf16.mxu0 0
        %2885 = vmatmul.mubr.bf16.gmra.mrb[0].mxu0 %v2831
        %v2886 = vpop.f32.mrb[0].mxu0
        %v2887 = vadd.f32 0.0, %v2886
        %v2888 = vpop.f32.mrb[0].mxu0
        %v2889 = vpop.f32.mrb[0].mxu0
        %v2890 = vadd.f32 0.0, %v2889
        %v2891 = vpop.f32.mrb[0].mxu0
        %2892 = vmatprep.mubr.bf16.mxu0 0
        %2893 = vmatmul.mubr.bf16.gmra.mrb[0].mxu0 %v2834
        %v2894 = vpop.f32.mrb[0].mxu0
        %v2895 = vadd.f32 0.0, %v2894
        %v2896 = vpop.f32.mrb[0].mxu0
        %v2897 = vpop.f32.mrb[0].mxu0
        %v2898 = vadd.f32 0.0, %v2897
        %v2899 = vpop.f32.mrb[0].mxu0
        %2900 = vdwg.mxu0
        %v2901 = vadd.f32 %v2763, %v2871
        %v2902 = vadd.f32 %v2764, %v2874
        %v2903 = vadd.f32 %v2765, %v2879
        %v2904 = vadd.f32 %v2766, %v2882
        %v2905 = vadd.f32 %v2767, %v2887
        %v2906 = vadd.f32 %v2768, %v2890
        %v2907 = vadd.f32 %v2769, %v2895
        %v2908 = vadd.f32 %v2770, %v2898
        %v2909 = vld [vmem:[#allocation2 + $0x8] sm:$0xc]
        %v2910 = vld [vmem:[#allocation2 + $0x28] sm:$0x3]
        %s2911 = scalar_lea.vmem %s5, 64
        %v2912 = vld [vmem:[%s2911] sm:$0xf]
        %v2913 = vld [vmem:[%s2911 + $0x4] sm:$0xf]
        %v2916 = vunpack.c.l.b16 %v2909
        %v2917 = vunpack.c.l.b16 %v2910
        %v2918 = vpack.c.b16 %v2658, %v2916
        %v2919 = vpack.c.b16 %v2917, %v2917
        %vm2920 = vcmask 1045504
        %v2921 = vrot.slane %v2918, 2
        %v2922 = vrot.slane %v2667, 2
        %v2923 = vsel %vm2920, %v2921, %v2922
        %v2924 = vrot.slane %v2668, 2
        %v2925 = vsel %vm2920, %v2922, %v2924
        %v2926 = vrot.slane %v2669, 2
        %v2927 = vsel %vm2920, %v2924, %v2926
        %v2928 = vrot.slane %v2919, 2
        %v2929 = vsel %vm2920, %v2926, %v2928
        %v2932 = vunpack.c.l.b16 %v2912
        %v2933 = vunpack.c.l.b16 %v2913
        %v2934 = vpack.c.b16 %v2933, %v2932
        %v2937 = vsel %vm1938, %v2923, 0
        %v2940 = vsel %vm1938, %v2925, 0
        %v2943 = vsel %vm1938, %v2927, 0
        %v2946 = vsel %vm1938, %v2929, 0
        %2948 = vmatprep.subr.bf16.mxu0 0
        %2949 = vmatpush1.bf16.msra.mxu0 %v2934
        %2950 = vmatprep.subr.bf16.mxu0 0
        %2951 = vmatpush1.bf16.msra.mxu0 0
        %2952 = vmatprep.subr.bf16.mxu0 0
        %2953 = vmatpush1.bf16.msra.mxu0 0
        %2954 = vmatprep.subr.bf16.mxu0 0
        %2955 = vmatpush1.bf16.msra.mxu0 0
        %2956 = vmatprep.subr.bf16.mxu0 0
        %2957 = vmatpush1.bf16.msra.mxu0 0
        %2958 = vmatprep.subr.bf16.mxu0 0
        %2959 = vmatpush1.bf16.msra.mxu0 0
        %2960 = vmatprep.subr.bf16.mxu0 0
        %2961 = vmatpush1.bf16.msra.mxu0 0
        %2962 = vmatprep.subr.bf16.mxu0 0
        %2963 = vmatpush1.bf16.msra.mxu0 0
        %2964 = vmatprep.subr.bf16.mxu0 0
        %2965 = vmatpush1.bf16.msra.mxu0 0
        %2966 = vmatprep.subr.bf16.mxu0 0
        %2967 = vmatpush1.bf16.msra.mxu0 0
        %2968 = vmatprep.subr.bf16.mxu0 0
        %2969 = vmatpush1.bf16.msra.mxu0 0
        %2970 = vmatprep.subr.bf16.mxu0 0
        %2971 = vmatpush1.bf16.msra.mxu0 0
        %2972 = vmatprep.subr.bf16.mxu0 0
        %2973 = vmatpush1.bf16.msra.mxu0 0
        %2974 = vmatprep.subr.bf16.mxu0 0
        %2975 = vmatpush1.bf16.msra.mxu0 0
        %2976 = vmatprep.subr.bf16.mxu0 0
        %2977 = vmatpush1.bf16.msra.mxu0 0
        %2978 = vmatprep.subr.bf16.mxu0 0
        %2979 = vmatpush1.bf16.msra.mxu0 0
        %2980 = vmatprep.mubr.bf16.mxu0 0
        %2981 = vmatmul.mubr.bf16.gmra.mrb[0].mxu0 %v2937
        %v2982 = vpop.f32.mrb[0].mxu0
        %v2983 = vadd.f32 0.0, %v2982
        %v2984 = vpop.f32.mrb[0].mxu0
        %v2985 = vpop.f32.mrb[0].mxu0
        %v2986 = vadd.f32 0.0, %v2985
        %v2987 = vpop.f32.mrb[0].mxu0
        %2988 = vmatprep.mubr.bf16.mxu0 0
        %2989 = vmatmul.mubr.bf16.gmra.mrb[0].mxu0 %v2940
        %v2990 = vpop.f32.mrb[0].mxu0
        %v2991 = vadd.f32 0.0, %v2990
        %v2992 = vpop.f32.mrb[0].mxu0
        %v2993 = vpop.f32.mrb[0].mxu0
        %v2994 = vadd.f32 0.0, %v2993
        %v2995 = vpop.f32.mrb[0].mxu0
        %2996 = vmatprep.mubr.bf16.mxu0 0
        %2997 = vmatmul.mubr.bf16.gmra.mrb[0].mxu0 %v2943
        %v2998 = vpop.f32.mrb[0].mxu0
        %v2999 = vadd.f32 0.0, %v2998
        %v3000 = vpop.f32.mrb[0].mxu0
        %v3001 = vpop.f32.mrb[0].mxu0
        %v3002 = vadd.f32 0.0, %v3001
        %v3003 = vpop.f32.mrb[0].mxu0
        %3004 = vmatprep.mubr.bf16.mxu0 0
        %3005 = vmatmul.mubr.bf16.gmra.mrb[0].mxu0 %v2946
        %v3006 = vpop.f32.mrb[0].mxu0
        %v3007 = vadd.f32 0.0, %v3006
        %v3008 = vpop.f32.mrb[0].mxu0
        %v3009 = vpop.f32.mrb[0].mxu0
        %v3010 = vadd.f32 0.0, %v3009
        %v3011 = vpop.f32.mrb[0].mxu0
        %3012 = vdwg.mxu0
        %v3013 = vadd.f32 %v2901, %v2983
        %v3014 = vadd.f32 %v2902, %v2986
        %v3015 = vadd.f32 %v2903, %v2991
        %v3016 = vadd.f32 %v2904, %v2994
        %v3017 = vadd.f32 %v2905, %v2999
        %v3018 = vadd.f32 %v2906, %v3002
        %v3019 = vadd.f32 %v2907, %v3007
        %v3020 = vadd.f32 %v2908, %v3010
        %v3021 = vld [vmem:[%s6] sm:$0x1]
        %v3023 = vlaneseq
        %v3024 = vshrl.u32 %v3023, 7
        %v3025 = vsub.s32 0, %v3024
        %v3026 = vrot.slane %v3021, %v3025
        %v3028 = vadd.f32 %v3013, %v3026
        %v3029 = vadd.f32 %v3014, %v3026
        %v3030 = vadd.f32 %v3015, %v3026
        %v3031 = vadd.f32 %v3016, %v3026
        %v3032 = vadd.f32 %v3017, %v3026
        %v3033 = vadd.f32 %v3018, %v3026
        %v3034 = vadd.f32 %v3019, %v3026
        %v3035 = vadd.f32 %v3020, %v3026
        %v3036 = vmax.f32 %v3028, 0.0
        %v3037 = vmax.f32 %v3029, 0.0
        %v3038 = vmax.f32 %v3030, 0.0
        %v3039 = vmax.f32 %v3031, 0.0
        %v3040 = vmax.f32 %v3032, 0.0
        %v3041 = vmax.f32 %v3033, 0.0
        %v3042 = vmax.f32 %v3034, 0.0
        %v3043 = vmax.f32 %v3035, 0.0
        %v3044 = vpack.c.bf16 %v3037, %v3036
        %v3045 = vpack.c.bf16 %v3039, %v3038
        %v3046 = vpack.c.bf16 %v3041, %v3040
        %v3047 = vpack.c.bf16 %v3043, %v3042
        %v3048 = vld [vmem:[%s7] sm:$0xf]
        %v3049 = vld [vmem:[%s7 + $0x4] sm:$0xf]
        %v3050 = vld [vmem:[%s7 + $0x8] sm:$0xf]
        %v3051 = vld [vmem:[%s7 + $0xc] sm:$0xf]
        %v3052 = vld [vmem:[%s7 + $0x10] sm:$0xf]
        %v3053 = vld [vmem:[%s7 + $0x14] sm:$0xf]
        %v3054 = vld [vmem:[%s7 + $0x18] sm:$0xf]
        %v3055 = vld [vmem:[%s7 + $0x1c] sm:$0xf]
        %v3056 = vld [vmem:[%s7 + $0x20] sm:$0xf]
        %v3057 = vld [vmem:[%s7 + $0x24] sm:$0xf]
        %v3058 = vld [vmem:[%s7 + $0x28] sm:$0xf]
        %v3059 = vld [vmem:[%s7 + $0x2c] sm:$0xf]
        %v3060 = vld [vmem:[%s7 + $0x30] sm:$0xf]
        %v3061 = vld [vmem:[%s7 + $0x34] sm:$0xf]
        %v3062 = vld [vmem:[%s7 + $0x38] sm:$0xf]
        %v3063 = vld [vmem:[%s7 + $0x3c] sm:$0xf]
        %s3064 = scalar_lea.vmem %s7, 64
        %v3065 = vld [vmem:[%s3064] sm:$0xf]
        %v3066 = vld [vmem:[%s3064 + $0x4] sm:$0xf]
        %v3067 = vld [vmem:[%s3064 + $0x8] sm:$0xf]
        %v3068 = vld [vmem:[%s3064 + $0xc] sm:$0xf]
        %v3069 = vld [vmem:[%s3064 + $0x10] sm:$0xf]
        %v3070 = vld [vmem:[%s3064 + $0x14] sm:$0xf]
        %v3071 = vld [vmem:[%s3064 + $0x18] sm:$0xf]
        %v3072 = vld [vmem:[%s3064 + $0x1c] sm:$0xf]
        %v3073 = vld [vmem:[%s3064 + $0x20] sm:$0xf]
        %v3074 = vld [vmem:[%s3064 + $0x24] sm:$0xf]
        %v3075 = vld [vmem:[%s3064 + $0x28] sm:$0xf]
        %v3076 = vld [vmem:[%s3064 + $0x2c] sm:$0xf]
        %v3077 = vld [vmem:[%s3064 + $0x30] sm:$0xf]
        %v3078 = vld [vmem:[%s3064 + $0x34] sm:$0xf]
        %v3079 = vld [vmem:[%s3064 + $0x38] sm:$0xf]
        %v3080 = vld [vmem:[%s3064 + $0x3c] sm:$0xf]
        %v3082 = vshrl.u32 %v3044, 16
        %v3084 = vshll.u32 %v3044, 16
        %v3086 = vrot.slane %v3084, 1
        %v3087 = vor.u32 %v3082, %v3086
        %v3089 = vshll.u32 %v3045, 16
        %v3091 = vrot.slane %v3089, 1
        %v3092 = vsel %vm558, %v3087, %v3091
        %v3093 = vshrl.u32 %v3045, 16
        %v3095 = vor.u32 %v3093, %v3091
        %v3097 = vshll.u32 %v3046, 16
        %v3099 = vrot.slane %v3097, 1
        %v3100 = vsel %vm558, %v3095, %v3099
        %v3101 = vshrl.u32 %v3046, 16
        %v3103 = vor.u32 %v3101, %v3099
        %v3123 = vunpack.c.l.b16 %v3065
        %v3124 = vunpack.c.l.b16 %v3066
        %v3125 = vunpack.c.l.b16 %v3067
        %v3126 = vunpack.c.l.b16 %v3068
        %v3127 = vunpack.c.l.b16 %v3069
        %v3128 = vunpack.c.l.b16 %v3070
        %v3129 = vunpack.c.l.b16 %v3071
        %v3130 = vunpack.c.l.b16 %v3072
        %v3131 = vunpack.c.l.b16 %v3073
        %v3132 = vunpack.c.l.b16 %v3074
        %v3133 = vunpack.c.l.b16 %v3075
        %v3134 = vunpack.c.l.b16 %v3076
        %v3135 = vunpack.c.l.b16 %v3077
        %v3136 = vunpack.c.l.b16 %v3078
        %v3137 = vunpack.c.l.b16 %v3079
        %v3138 = vunpack.c.l.b16 %v3080
        %v3139 = vpack.c.b16 %v3124, %v3123
        %v3140 = vpack.c.b16 %v3126, %v3125
        %v3141 = vpack.c.b16 %v3128, %v3127
        %v3142 = vpack.c.b16 %v3130, %v3129
        %v3143 = vpack.c.b16 %v3132, %v3131
        %v3144 = vpack.c.b16 %v3134, %v3133
        %v3145 = vpack.c.b16 %v3136, %v3135
        %v3146 = vpack.c.b16 %v3138, %v3137
        %3155 = vmatprep.subr.bf16.mxu0 0
        %3156 = vmatpush1.bf16.msra.mxu0 %v3139
        %3157 = vmatprep.subr.bf16.mxu0 0
        %3158 = vmatpush1.bf16.msra.mxu0 %v3140
        %3159 = vmatprep.subr.bf16.mxu0 0
        %3160 = vmatpush1.bf16.msra.mxu0 %v3141
        %3161 = vmatprep.subr.bf16.mxu0 0
        %3162 = vmatpush1.bf16.msra.mxu0 %v3142
        %3163 = vmatprep.subr.bf16.mxu0 0
        %3164 = vmatpush1.bf16.msra.mxu0 %v3143
        %3165 = vmatprep.subr.bf16.mxu0 0
        %3166 = vmatpush1.bf16.msra.mxu0 %v3144
        %3167 = vmatprep.subr.bf16.mxu0 0
        %3168 = vmatpush1.bf16.msra.mxu0 %v3145
        %3169 = vmatprep.subr.bf16.mxu0 0
        %3170 = vmatpush1.bf16.msra.mxu0 %v3146
        %3171 = vmatprep.subr.bf16.mxu0 0
        %3172 = vmatpush1.bf16.msra.mxu0 0
        %3173 = vmatprep.subr.bf16.mxu0 0
        %3174 = vmatpush1.bf16.msra.mxu0 0
        %3175 = vmatprep.subr.bf16.mxu0 0
        %3176 = vmatpush1.bf16.msra.mxu0 0
        %3177 = vmatprep.subr.bf16.mxu0 0
        %3178 = vmatpush1.bf16.msra.mxu0 0
        %3179 = vmatprep.subr.bf16.mxu0 0
        %3180 = vmatpush1.bf16.msra.mxu0 0
        %3181 = vmatprep.subr.bf16.mxu0 0
        %3182 = vmatpush1.bf16.msra.mxu0 0
        %3183 = vmatprep.subr.bf16.mxu0 0
        %3184 = vmatpush1.bf16.msra.mxu0 0
        %3185 = vmatprep.subr.bf16.mxu0 0
        %3186 = vmatpush1.bf16.msra.mxu0 0
        %3187 = vmatprep.mubr.bf16.mxu0 0
        %3188 = vmatmul.mubr.bf16.gmra.mrb[0].mxu0 %v3092
        %v3189 = vpop.f32.mrb[0].mxu0
        %v3190 = vadd.f32 0.0, %v3189
        %v3191 = vpop.f32.mrb[0].mxu0
        %v3192 = vpop.f32.mrb[0].mxu0
        %v3193 = vadd.f32 0.0, %v3192
        %v3194 = vpop.f32.mrb[0].mxu0
        %3195 = vmatprep.mubr.bf16.mxu0 0
        %3196 = vmatmul.mubr.bf16.gmra.mrb[0].mxu0 %v3100
        %v3197 = vpop.f32.mrb[0].mxu0
        %v3198 = vadd.f32 0.0, %v3197
        %v3199 = vpop.f32.mrb[0].mxu0
        %v3200 = vpop.f32.mrb[0].mxu0
        %v3201 = vadd.f32 0.0, %v3200
        %v3202 = vpop.f32.mrb[0].mxu0
        %3203 = vmatprep.mubr.bf16.mxu0 0
        %3204 = vmatmul.mubr.bf16.gmra.mrb[0].mxu0 %v3103
        %v3205 = vpop.f32.mrb[0].mxu0
        %v3206 = vadd.f32 0.0, %v3205
        %v3207 = vpop.f32.mrb[0].mxu0
        %v3208 = vpop.f32.mrb[0].mxu0
        %v3209 = vadd.f32 0.0, %v3208
        %v3210 = vpop.f32.mrb[0].mxu0
        %3211 = vdwg.mxu0
        %v3228 = vunpack.c.l.b16 %v3048
        %v3229 = vunpack.c.l.b16 %v3049
        %v3230 = vunpack.c.l.b16 %v3050
        %v3231 = vunpack.c.l.b16 %v3051
        %v3232 = vunpack.c.l.b16 %v3052
        %v3233 = vunpack.c.l.b16 %v3053
        %v3234 = vunpack.c.l.b16 %v3054
        %v3235 = vunpack.c.l.b16 %v3055
        %v3236 = vunpack.c.l.b16 %v3056
        %v3237 = vunpack.c.l.b16 %v3057
        %v3238 = vunpack.c.l.b16 %v3058
        %v3239 = vunpack.c.l.b16 %v3059
        %v3240 = vunpack.c.l.b16 %v3060
        %v3241 = vunpack.c.l.b16 %v3061
        %v3242 = vunpack.c.l.b16 %v3062
        %v3243 = vunpack.c.l.b16 %v3063
        %v3244 = vpack.c.b16 %v3229, %v3228
        %v3245 = vpack.c.b16 %v3231, %v3230
        %v3246 = vpack.c.b16 %v3233, %v3232
        %v3247 = vpack.c.b16 %v3235, %v3234
        %v3248 = vpack.c.b16 %v3237, %v3236
        %v3249 = vpack.c.b16 %v3239, %v3238
        %v3250 = vpack.c.b16 %v3241, %v3240
        %v3251 = vpack.c.b16 %v3243, %v3242
        %3260 = vmatprep.subr.bf16.mxu0 0
        %3261 = vmatpush1.bf16.msra.mxu0 %v3244
        %3262 = vmatprep.subr.bf16.mxu0 0
        %3263 = vmatpush1.bf16.msra.mxu0 %v3245
        %3264 = vmatprep.subr.bf16.mxu0 0
        %3265 = vmatpush1.bf16.msra.mxu0 %v3246
        %3266 = vmatprep.subr.bf16.mxu0 0
        %3267 = vmatpush1.bf16.msra.mxu0 %v3247
        %3268 = vmatprep.subr.bf16.mxu0 0
        %3269 = vmatpush1.bf16.msra.mxu0 %v3248
        %3270 = vmatprep.subr.bf16.mxu0 0
        %3271 = vmatpush1.bf16.msra.mxu0 %v3249
        %3272 = vmatprep.subr.bf16.mxu0 0
        %3273 = vmatpush1.bf16.msra.mxu0 %v3250
        %3274 = vmatprep.subr.bf16.mxu0 0
        %3275 = vmatpush1.bf16.msra.mxu0 %v3251
        %3276 = vmatprep.subr.bf16.mxu0 0
        %3277 = vmatpush1.bf16.msra.mxu0 0
        %3278 = vmatprep.subr.bf16.mxu0 0
        %3279 = vmatpush1.bf16.msra.mxu0 0
        %3280 = vmatprep.subr.bf16.mxu0 0
        %3281 = vmatpush1.bf16.msra.mxu0 0
        %3282 = vmatprep.subr.bf16.mxu0 0
        %3283 = vmatpush1.bf16.msra.mxu0 0
        %3284 = vmatprep.subr.bf16.mxu0 0
        %3285 = vmatpush1.bf16.msra.mxu0 0
        %3286 = vmatprep.subr.bf16.mxu0 0
        %3287 = vmatpush1.bf16.msra.mxu0 0
        %3288 = vmatprep.subr.bf16.mxu0 0
        %3289 = vmatpush1.bf16.msra.mxu0 0
        %3290 = vmatprep.subr.bf16.mxu0 0
        %3291 = vmatpush1.bf16.msra.mxu0 0
        %3292 = vmatprep.mubr.bf16.mxu0 0
        %3293 = vmatmul.mubr.bf16.gmra.mrb[0].mxu0 %v3044
        %v3294 = vpop.f32.mrb[0].mxu0
        %v3295 = vadd.f32 %v3190, %v3294
        %v3296 = vpop.f32.mrb[0].mxu0
        %v3297 = vpop.f32.mrb[0].mxu0
        %v3298 = vadd.f32 %v3193, %v3297
        %v3299 = vpop.f32.mrb[0].mxu0
        %3300 = vmatprep.mubr.bf16.mxu0 0
        %3301 = vmatmul.mubr.bf16.gmra.mrb[0].mxu0 %v3045
        %v3302 = vpop.f32.mrb[0].mxu0
        %v3303 = vadd.f32 %v3198, %v3302
        %v3304 = vpop.f32.mrb[0].mxu0
        %v3305 = vpop.f32.mrb[0].mxu0
        %v3306 = vadd.f32 %v3201, %v3305
        %v3307 = vpop.f32.mrb[0].mxu0
        %3308 = vmatprep.mubr.bf16.mxu0 0
        %3309 = vmatmul.mubr.bf16.gmra.mrb[0].mxu0 %v3046
        %v3310 = vpop.f32.mrb[0].mxu0
        %v3311 = vadd.f32 %v3206, %v3310
        %v3312 = vpop.f32.mrb[0].mxu0
        %v3313 = vpop.f32.mrb[0].mxu0
        %v3314 = vadd.f32 %v3209, %v3313
        %v3315 = vpop.f32.mrb[0].mxu0
        %3316 = vdwg.mxu0
        %s3317 = scalar_lea.vmem %s7, 128
        %v3318 = vld [vmem:[%s3317] sm:$0xf]
        %v3319 = vld [vmem:[%s3317 + $0x4] sm:$0xf]
        %v3320 = vld [vmem:[%s3317 + $0x8] sm:$0xf]
        %v3321 = vld [vmem:[%s3317 + $0xc] sm:$0xf]
        %v3322 = vld [vmem:[%s3317 + $0x10] sm:$0xf]
        %v3323 = vld [vmem:[%s3317 + $0x14] sm:$0xf]
        %v3324 = vld [vmem:[%s3317 + $0x18] sm:$0xf]
        %v3325 = vld [vmem:[%s3317 + $0x1c] sm:$0xf]
        %v3326 = vld [vmem:[%s3317 + $0x20] sm:$0xf]
        %v3327 = vld [vmem:[%s3317 + $0x24] sm:$0xf]
        %v3328 = vld [vmem:[%s3317 + $0x28] sm:$0xf]
        %v3329 = vld [vmem:[%s3317 + $0x2c] sm:$0xf]
        %v3330 = vld [vmem:[%s3317 + $0x30] sm:$0xf]
        %v3331 = vld [vmem:[%s3317 + $0x34] sm:$0xf]
        %v3332 = vld [vmem:[%s3317 + $0x38] sm:$0xf]
        %v3333 = vld [vmem:[%s3317 + $0x3c] sm:$0xf]
        %v3337 = vrot.slane %v3044, 1
        %v3338 = vrot.slane %v3045, 1
        %v3339 = vsel %vm1361, %v3337, %v3338
        %v3340 = vrot.slane %v3046, 1
        %v3341 = vsel %vm1361, %v3338, %v3340
        %v3361 = vunpack.c.l.b16 %v3318
        %v3362 = vunpack.c.l.b16 %v3319
        %v3363 = vunpack.c.l.b16 %v3320
        %v3364 = vunpack.c.l.b16 %v3321
        %v3365 = vunpack.c.l.b16 %v3322
        %v3366 = vunpack.c.l.b16 %v3323
        %v3367 = vunpack.c.l.b16 %v3324
        %v3368 = vunpack.c.l.b16 %v3325
        %v3369 = vunpack.c.l.b16 %v3326
        %v3370 = vunpack.c.l.b16 %v3327
        %v3371 = vunpack.c.l.b16 %v3328
        %v3372 = vunpack.c.l.b16 %v3329
        %v3373 = vunpack.c.l.b16 %v3330
        %v3374 = vunpack.c.l.b16 %v3331
        %v3375 = vunpack.c.l.b16 %v3332
        %v3376 = vunpack.c.l.b16 %v3333
        %v3377 = vpack.c.b16 %v3362, %v3361
        %v3378 = vpack.c.b16 %v3364, %v3363
        %v3379 = vpack.c.b16 %v3366, %v3365
        %v3380 = vpack.c.b16 %v3368, %v3367
        %v3381 = vpack.c.b16 %v3370, %v3369
        %v3382 = vpack.c.b16 %v3372, %v3371
        %v3383 = vpack.c.b16 %v3374, %v3373
        %v3384 = vpack.c.b16 %v3376, %v3375
        %3393 = vmatprep.subr.bf16.mxu0 0
        %3394 = vmatpush1.bf16.msra.mxu0 %v3377
        %3395 = vmatprep.subr.bf16.mxu0 0
        %3396 = vmatpush1.bf16.msra.mxu0 %v3378
        %3397 = vmatprep.subr.bf16.mxu0 0
        %3398 = vmatpush1.bf16.msra.mxu0 %v3379
        %3399 = vmatprep.subr.bf16.mxu0 0
        %3400 = vmatpush1.bf16.msra.mxu0 %v3380
        %3401 = vmatprep.subr.bf16.mxu0 0
        %3402 = vmatpush1.bf16.msra.mxu0 %v3381
        %3403 = vmatprep.subr.bf16.mxu0 0
        %3404 = vmatpush1.bf16.msra.mxu0 %v3382
        %3405 = vmatprep.subr.bf16.mxu0 0
        %3406 = vmatpush1.bf16.msra.mxu0 %v3383
        %3407 = vmatprep.subr.bf16.mxu0 0
        %3408 = vmatpush1.bf16.msra.mxu0 %v3384
        %3409 = vmatprep.subr.bf16.mxu0 0
        %3410 = vmatpush1.bf16.msra.mxu0 0
        %3411 = vmatprep.subr.bf16.mxu0 0
        %3412 = vmatpush1.bf16.msra.mxu0 0
        %3413 = vmatprep.subr.bf16.mxu0 0
        %3414 = vmatpush1.bf16.msra.mxu0 0
        %3415 = vmatprep.subr.bf16.mxu0 0
        %3416 = vmatpush1.bf16.msra.mxu0 0
        %3417 = vmatprep.subr.bf16.mxu0 0
        %3418 = vmatpush1.bf16.msra.mxu0 0
        %3419 = vmatprep.subr.bf16.mxu0 0
        %3420 = vmatpush1.bf16.msra.mxu0 0
        %3421 = vmatprep.subr.bf16.mxu0 0
        %3422 = vmatpush1.bf16.msra.mxu0 0
        %3423 = vmatprep.subr.bf16.mxu0 0
        %3424 = vmatpush1.bf16.msra.mxu0 0
        %3425 = vmatprep.mubr.bf16.mxu0 0
        %3426 = vmatmul.mubr.bf16.gmra.mrb[0].mxu0 %v3339
        %v3427 = vpop.f32.mrb[0].mxu0
        %v3428 = vadd.f32 0.0, %v3427
        %v3429 = vpop.f32.mrb[0].mxu0
        %v3430 = vpop.f32.mrb[0].mxu0
        %v3431 = vadd.f32 0.0, %v3430
        %v3432 = vpop.f32.mrb[0].mxu0
        %3433 = vmatprep.mubr.bf16.mxu0 0
        %3434 = vmatmul.mubr.bf16.gmra.mrb[0].mxu0 %v3341
        %v3435 = vpop.f32.mrb[0].mxu0
        %v3436 = vadd.f32 0.0, %v3435
        %v3437 = vpop.f32.mrb[0].mxu0
        %v3438 = vpop.f32.mrb[0].mxu0
        %v3439 = vadd.f32 0.0, %v3438
        %v3440 = vpop.f32.mrb[0].mxu0
        %3441 = vmatprep.mubr.bf16.mxu0 0
        %3442 = vmatmul.mubr.bf16.gmra.mrb[0].mxu0 %v3340
        %v3443 = vpop.f32.mrb[0].mxu0
        %v3444 = vadd.f32 0.0, %v3443
        %v3445 = vpop.f32.mrb[0].mxu0
        %v3446 = vpop.f32.mrb[0].mxu0
        %v3447 = vadd.f32 0.0, %v3446
        %v3448 = vpop.f32.mrb[0].mxu0
        %3449 = vdwg.mxu0
        %v3450 = vadd.f32 %v3295, %v3428
        %v3451 = vadd.f32 %v3298, %v3431
        %v3452 = vadd.f32 %v3303, %v3436
        %v3453 = vadd.f32 %v3306, %v3439
        %v3454 = vadd.f32 %v3311, %v3444
        %v3455 = vadd.f32 %v3314, %v3447
        %s3456 = scalar_lea.vmem %s7, 192
        %v3457 = vld [vmem:[%s3456] sm:$0xf]
        %v3458 = vld [vmem:[%s3456 + $0x4] sm:$0xf]
        %v3459 = vld [vmem:[%s3456 + $0x8] sm:$0xf]
        %v3460 = vld [vmem:[%s3456 + $0xc] sm:$0xf]
        %v3461 = vld [vmem:[%s3456 + $0x10] sm:$0xf]
        %v3462 = vld [vmem:[%s3456 + $0x14] sm:$0xf]
        %v3463 = vld [vmem:[%s3456 + $0x18] sm:$0xf]
        %v3464 = vld [vmem:[%s3456 + $0x1c] sm:$0xf]
        %v3465 = vld [vmem:[%s3456 + $0x20] sm:$0xf]
        %v3466 = vld [vmem:[%s3456 + $0x24] sm:$0xf]
        %v3467 = vld [vmem:[%s3456 + $0x28] sm:$0xf]
        %v3468 = vld [vmem:[%s3456 + $0x2c] sm:$0xf]
        %v3469 = vld [vmem:[%s3456 + $0x30] sm:$0xf]
        %v3470 = vld [vmem:[%s3456 + $0x34] sm:$0xf]
        %v3471 = vld [vmem:[%s3456 + $0x38] sm:$0xf]
        %v3472 = vld [vmem:[%s3456 + $0x3c] sm:$0xf]
        %vm3473 = vsmask.f32 3328
        %v3474 = vrot.slane %v3082, 4
        %v3475 = vrot.slane %v3084, 5
        %v3476 = vor.u32 %v3474, %v3475
        %v3477 = vrot.slane %v3093, 4
        %v3478 = vrot.slane %v3089, 5
        %v3479 = vor.u32 %v3477, %v3478
        %v3480 = vsel %vm3473, %v3476, %v3479
        %v3481 = vrot.slane %v3101, 4
        %v3482 = vrot.slane %v3097, 5
        %v3483 = vor.u32 %v3481, %v3482
        %v3484 = vsel %vm3473, %v3479, %v3483
        %v3486 = vshrl.u32 %v3047, 16
        %v3488 = vrot.slane %v3486, 4
        %v3489 = vshll.u32 %v3047, 16
        %v3491 = vrot.slane %v3489, 5
        %v3492 = vor.u32 %v3488, %v3491
        %v3493 = vsel %vm3473, %v3483, %v3492
        %v3513 = vunpack.c.l.b16 %v3457
        %v3514 = vunpack.c.l.b16 %v3458
        %v3515 = vunpack.c.l.b16 %v3459
        %v3516 = vunpack.c.l.b16 %v3460
        %v3517 = vunpack.c.l.b16 %v3461
        %v3518 = vunpack.c.l.b16 %v3462
        %v3519 = vunpack.c.l.b16 %v3463
        %v3520 = vunpack.c.l.b16 %v3464
        %v3521 = vunpack.c.l.b16 %v3465
        %v3522 = vunpack.c.l.b16 %v3466
        %v3523 = vunpack.c.l.b16 %v3467
        %v3524 = vunpack.c.l.b16 %v3468
        %v3525 = vunpack.c.l.b16 %v3469
        %v3526 = vunpack.c.l.b16 %v3470
        %v3527 = vunpack.c.l.b16 %v3471
        %v3528 = vunpack.c.l.b16 %v3472
        %v3529 = vpack.c.b16 %v3514, %v3513
        %v3530 = vpack.c.b16 %v3516, %v3515
        %v3531 = vpack.c.b16 %v3518, %v3517
        %v3532 = vpack.c.b16 %v3520, %v3519
        %v3533 = vpack.c.b16 %v3522, %v3521
        %v3534 = vpack.c.b16 %v3524, %v3523
        %v3535 = vpack.c.b16 %v3526, %v3525
        %v3536 = vpack.c.b16 %v3528, %v3527
        %3545 = vmatprep.subr.bf16.mxu0 0
        %3546 = vmatpush1.bf16.msra.mxu0 %v3529
        %3547 = vmatprep.subr.bf16.mxu0 0
        %3548 = vmatpush1.bf16.msra.mxu0 %v3530
        %3549 = vmatprep.subr.bf16.mxu0 0
        %3550 = vmatpush1.bf16.msra.mxu0 %v3531
        %3551 = vmatprep.subr.bf16.mxu0 0
        %3552 = vmatpush1.bf16.msra.mxu0 %v3532
        %3553 = vmatprep.subr.bf16.mxu0 0
        %3554 = vmatpush1.bf16.msra.mxu0 %v3533
        %3555 = vmatprep.subr.bf16.mxu0 0
        %3556 = vmatpush1.bf16.msra.mxu0 %v3534
        %3557 = vmatprep.subr.bf16.mxu0 0
        %3558 = vmatpush1.bf16.msra.mxu0 %v3535
        %3559 = vmatprep.subr.bf16.mxu0 0
        %3560 = vmatpush1.bf16.msra.mxu0 %v3536
        %3561 = vmatprep.subr.bf16.mxu0 0
        %3562 = vmatpush1.bf16.msra.mxu0 0
        %3563 = vmatprep.subr.bf16.mxu0 0
        %3564 = vmatpush1.bf16.msra.mxu0 0
        %3565 = vmatprep.subr.bf16.mxu0 0
        %3566 = vmatpush1.bf16.msra.mxu0 0
        %3567 = vmatprep.subr.bf16.mxu0 0
        %3568 = vmatpush1.bf16.msra.mxu0 0
        %3569 = vmatprep.subr.bf16.mxu0 0
        %3570 = vmatpush1.bf16.msra.mxu0 0
        %3571 = vmatprep.subr.bf16.mxu0 0
        %3572 = vmatpush1.bf16.msra.mxu0 0
        %3573 = vmatprep.subr.bf16.mxu0 0
        %3574 = vmatpush1.bf16.msra.mxu0 0
        %3575 = vmatprep.subr.bf16.mxu0 0
        %3576 = vmatpush1.bf16.msra.mxu0 0
        %3577 = vmatprep.mubr.bf16.mxu0 0
        %3578 = vmatmul.mubr.bf16.gmra.mrb[0].mxu0 %v3480
        %v3579 = vpop.f32.mrb[0].mxu0
        %v3580 = vadd.f32 0.0, %v3579
        %v3581 = vpop.f32.mrb[0].mxu0
        %v3582 = vpop.f32.mrb[0].mxu0
        %v3583 = vadd.f32 0.0, %v3582
        %v3584 = vpop.f32.mrb[0].mxu0
        %3585 = vmatprep.mubr.bf16.mxu0 0
        %3586 = vmatmul.mubr.bf16.gmra.mrb[0].mxu0 %v3484
        %v3587 = vpop.f32.mrb[0].mxu0
        %v3588 = vadd.f32 0.0, %v3587
        %v3589 = vpop.f32.mrb[0].mxu0
        %v3590 = vpop.f32.mrb[0].mxu0
        %v3591 = vadd.f32 0.0, %v3590
        %v3592 = vpop.f32.mrb[0].mxu0
        %3593 = vmatprep.mubr.bf16.mxu0 0
        %3594 = vmatmul.mubr.bf16.gmra.mrb[0].mxu0 %v3493
        %v3595 = vpop.f32.mrb[0].mxu0
        %v3596 = vadd.f32 0.0, %v3595
        %v3597 = vpop.f32.mrb[0].mxu0
        %v3598 = vpop.f32.mrb[0].mxu0
        %v3599 = vadd.f32 0.0, %v3598
        %v3600 = vpop.f32.mrb[0].mxu0
        %3601 = vdwg.mxu0
        %v3602 = vadd.f32 %v3450, %v3580
        %v3603 = vadd.f32 %v3451, %v3583
        %v3604 = vadd.f32 %v3452, %v3588
        %v3605 = vadd.f32 %v3453, %v3591
        %v3606 = vadd.f32 %v3454, %v3596
        %v3607 = vadd.f32 %v3455, %v3599
        %s3608 = scalar_lea.vmem %s7, 256
        %v3609 = vld [vmem:[%s3608] sm:$0xf]
        %v3610 = vld [vmem:[%s3608 + $0x4] sm:$0xf]
        %v3611 = vld [vmem:[%s3608 + $0x8] sm:$0xf]
        %v3612 = vld [vmem:[%s3608 + $0xc] sm:$0xf]
        %v3613 = vld [vmem:[%s3608 + $0x10] sm:$0xf]
        %v3614 = vld [vmem:[%s3608 + $0x14] sm:$0xf]
        %v3615 = vld [vmem:[%s3608 + $0x18] sm:$0xf]
        %v3616 = vld [vmem:[%s3608 + $0x1c] sm:$0xf]
        %v3617 = vld [vmem:[%s3608 + $0x20] sm:$0xf]
        %v3618 = vld [vmem:[%s3608 + $0x24] sm:$0xf]
        %v3619 = vld [vmem:[%s3608 + $0x28] sm:$0xf]
        %v3620 = vld [vmem:[%s3608 + $0x2c] sm:$0xf]
        %v3621 = vld [vmem:[%s3608 + $0x30] sm:$0xf]
        %v3622 = vld [vmem:[%s3608 + $0x34] sm:$0xf]
        %v3623 = vld [vmem:[%s3608 + $0x38] sm:$0xf]
        %v3624 = vld [vmem:[%s3608 + $0x3c] sm:$0xf]
        %vm3626 = vcmask 1042432
        %v3627 = vrot.slane %v3044, 5
        %v3628 = vrot.slane %v3045, 5
        %v3629 = vsel %vm3626, %v3627, %v3628
        %v3630 = vrot.slane %v3046, 5
        %v3631 = vsel %vm3626, %v3628, %v3630
        %v3632 = vrot.slane %v3047, 5
        %v3633 = vsel %vm3626, %v3630, %v3632
        %v3653 = vunpack.c.l.b16 %v3609
        %v3654 = vunpack.c.l.b16 %v3610
        %v3655 = vunpack.c.l.b16 %v3611
        %v3656 = vunpack.c.l.b16 %v3612
        %v3657 = vunpack.c.l.b16 %v3613
        %v3658 = vunpack.c.l.b16 %v3614
        %v3659 = vunpack.c.l.b16 %v3615
        %v3660 = vunpack.c.l.b16 %v3616
        %v3661 = vunpack.c.l.b16 %v3617
        %v3662 = vunpack.c.l.b16 %v3618
        %v3663 = vunpack.c.l.b16 %v3619
        %v3664 = vunpack.c.l.b16 %v3620
        %v3665 = vunpack.c.l.b16 %v3621
        %v3666 = vunpack.c.l.b16 %v3622
        %v3667 = vunpack.c.l.b16 %v3623
        %v3668 = vunpack.c.l.b16 %v3624
        %v3669 = vpack.c.b16 %v3654, %v3653
        %v3670 = vpack.c.b16 %v3656, %v3655
        %v3671 = vpack.c.b16 %v3658, %v3657
        %v3672 = vpack.c.b16 %v3660, %v3659
        %v3673 = vpack.c.b16 %v3662, %v3661
        %v3674 = vpack.c.b16 %v3664, %v3663
        %v3675 = vpack.c.b16 %v3666, %v3665
        %v3676 = vpack.c.b16 %v3668, %v3667
        %3685 = vmatprep.subr.bf16.mxu0 0
        %3686 = vmatpush1.bf16.msra.mxu0 %v3669
        %3687 = vmatprep.subr.bf16.mxu0 0
        %3688 = vmatpush1.bf16.msra.mxu0 %v3670
        %3689 = vmatprep.subr.bf16.mxu0 0
        %3690 = vmatpush1.bf16.msra.mxu0 %v3671
        %3691 = vmatprep.subr.bf16.mxu0 0
        %3692 = vmatpush1.bf16.msra.mxu0 %v3672
        %3693 = vmatprep.subr.bf16.mxu0 0
        %3694 = vmatpush1.bf16.msra.mxu0 %v3673
        %3695 = vmatprep.subr.bf16.mxu0 0
        %3696 = vmatpush1.bf16.msra.mxu0 %v3674
        %3697 = vmatprep.subr.bf16.mxu0 0
        %3698 = vmatpush1.bf16.msra.mxu0 %v3675
        %3699 = vmatprep.subr.bf16.mxu0 0
        %3700 = vmatpush1.bf16.msra.mxu0 %v3676
        %3701 = vmatprep.subr.bf16.mxu0 0
        %3702 = vmatpush1.bf16.msra.mxu0 0
        %3703 = vmatprep.subr.bf16.mxu0 0
        %3704 = vmatpush1.bf16.msra.mxu0 0
        %3705 = vmatprep.subr.bf16.mxu0 0
        %3706 = vmatpush1.bf16.msra.mxu0 0
        %3707 = vmatprep.subr.bf16.mxu0 0
        %3708 = vmatpush1.bf16.msra.mxu0 0
        %3709 = vmatprep.subr.bf16.mxu0 0
        %3710 = vmatpush1.bf16.msra.mxu0 0
        %3711 = vmatprep.subr.bf16.mxu0 0
        %3712 = vmatpush1.bf16.msra.mxu0 0
        %3713 = vmatprep.subr.bf16.mxu0 0
        %3714 = vmatpush1.bf16.msra.mxu0 0
        %3715 = vmatprep.subr.bf16.mxu0 0
        %3716 = vmatpush1.bf16.msra.mxu0 0
        %3717 = vmatprep.mubr.bf16.mxu0 0
        %3718 = vmatmul.mubr.bf16.gmra.mrb[0].mxu0 %v3629
        %v3719 = vpop.f32.mrb[0].mxu0
        %v3720 = vadd.f32 0.0, %v3719
        %v3721 = vpop.f32.mrb[0].mxu0
        %v3722 = vpop.f32.mrb[0].mxu0
        %v3723 = vadd.f32 0.0, %v3722
        %v3724 = vpop.f32.mrb[0].mxu0
        %3725 = vmatprep.mubr.bf16.mxu0 0
        %3726 = vmatmul.mubr.bf16.gmra.mrb[0].mxu0 %v3631
        %v3727 = vpop.f32.mrb[0].mxu0
        %v3728 = vadd.f32 0.0, %v3727
        %v3729 = vpop.f32.mrb[0].mxu0
        %v3730 = vpop.f32.mrb[0].mxu0
        %v3731 = vadd.f32 0.0, %v3730
        %v3732 = vpop.f32.mrb[0].mxu0
        %3733 = vmatprep.mubr.bf16.mxu0 0
        %3734 = vmatmul.mubr.bf16.gmra.mrb[0].mxu0 %v3633
        %v3735 = vpop.f32.mrb[0].mxu0
        %v3736 = vadd.f32 0.0, %v3735
        %v3737 = vpop.f32.mrb[0].mxu0
        %v3738 = vpop.f32.mrb[0].mxu0
        %v3739 = vadd.f32 0.0, %v3738
        %v3740 = vpop.f32.mrb[0].mxu0
        %3741 = vdwg.mxu0
        %v3742 = vadd.f32 %v3602, %v3720
        %v3743 = vadd.f32 %v3603, %v3723
        %v3744 = vadd.f32 %v3604, %v3728
        %v3745 = vadd.f32 %v3605, %v3731
        %v3746 = vadd.f32 %v3606, %v3736
        %v3747 = vadd.f32 %v3607, %v3739
        %s3748 = scalar_lea.vmem %s7, 320
        %v3749 = vld [vmem:[%s3748] sm:$0xf]
        %v3750 = vld [vmem:[%s3748 + $0x4] sm:$0xf]
        %v3751 = vld [vmem:[%s3748 + $0x8] sm:$0xf]
        %v3752 = vld [vmem:[%s3748 + $0xc] sm:$0xf]
        %v3753 = vld [vmem:[%s3748 + $0x10] sm:$0xf]
        %v3754 = vld [vmem:[%s3748 + $0x14] sm:$0xf]
        %v3755 = vld [vmem:[%s3748 + $0x18] sm:$0xf]
        %v3756 = vld [vmem:[%s3748 + $0x1c] sm:$0xf]
        %v3757 = vld [vmem:[%s3748 + $0x20] sm:$0xf]
        %v3758 = vld [vmem:[%s3748 + $0x24] sm:$0xf]
        %v3759 = vld [vmem:[%s3748 + $0x28] sm:$0xf]
        %v3760 = vld [vmem:[%s3748 + $0x2c] sm:$0xf]
        %v3761 = vld [vmem:[%s3748 + $0x30] sm:$0xf]
        %v3762 = vld [vmem:[%s3748 + $0x34] sm:$0xf]
        %v3763 = vld [vmem:[%s3748 + $0x38] sm:$0xf]
        %v3764 = vld [vmem:[%s3748 + $0x3c] sm:$0xf]
        %vm3765 = vsmask.f32 2304
        %v3766 = vrot.slane %v3082, 5
        %v3767 = vrot.slane %v3084, 6
        %v3768 = vor.u32 %v3766, %v3767
        %v3769 = vrot.slane %v3093, 5
        %v3770 = vrot.slane %v3089, 6
        %v3771 = vor.u32 %v3769, %v3770
        %v3772 = vsel %vm3765, %v3768, %v3771
        %v3773 = vrot.slane %v3101, 5
        %v3774 = vrot.slane %v3097, 6
        %v3775 = vor.u32 %v3773, %v3774
        %v3776 = vsel %vm3765, %v3771, %v3775
        %v3777 = vrot.slane %v3486, 5
        %v3778 = vrot.slane %v3489, 6
        %v3779 = vor.u32 %v3777, %v3778
        %v3780 = vsel %vm3765, %v3775, %v3779
        %v3800 = vunpack.c.l.b16 %v3749
        %v3801 = vunpack.c.l.b16 %v3750
        %v3802 = vunpack.c.l.b16 %v3751
        %v3803 = vunpack.c.l.b16 %v3752
        %v3804 = vunpack.c.l.b16 %v3753
        %v3805 = vunpack.c.l.b16 %v3754
        %v3806 = vunpack.c.l.b16 %v3755
        %v3807 = vunpack.c.l.b16 %v3756
        %v3808 = vunpack.c.l.b16 %v3757
        %v3809 = vunpack.c.l.b16 %v3758
        %v3810 = vunpack.c.l.b16 %v3759
        %v3811 = vunpack.c.l.b16 %v3760
        %v3812 = vunpack.c.l.b16 %v3761
        %v3813 = vunpack.c.l.b16 %v3762
        %v3814 = vunpack.c.l.b16 %v3763
        %v3815 = vunpack.c.l.b16 %v3764
        %v3816 = vpack.c.b16 %v3801, %v3800
        %v3817 = vpack.c.b16 %v3803, %v3802
        %v3818 = vpack.c.b16 %v3805, %v3804
        %v3819 = vpack.c.b16 %v3807, %v3806
        %v3820 = vpack.c.b16 %v3809, %v3808
        %v3821 = vpack.c.b16 %v3811, %v3810
        %v3822 = vpack.c.b16 %v3813, %v3812
        %v3823 = vpack.c.b16 %v3815, %v3814
        %3832 = vmatprep.subr.bf16.mxu0 0
        %3833 = vmatpush1.bf16.msra.mxu0 %v3816
        %3834 = vmatprep.subr.bf16.mxu0 0
        %3835 = vmatpush1.bf16.msra.mxu0 %v3817
        %3836 = vmatprep.subr.bf16.mxu0 0
        %3837 = vmatpush1.bf16.msra.mxu0 %v3818
        %3838 = vmatprep.subr.bf16.mxu0 0
        %3839 = vmatpush1.bf16.msra.mxu0 %v3819
        %3840 = vmatprep.subr.bf16.mxu0 0
        %3841 = vmatpush1.bf16.msra.mxu0 %v3820
        %3842 = vmatprep.subr.bf16.mxu0 0
        %3843 = vmatpush1.bf16.msra.mxu0 %v3821
        %3844 = vmatprep.subr.bf16.mxu0 0
        %3845 = vmatpush1.bf16.msra.mxu0 %v3822
        %3846 = vmatprep.subr.bf16.mxu0 0
        %3847 = vmatpush1.bf16.msra.mxu0 %v3823
        %3848 = vmatprep.subr.bf16.mxu0 0
        %3849 = vmatpush1.bf16.msra.mxu0 0
        %3850 = vmatprep.subr.bf16.mxu0 0
        %3851 = vmatpush1.bf16.msra.mxu0 0
        %3852 = vmatprep.subr.bf16.mxu0 0
        %3853 = vmatpush1.bf16.msra.mxu0 0
        %3854 = vmatprep.subr.bf16.mxu0 0
        %3855 = vmatpush1.bf16.msra.mxu0 0
        %3856 = vmatprep.subr.bf16.mxu0 0
        %3857 = vmatpush1.bf16.msra.mxu0 0
        %3858 = vmatprep.subr.bf16.mxu0 0
        %3859 = vmatpush1.bf16.msra.mxu0 0
        %3860 = vmatprep.subr.bf16.mxu0 0
        %3861 = vmatpush1.bf16.msra.mxu0 0
        %3862 = vmatprep.subr.bf16.mxu0 0
        %3863 = vmatpush1.bf16.msra.mxu0 0
        %3864 = vmatprep.mubr.bf16.mxu0 0
        %3865 = vmatmul.mubr.bf16.gmra.mrb[0].mxu0 %v3772
        %v3866 = vpop.f32.mrb[0].mxu0
        %v3867 = vadd.f32 0.0, %v3866
        %v3868 = vpop.f32.mrb[0].mxu0
        %v3869 = vpop.f32.mrb[0].mxu0
        %v3870 = vadd.f32 0.0, %v3869
        %v3871 = vpop.f32.mrb[0].mxu0
        %3872 = vmatprep.mubr.bf16.mxu0 0
        %3873 = vmatmul.mubr.bf16.gmra.mrb[0].mxu0 %v3776
        %v3874 = vpop.f32.mrb[0].mxu0
        %v3875 = vadd.f32 0.0, %v3874
        %v3876 = vpop.f32.mrb[0].mxu0
        %v3877 = vpop.f32.mrb[0].mxu0
        %v3878 = vadd.f32 0.0, %v3877
        %v3879 = vpop.f32.mrb[0].mxu0
        %3880 = vmatprep.mubr.bf16.mxu0 0
        %3881 = vmatmul.mubr.bf16.gmra.mrb[0].mxu0 %v3780
        %v3882 = vpop.f32.mrb[0].mxu0
        %v3883 = vadd.f32 0.0, %v3882
        %v3884 = vpop.f32.mrb[0].mxu0
        %v3885 = vpop.f32.mrb[0].mxu0
        %v3886 = vadd.f32 0.0, %v3885
        %v3887 = vpop.f32.mrb[0].mxu0
        %3888 = vdwg.mxu0
        %v3889 = vadd.f32 %v3742, %v3867
        %v3890 = vadd.f32 %v3743, %v3870
        %v3891 = vadd.f32 %v3744, %v3875
        %v3892 = vadd.f32 %v3745, %v3878
        %v3893 = vadd.f32 %v3746, %v3883
        %v3894 = vadd.f32 %v3747, %v3886
        %s3895 = scalar_lea.vmem %s7, 384
        %v3896 = vld [vmem:[%s3895] sm:$0xf]
        %v3897 = vld [vmem:[%s3895 + $0x4] sm:$0xf]
        %v3898 = vld [vmem:[%s3895 + $0x8] sm:$0xf]
        %v3899 = vld [vmem:[%s3895 + $0xc] sm:$0xf]
        %v3900 = vld [vmem:[%s3895 + $0x10] sm:$0xf]
        %v3901 = vld [vmem:[%s3895 + $0x14] sm:$0xf]
        %v3902 = vld [vmem:[%s3895 + $0x18] sm:$0xf]
        %v3903 = vld [vmem:[%s3895 + $0x1c] sm:$0xf]
        %v3904 = vld [vmem:[%s3895 + $0x20] sm:$0xf]
        %v3905 = vld [vmem:[%s3895 + $0x24] sm:$0xf]
        %v3906 = vld [vmem:[%s3895 + $0x28] sm:$0xf]
        %v3907 = vld [vmem:[%s3895 + $0x2c] sm:$0xf]
        %v3908 = vld [vmem:[%s3895 + $0x30] sm:$0xf]
        %v3909 = vld [vmem:[%s3895 + $0x34] sm:$0xf]
        %v3910 = vld [vmem:[%s3895 + $0x38] sm:$0xf]
        %v3911 = vld [vmem:[%s3895 + $0x3c] sm:$0xf]
        %v3912 = vrot.slane %v3047, 1
        %v3913 = vsel %vm1361, %v3340, %v3912
        %v3932 = vunpack.c.l.b16 %v3896
        %v3933 = vunpack.c.l.b16 %v3897
        %v3934 = vunpack.c.l.b16 %v3898
        %v3935 = vunpack.c.l.b16 %v3899
        %v3936 = vunpack.c.l.b16 %v3900
        %v3937 = vunpack.c.l.b16 %v3901
        %v3938 = vunpack.c.l.b16 %v3902
        %v3939 = vunpack.c.l.b16 %v3903
        %v3940 = vunpack.c.l.b16 %v3904
        %v3941 = vunpack.c.l.b16 %v3905
        %v3942 = vunpack.c.l.b16 %v3906
        %v3943 = vunpack.c.l.b16 %v3907
        %v3944 = vunpack.c.l.b16 %v3908
        %v3945 = vunpack.c.l.b16 %v3909
        %v3946 = vunpack.c.l.b16 %v3910
        %v3947 = vunpack.c.l.b16 %v3911
        %v3948 = vpack.c.b16 %v3933, %v3932
        %v3949 = vpack.c.b16 %v3935, %v3934
        %v3950 = vpack.c.b16 %v3937, %v3936
        %v3951 = vpack.c.b16 %v3939, %v3938
        %v3952 = vpack.c.b16 %v3941, %v3940
        %v3953 = vpack.c.b16 %v3943, %v3942
        %v3954 = vpack.c.b16 %v3945, %v3944
        %v3955 = vpack.c.b16 %v3947, %v3946
        %3964 = vmatprep.subr.bf16.mxu0 0
        %3965 = vmatpush1.bf16.msra.mxu0 %v3948
        %3966 = vmatprep.subr.bf16.mxu0 0
        %3967 = vmatpush1.bf16.msra.mxu0 %v3949
        %3968 = vmatprep.subr.bf16.mxu0 0
        %3969 = vmatpush1.bf16.msra.mxu0 %v3950
        %3970 = vmatprep.subr.bf16.mxu0 0
        %3971 = vmatpush1.bf16.msra.mxu0 %v3951
        %3972 = vmatprep.subr.bf16.mxu0 0
        %3973 = vmatpush1.bf16.msra.mxu0 %v3952
        %3974 = vmatprep.subr.bf16.mxu0 0
        %3975 = vmatpush1.bf16.msra.mxu0 %v3953
        %3976 = vmatprep.subr.bf16.mxu0 0
        %3977 = vmatpush1.bf16.msra.mxu0 %v3954
        %3978 = vmatprep.subr.bf16.mxu0 0
        %3979 = vmatpush1.bf16.msra.mxu0 %v3955
        %3980 = vmatprep.subr.bf16.mxu0 0
        %3981 = vmatpush1.bf16.msra.mxu0 0
        %3982 = vmatprep.subr.bf16.mxu0 0
        %3983 = vmatpush1.bf16.msra.mxu0 0
        %3984 = vmatprep.subr.bf16.mxu0 0
        %3985 = vmatpush1.bf16.msra.mxu0 0
        %3986 = vmatprep.subr.bf16.mxu0 0
        %3987 = vmatpush1.bf16.msra.mxu0 0
        %3988 = vmatprep.subr.bf16.mxu0 0
        %3989 = vmatpush1.bf16.msra.mxu0 0
        %3990 = vmatprep.subr.bf16.mxu0 0
        %3991 = vmatpush1.bf16.msra.mxu0 0
        %3992 = vmatprep.subr.bf16.mxu0 0
        %3993 = vmatpush1.bf16.msra.mxu0 0
        %3994 = vmatprep.subr.bf16.mxu0 0
        %3995 = vmatpush1.bf16.msra.mxu0 0
        %3996 = vmatprep.mubr.bf16.mxu0 0
        %3997 = vmatmul.mubr.bf16.gmra.mrb[0].mxu0 %v3341
        %v3998 = vpop.f32.mrb[0].mxu0
        %v3999 = vadd.f32 0.0, %v3998
        %v4000 = vpop.f32.mrb[0].mxu0
        %v4001 = vpop.f32.mrb[0].mxu0
        %v4002 = vadd.f32 0.0, %v4001
        %v4003 = vpop.f32.mrb[0].mxu0
        %4004 = vmatprep.mubr.bf16.mxu0 0
        %4005 = vmatmul.mubr.bf16.gmra.mrb[0].mxu0 %v3913
        %v4006 = vpop.f32.mrb[0].mxu0
        %v4007 = vadd.f32 0.0, %v4006
        %v4008 = vpop.f32.mrb[0].mxu0
        %v4009 = vpop.f32.mrb[0].mxu0
        %v4010 = vadd.f32 0.0, %v4009
        %v4011 = vpop.f32.mrb[0].mxu0
        %4012 = vmatprep.mubr.bf16.mxu0 0
        %4013 = vmatmul.mubr.bf16.gmra.mrb[0].mxu0 %v3912
        %v4014 = vpop.f32.mrb[0].mxu0
        %v4015 = vadd.f32 0.0, %v4014
        %v4016 = vpop.f32.mrb[0].mxu0
        %v4017 = vpop.f32.mrb[0].mxu0
        %v4018 = vadd.f32 0.0, %v4017
        %v4019 = vpop.f32.mrb[0].mxu0
        %4020 = vdwg.mxu0
        %v4021 = vadd.f32 %v3889, %v3999
        %v4022 = vadd.f32 %v3890, %v4002
        %v4023 = vadd.f32 %v3891, %v4007
        %v4024 = vadd.f32 %v3892, %v4010
        %v4025 = vadd.f32 %v3893, %v4015
        %v4026 = vadd.f32 %v3894, %v4018
        %s4027 = scalar_lea.vmem %s7, 448
        %v4028 = vld [vmem:[%s4027] sm:$0xf]
        %v4029 = vld [vmem:[%s4027 + $0x4] sm:$0xf]
        %v4030 = vld [vmem:[%s4027 + $0x8] sm:$0xf]
        %v4031 = vld [vmem:[%s4027 + $0xc] sm:$0xf]
        %v4032 = vld [vmem:[%s4027 + $0x10] sm:$0xf]
        %v4033 = vld [vmem:[%s4027 + $0x14] sm:$0xf]
        %v4034 = vld [vmem:[%s4027 + $0x18] sm:$0xf]
        %v4035 = vld [vmem:[%s4027 + $0x1c] sm:$0xf]
        %v4036 = vld [vmem:[%s4027 + $0x20] sm:$0xf]
        %v4037 = vld [vmem:[%s4027 + $0x24] sm:$0xf]
        %v4038 = vld [vmem:[%s4027 + $0x28] sm:$0xf]
        %v4039 = vld [vmem:[%s4027 + $0x2c] sm:$0xf]
        %v4040 = vld [vmem:[%s4027 + $0x30] sm:$0xf]
        %v4041 = vld [vmem:[%s4027 + $0x34] sm:$0xf]
        %v4042 = vld [vmem:[%s4027 + $0x38] sm:$0xf]
        %v4043 = vld [vmem:[%s4027 + $0x3c] sm:$0xf]
        %v4044 = vrot.slane %v3093, 1
        %v4045 = vrot.slane %v3089, 2
        %v4046 = vor.u32 %v4044, %v4045
        %v4047 = vrot.slane %v3101, 1
        %v4048 = vrot.slane %v3097, 2
        %v4049 = vor.u32 %v4047, %v4048
        %v4050 = vsel %vm2500, %v4046, %v4049
        %v4051 = vrot.slane %v3486, 1
        %v4052 = vrot.slane %v3489, 2
        %v4053 = vor.u32 %v4051, %v4052
        %v4054 = vsel %vm2500, %v4049, %v4053
        %v4074 = vunpack.c.l.b16 %v4028
        %v4075 = vunpack.c.l.b16 %v4029
        %v4076 = vunpack.c.l.b16 %v4030
        %v4077 = vunpack.c.l.b16 %v4031
        %v4078 = vunpack.c.l.b16 %v4032
        %v4079 = vunpack.c.l.b16 %v4033
        %v4080 = vunpack.c.l.b16 %v4034
        %v4081 = vunpack.c.l.b16 %v4035
        %v4082 = vunpack.c.l.b16 %v4036
        %v4083 = vunpack.c.l.b16 %v4037
        %v4084 = vunpack.c.l.b16 %v4038
        %v4085 = vunpack.c.l.b16 %v4039
        %v4086 = vunpack.c.l.b16 %v4040
        %v4087 = vunpack.c.l.b16 %v4041
        %v4088 = vunpack.c.l.b16 %v4042
        %v4089 = vunpack.c.l.b16 %v4043
        %v4090 = vpack.c.b16 %v4075, %v4074
        %v4091 = vpack.c.b16 %v4077, %v4076
        %v4092 = vpack.c.b16 %v4079, %v4078
        %v4093 = vpack.c.b16 %v4081, %v4080
        %v4094 = vpack.c.b16 %v4083, %v4082
        %v4095 = vpack.c.b16 %v4085, %v4084
        %v4096 = vpack.c.b16 %v4087, %v4086
        %v4097 = vpack.c.b16 %v4089, %v4088
        %4106 = vmatprep.subr.bf16.mxu0 0
        %4107 = vmatpush1.bf16.msra.mxu0 %v4090
        %4108 = vmatprep.subr.bf16.mxu0 0
        %4109 = vmatpush1.bf16.msra.mxu0 %v4091
        %4110 = vmatprep.subr.bf16.mxu0 0
        %4111 = vmatpush1.bf16.msra.mxu0 %v4092
        %4112 = vmatprep.subr.bf16.mxu0 0
        %4113 = vmatpush1.bf16.msra.mxu0 %v4093
        %4114 = vmatprep.subr.bf16.mxu0 0
        %4115 = vmatpush1.bf16.msra.mxu0 %v4094
        %4116 = vmatprep.subr.bf16.mxu0 0
        %4117 = vmatpush1.bf16.msra.mxu0 %v4095
        %4118 = vmatprep.subr.bf16.mxu0 0
        %4119 = vmatpush1.bf16.msra.mxu0 %v4096
        %4120 = vmatprep.subr.bf16.mxu0 0
        %4121 = vmatpush1.bf16.msra.mxu0 %v4097
        %4122 = vmatprep.subr.bf16.mxu0 0
        %4123 = vmatpush1.bf16.msra.mxu0 0
        %4124 = vmatprep.subr.bf16.mxu0 0
        %4125 = vmatpush1.bf16.msra.mxu0 0
        %4126 = vmatprep.subr.bf16.mxu0 0
        %4127 = vmatpush1.bf16.msra.mxu0 0
        %4128 = vmatprep.subr.bf16.mxu0 0
        %4129 = vmatpush1.bf16.msra.mxu0 0
        %4130 = vmatprep.subr.bf16.mxu0 0
        %4131 = vmatpush1.bf16.msra.mxu0 0
        %4132 = vmatprep.subr.bf16.mxu0 0
        %4133 = vmatpush1.bf16.msra.mxu0 0
        %4134 = vmatprep.subr.bf16.mxu0 0
        %4135 = vmatpush1.bf16.msra.mxu0 0
        %4136 = vmatprep.subr.bf16.mxu0 0
        %4137 = vmatpush1.bf16.msra.mxu0 0
        %4138 = vmatprep.mubr.bf16.mxu0 0
        %4139 = vmatmul.mubr.bf16.gmra.mrb[0].mxu0 %v4050
        %v4140 = vpop.f32.mrb[0].mxu0
        %v4141 = vadd.f32 0.0, %v4140
        %v4142 = vpop.f32.mrb[0].mxu0
        %v4143 = vpop.f32.mrb[0].mxu0
        %v4144 = vadd.f32 0.0, %v4143
        %v4145 = vpop.f32.mrb[0].mxu0
        %4146 = vmatprep.mubr.bf16.mxu0 0
        %4147 = vmatmul.mubr.bf16.gmra.mrb[0].mxu0 %v4054
        %v4148 = vpop.f32.mrb[0].mxu0
        %v4149 = vadd.f32 0.0, %v4148
        %v4150 = vpop.f32.mrb[0].mxu0
        %v4151 = vpop.f32.mrb[0].mxu0
        %v4152 = vadd.f32 0.0, %v4151
        %v4153 = vpop.f32.mrb[0].mxu0
        %4154 = vmatprep.mubr.bf16.mxu0 0
        %4155 = vmatmul.mubr.bf16.gmra.mrb[0].mxu0 %v4053
        %v4156 = vpop.f32.mrb[0].mxu0
        %v4157 = vadd.f32 0.0, %v4156
        %v4158 = vpop.f32.mrb[0].mxu0
        %v4159 = vpop.f32.mrb[0].mxu0
        %v4160 = vadd.f32 0.0, %v4159
        %v4161 = vpop.f32.mrb[0].mxu0
        %4162 = vdwg.mxu0
        %v4163 = vadd.f32 %v4021, %v4141
        %v4164 = vadd.f32 %v4022, %v4144
        %v4165 = vadd.f32 %v4023, %v4149
        %v4166 = vadd.f32 %v4024, %v4152
        %v4167 = vadd.f32 %v4025, %v4157
        %v4168 = vadd.f32 %v4026, %v4160
        %s4169 = scalar_lea.vmem %s7, 512
        %v4170 = vld [vmem:[%s4169] sm:$0xf]
        %v4171 = vld [vmem:[%s4169 + $0x4] sm:$0xf]
        %v4172 = vld [vmem:[%s4169 + $0x8] sm:$0xf]
        %v4173 = vld [vmem:[%s4169 + $0xc] sm:$0xf]
        %v4174 = vld [vmem:[%s4169 + $0x10] sm:$0xf]
        %v4175 = vld [vmem:[%s4169 + $0x14] sm:$0xf]
        %v4176 = vld [vmem:[%s4169 + $0x18] sm:$0xf]
        %v4177 = vld [vmem:[%s4169 + $0x1c] sm:$0xf]
        %v4178 = vld [vmem:[%s4169 + $0x20] sm:$0xf]
        %v4179 = vld [vmem:[%s4169 + $0x24] sm:$0xf]
        %v4180 = vld [vmem:[%s4169 + $0x28] sm:$0xf]
        %v4181 = vld [vmem:[%s4169 + $0x2c] sm:$0xf]
        %v4182 = vld [vmem:[%s4169 + $0x30] sm:$0xf]
        %v4183 = vld [vmem:[%s4169 + $0x34] sm:$0xf]
        %v4184 = vld [vmem:[%s4169 + $0x38] sm:$0xf]
        %v4185 = vld [vmem:[%s4169 + $0x3c] sm:$0xf]
        %v4186 = vrot.slane %v3045, 2
        %v4187 = vrot.slane %v3046, 2
        %v4188 = vsel %vm2920, %v4186, %v4187
        %v4189 = vrot.slane %v3047, 2
        %v4190 = vsel %vm2920, %v4187, %v4189
        %v4210 = vunpack.c.l.b16 %v4170
        %v4211 = vunpack.c.l.b16 %v4171
        %v4212 = vunpack.c.l.b16 %v4172
        %v4213 = vunpack.c.l.b16 %v4173
        %v4214 = vunpack.c.l.b16 %v4174
        %v4215 = vunpack.c.l.b16 %v4175
        %v4216 = vunpack.c.l.b16 %v4176
        %v4217 = vunpack.c.l.b16 %v4177
        %v4218 = vunpack.c.l.b16 %v4178
        %v4219 = vunpack.c.l.b16 %v4179
        %v4220 = vunpack.c.l.b16 %v4180
        %v4221 = vunpack.c.l.b16 %v4181
        %v4222 = vunpack.c.l.b16 %v4182
        %v4223 = vunpack.c.l.b16 %v4183
        %v4224 = vunpack.c.l.b16 %v4184
        %v4225 = vunpack.c.l.b16 %v4185
        %v4226 = vpack.c.b16 %v4211, %v4210
        %v4227 = vpack.c.b16 %v4213, %v4212
        %v4228 = vpack.c.b16 %v4215, %v4214
        %v4229 = vpack.c.b16 %v4217, %v4216
        %v4230 = vpack.c.b16 %v4219, %v4218
        %v4231 = vpack.c.b16 %v4221, %v4220
        %v4232 = vpack.c.b16 %v4223, %v4222
        %v4233 = vpack.c.b16 %v4225, %v4224
        %4242 = vmatprep.subr.bf16.mxu0 0
        %4243 = vmatpush1.bf16.msra.mxu0 %v4226
        %4244 = vmatprep.subr.bf16.mxu0 0
        %4245 = vmatpush1.bf16.msra.mxu0 %v4227
        %4246 = vmatprep.subr.bf16.mxu0 0
        %4247 = vmatpush1.bf16.msra.mxu0 %v4228
        %4248 = vmatprep.subr.bf16.mxu0 0
        %4249 = vmatpush1.bf16.msra.mxu0 %v4229
        %4250 = vmatprep.subr.bf16.mxu0 0
        %4251 = vmatpush1.bf16.msra.mxu0 %v4230
        %4252 = vmatprep.subr.bf16.mxu0 0
        %4253 = vmatpush1.bf16.msra.mxu0 %v4231
        %4254 = vmatprep.subr.bf16.mxu0 0
        %4255 = vmatpush1.bf16.msra.mxu0 %v4232
        %4256 = vmatprep.subr.bf16.mxu0 0
        %4257 = vmatpush1.bf16.msra.mxu0 %v4233
        %4258 = vmatprep.subr.bf16.mxu0 0
        %4259 = vmatpush1.bf16.msra.mxu0 0
        %4260 = vmatprep.subr.bf16.mxu0 0
        %4261 = vmatpush1.bf16.msra.mxu0 0
        %4262 = vmatprep.subr.bf16.mxu0 0
        %4263 = vmatpush1.bf16.msra.mxu0 0
        %4264 = vmatprep.subr.bf16.mxu0 0
        %4265 = vmatpush1.bf16.msra.mxu0 0
        %4266 = vmatprep.subr.bf16.mxu0 0
        %4267 = vmatpush1.bf16.msra.mxu0 0
        %4268 = vmatprep.subr.bf16.mxu0 0
        %4269 = vmatpush1.bf16.msra.mxu0 0
        %4270 = vmatprep.subr.bf16.mxu0 0
        %4271 = vmatpush1.bf16.msra.mxu0 0
        %4272 = vmatprep.subr.bf16.mxu0 0
        %4273 = vmatpush1.bf16.msra.mxu0 0
        %4274 = vmatprep.mubr.bf16.mxu0 0
        %4275 = vmatmul.mubr.bf16.gmra.mrb[0].mxu0 %v4188
        %v4276 = vpop.f32.mrb[0].mxu0
        %v4277 = vadd.f32 0.0, %v4276
        %v4278 = vpop.f32.mrb[0].mxu0
        %v4279 = vpop.f32.mrb[0].mxu0
        %v4280 = vadd.f32 0.0, %v4279
        %v4281 = vpop.f32.mrb[0].mxu0
        %4282 = vmatprep.mubr.bf16.mxu0 0
        %4283 = vmatmul.mubr.bf16.gmra.mrb[0].mxu0 %v4190
        %v4284 = vpop.f32.mrb[0].mxu0
        %v4285 = vadd.f32 0.0, %v4284
        %v4286 = vpop.f32.mrb[0].mxu0
        %v4287 = vpop.f32.mrb[0].mxu0
        %v4288 = vadd.f32 0.0, %v4287
        %v4289 = vpop.f32.mrb[0].mxu0
        %4290 = vmatprep.mubr.bf16.mxu0 0
        %4291 = vmatmul.mubr.bf16.gmra.mrb[0].mxu0 %v4189
        %v4292 = vpop.f32.mrb[0].mxu0
        %v4293 = vadd.f32 0.0, %v4292
        %v4294 = vpop.f32.mrb[0].mxu0
        %v4295 = vpop.f32.mrb[0].mxu0
        %v4296 = vadd.f32 0.0, %v4295
        %v4297 = vpop.f32.mrb[0].mxu0
        %4298 = vdwg.mxu0
        %v4299 = vadd.f32 %v4163, %v4277
        %v4300 = vadd.f32 %v4164, %v4280
        %v4301 = vadd.f32 %v4165, %v4285
        %v4302 = vadd.f32 %v4166, %v4288
        %v4303 = vadd.f32 %v4167, %v4293
        %v4304 = vadd.f32 %v4168, %v4296
        %v4305 = vld [vmem:[%s8] sm:$0x1]
        %v4307 = vlaneseq
        %v4308 = vshrl.u32 %v4307, 7
        %v4309 = vsub.s32 0, %v4308
        %v4310 = vrot.slane %v4305, %v4309
        %v4312 = vadd.f32 %v4299, %v4310
        %v4313 = vadd.f32 %v4300, %v4310
        %v4314 = vadd.f32 %v4301, %v4310
        %v4315 = vadd.f32 %v4302, %v4310
        %v4316 = vadd.f32 %v4303, %v4310
        %v4317 = vadd.f32 %v4304, %v4310
        %v4318 = vmax.f32 %v4312, 0.0
        %v4319 = vmax.f32 %v4313, 0.0
        %v4320 = vmax.f32 %v4314, 0.0
        %v4321 = vmax.f32 %v4315, 0.0
        %v4322 = vmax.f32 %v4316, 0.0
        %v4323 = vmax.f32 %v4317, 0.0
        %vm4324 = vcmp.lt.s32.totalorder %v1612, 0
        %v4325 = vsub.s32 0, %v1612
        %v4326 = vsel %vm4324, %v4325, %v1612
        %v4327 = vmul.u32.u64.compose %v4326, 3817748708
        %v4328 = vextract.low.u32 %v4327
        %v4329 = vextract.high.u32 %v4327
        %v4330 = vshrl.u32 %v4329, 4
        %v4331 = vmul.u32 %v4330, 18
        %v4332 = vsub.s32 %v4326, %v4331
        %v4333 = vsub.s32 0, %v4332
        %v4334 = vsel %vm4324, %v4333, %v4332
        %vm4335 = vcmp.lt.s32.totalorder %v1613, 0
        %v4336 = vsub.s32 0, %v1613
        %v4337 = vsel %vm4335, %v4336, %v1613
        %v4338 = vmul.u32.u64.compose %v4337, 3817748708
        %v4339 = vextract.low.u32 %v4338
        %v4340 = vextract.high.u32 %v4338
        %v4341 = vshrl.u32 %v4340, 4
        %v4342 = vmul.u32 %v4341, 18
        %v4343 = vsub.s32 %v4337, %v4342
        %v4344 = vsub.s32 0, %v4343
        %v4345 = vsel %vm4335, %v4344, %v4343
        %vm4346 = vcmp.lt.s32.totalorder %v1614, 0
        %v4347 = vsub.s32 0, %v1614
        %v4348 = vsel %vm4346, %v4347, %v1614
        %v4349 = vmul.u32.u64.compose %v4348, 3817748708
        %v4350 = vextract.low.u32 %v4349
        %v4351 = vextract.high.u32 %v4349
        %v4352 = vshrl.u32 %v4351, 4
        %v4353 = vmul.u32 %v4352, 18
        %v4354 = vsub.s32 %v4348, %v4353
        %v4355 = vsub.s32 0, %v4354
        %v4356 = vsel %vm4346, %v4355, %v4354
        %vm4357 = vcmp.lt.s32.totalorder %v1615, 0
        %v4358 = vsub.s32 0, %v1615
        %v4359 = vsel %vm4357, %v4358, %v1615
        %v4360 = vmul.u32.u64.compose %v4359, 3817748708
        %v4361 = vextract.low.u32 %v4360
        %v4362 = vextract.high.u32 %v4360
        %v4363 = vshrl.u32 %v4362, 4
        %v4364 = vmul.u32 %v4363, 18
        %v4365 = vsub.s32 %v4359, %v4364
        %v4366 = vsub.s32 0, %v4365
        %v4367 = vsel %vm4357, %v4366, %v4365
        %vm4368 = vcmp.lt.s32.totalorder %v1616, 0
        %v4369 = vsub.s32 0, %v1616
        %v4370 = vsel %vm4368, %v4369, %v1616
        %v4371 = vmul.u32.u64.compose %v4370, 3817748708
        %v4372 = vextract.low.u32 %v4371
        %v4373 = vextract.high.u32 %v4371
        %v4374 = vshrl.u32 %v4373, 4
        %v4375 = vmul.u32 %v4374, 18
        %v4376 = vsub.s32 %v4370, %v4375
        %v4377 = vsub.s32 0, %v4376
        %v4378 = vsel %vm4368, %v4377, %v4376
        %vm4379 = vcmp.lt.s32.totalorder %v1617, 0
        %v4380 = vsub.s32 0, %v1617
        %v4381 = vsel %vm4379, %v4380, %v1617
        %v4382 = vmul.u32.u64.compose %v4381, 3817748708
        %v4383 = vextract.low.u32 %v4382
        %v4384 = vextract.high.u32 %v4382
        %v4385 = vshrl.u32 %v4384, 4
        %v4386 = vmul.u32 %v4385, 18
        %v4387 = vsub.s32 %v4381, %v4386
        %v4388 = vsub.s32 0, %v4387
        %v4389 = vsel %vm4379, %v4388, %v4387
        %vm4390 = vcmp.ne.s32.totalorder %v4334, 0
        %vm4391 = vcmp.ne.s32.totalorder %v4345, 0
        %vm4392 = vcmp.ne.s32.totalorder %v4356, 0
        %vm4393 = vcmp.ne.s32.totalorder %v4367, 0
        %vm4394 = vcmp.ne.s32.totalorder %v4378, 0
        %vm4395 = vcmp.ne.s32.totalorder %v4389, 0
        %vm4396 = vcmp.lt.s32.totalorder %v4334, 0
        %vm4397 = vcmp.lt.s32.totalorder %v4345, 0
        %vm4398 = vcmp.lt.s32.totalorder %v4356, 0
        %vm4399 = vcmp.lt.s32.totalorder %v4367, 0
        %vm4400 = vcmp.lt.s32.totalorder %v4378, 0
        %vm4401 = vcmp.lt.s32.totalorder %v4389, 0
        %vm4402 = vmand %vm4396, %vm4390
        %vm4403 = vmand %vm4397, %vm4391
        %vm4404 = vmand %vm4398, %vm4392
        %vm4405 = vmand %vm4399, %vm4393
        %vm4406 = vmand %vm4400, %vm4394
        %vm4407 = vmand %vm4401, %vm4395
        %v4408 = vadd.s32 %v4334, 18
        %v4409 = vadd.s32 %v4345, 18
        %v4410 = vadd.s32 %v4356, 18
        %v4411 = vadd.s32 %v4367, 18
        %v4412 = vadd.s32 %v4378, 18
        %v4413 = vadd.s32 %v4389, 18
        %v4414 = vsel %vm4402, %v4408, %v4334
        %v4415 = vsel %vm4403, %v4409, %v4345
        %v4416 = vsel %vm4404, %v4410, %v4356
        %v4417 = vsel %vm4405, %v4411, %v4367
        %v4418 = vsel %vm4406, %v4412, %v4378
        %v4419 = vsel %vm4407, %v4413, %v4389
        %vm4420 = vcmp.lt.s32.totalorder %v4414, 6
        %vm4421 = vcmp.lt.s32.totalorder %v4415, 6
        %vm4422 = vcmp.lt.s32.totalorder %v4416, 6
        %vm4423 = vcmp.lt.s32.totalorder %v4417, 6
        %vm4424 = vcmp.lt.s32.totalorder %v4418, 6
        %vm4425 = vcmp.lt.s32.totalorder %v4419, 6
        %vm4426 = vcmp.lt.s32.totalorder %v1612, 0
        %v4427 = vsub.s32 0, %v1612
        %v4428 = vsel %vm4426, %v4427, %v1612
        %v4429 = vshrl.u32 %v4428, 1
        %v4430 = vand.u32 %v4428, 1
        %v4431 = vsub.s32 0, %v4430
        %v4432 = vsel %vm4426, %v4431, %v4430
        %vm4433 = vcmp.lt.s32.totalorder %v1613, 0
        %v4434 = vsub.s32 0, %v1613
        %v4435 = vsel %vm4433, %v4434, %v1613
        %v4436 = vshrl.u32 %v4435, 1
        %v4437 = vand.u32 %v4435, 1
        %v4438 = vsub.s32 0, %v4437
        %v4439 = vsel %vm4433, %v4438, %v4437
        %vm4440 = vcmp.lt.s32.totalorder %v1614, 0
        %v4441 = vsub.s32 0, %v1614
        %v4442 = vsel %vm4440, %v4441, %v1614
        %v4443 = vshrl.u32 %v4442, 1
        %v4444 = vand.u32 %v4442, 1
        %v4445 = vsub.s32 0, %v4444
        %v4446 = vsel %vm4440, %v4445, %v4444
        %vm4447 = vcmp.lt.s32.totalorder %v1615, 0
        %v4448 = vsub.s32 0, %v1615
        %v4449 = vsel %vm4447, %v4448, %v1615
        %v4450 = vshrl.u32 %v4449, 1
        %v4451 = vand.u32 %v4449, 1
        %v4452 = vsub.s32 0, %v4451
        %v4453 = vsel %vm4447, %v4452, %v4451
        %vm4454 = vcmp.lt.s32.totalorder %v1616, 0
        %v4455 = vsub.s32 0, %v1616
        %v4456 = vsel %vm4454, %v4455, %v1616
        %v4457 = vshrl.u32 %v4456, 1
        %v4458 = vand.u32 %v4456, 1
        %v4459 = vsub.s32 0, %v4458
        %v4460 = vsel %vm4454, %v4459, %v4458
        %vm4461 = vcmp.lt.s32.totalorder %v1617, 0
        %v4462 = vsub.s32 0, %v1617
        %v4463 = vsel %vm4461, %v4462, %v1617
        %v4464 = vshrl.u32 %v4463, 1
        %v4465 = vand.u32 %v4463, 1
        %v4466 = vsub.s32 0, %v4465
        %v4467 = vsel %vm4461, %v4466, %v4465
        %vm4468 = vcmp.ne.s32.totalorder %v4432, 0
        %vm4469 = vcmp.ne.s32.totalorder %v4439, 0
        %vm4470 = vcmp.ne.s32.totalorder %v4446, 0
        %vm4471 = vcmp.ne.s32.totalorder %v4453, 0
        %vm4472 = vcmp.ne.s32.totalorder %v4460, 0
        %vm4473 = vcmp.ne.s32.totalorder %v4467, 0
        %vm4474 = vcmp.lt.s32.totalorder %v4432, 0
        %vm4475 = vcmp.lt.s32.totalorder %v4439, 0
        %vm4476 = vcmp.lt.s32.totalorder %v4446, 0
        %vm4477 = vcmp.lt.s32.totalorder %v4453, 0
        %vm4478 = vcmp.lt.s32.totalorder %v4460, 0
        %vm4479 = vcmp.lt.s32.totalorder %v4467, 0
        %vm4480 = vmand %vm4474, %vm4468
        %vm4481 = vmand %vm4475, %vm4469
        %vm4482 = vmand %vm4476, %vm4470
        %vm4483 = vmand %vm4477, %vm4471
        %vm4484 = vmand %vm4478, %vm4472
        %vm4485 = vmand %vm4479, %vm4473
        %v4486 = vadd.s32 %v4432, 2
        %v4487 = vadd.s32 %v4439, 2
        %v4488 = vadd.s32 %v4446, 2
        %v4489 = vadd.s32 %v4453, 2
        %v4490 = vadd.s32 %v4460, 2
        %v4491 = vadd.s32 %v4467, 2
        %v4492 = vsel %vm4480, %v4486, %v4432
        %v4493 = vsel %vm4481, %v4487, %v4439
        %v4494 = vsel %vm4482, %v4488, %v4446
        %v4495 = vsel %vm4483, %v4489, %v4453
        %v4496 = vsel %vm4484, %v4490, %v4460
        %v4497 = vsel %vm4485, %v4491, %v4467
        %vm4498 = vcmp.eq.s32.totalorder %v4492, 0
        %vm4499 = vcmp.eq.s32.totalorder %v4493, 0
        %vm4500 = vcmp.eq.s32.totalorder %v4494, 0
        %vm4501 = vcmp.eq.s32.totalorder %v4495, 0
        %vm4502 = vcmp.eq.s32.totalorder %v4496, 0
        %vm4503 = vcmp.eq.s32.totalorder %v4497, 0
        %vm4504 = vmand %vm4420, %vm4498
        %vm4505 = vmand %vm4421, %vm4499
        %vm4506 = vmand %vm4422, %vm4500
        %vm4507 = vmand %vm4423, %vm4501
        %vm4508 = vmand %vm4424, %vm4502
        %vm4509 = vmand %vm4425, %vm4503
        %v4510 = vsel %vm4504, 1, 0
        %v4511 = vsel %vm4505, 1, 0
        %v4512 = vsel %vm4506, 1, 0
        %v4513 = vsel %vm4507, 1, 0
        %v4514 = vsel %vm4508, 1, 0
        %v4515 = vsel %vm4509, 1, 0
        %vm4516 = vcmp.eq.s32.totalorder %v4510, 1
        %vm4517 = vcmp.eq.s32.totalorder %v4511, 1
        %vm4518 = vcmp.eq.s32.totalorder %v4512, 1
        %vm4519 = vcmp.eq.s32.totalorder %v4513, 1
        %vm4520 = vcmp.eq.s32.totalorder %v4514, 1
        %vm4521 = vcmp.eq.s32.totalorder %v4515, 1
        %v4522 = vsel %vm4516, %v4318, 0.0
        %v4523 = vsel %vm4517, %v4319, 0.0
        %v4524 = vsel %vm4518, %v4320, 0.0
        %v4525 = vsel %vm4519, %v4321, 0.0
        %v4526 = vsel %vm4520, %v4322, 0.0
        %v4527 = vsel %vm4521, %v4323, 0.0
        %vm4528 = vcmask 293888
        %v4529 = vsel %vm4528, %v4522, 0.0
        %v4530 = vsel %vm4528, %v4523, 0.0
        %v4531 = vadd.f32 %v4529, %v4530
        %v4532 = vsel %vm4528, %v4524, 0.0
        %v4533 = vadd.f32 %v4531, %v4532
        %v4534 = vsel %vm4528, %v4525, 0.0
        %v4535 = vadd.f32 %v4533, %v4534
        %v4536 = vsel %vm4528, %v4526, 0.0
        %v4537 = vadd.f32 %v4535, %v4536
        %vm4538 = vcmask 286720
        %v4539 = vsel %vm4538, %v4527, 0.0
        %v4540 = vadd.f32 %v4537, %v4539
        %v4541 = vrot.slane %v4540, 4
        %v4542 = vadd.f32 %v4540, %v4541
        %v4543 = vrot.slane %v4542, 2
        %v4544 = vadd.f32 %v4542, %v4543
        %v4545 = vrot.slane %v4544, 1
        %v4546 = vadd.f32 %v4544, %v4545
        %v4547 = vmul.f32 %v4546, 0.11111111
        %4548 = vst.msk [vmem:[%s324] sm:$0x1] %vm4538, %v4547
        %s4549 = sand.u32 %s225, 1
        %s4550 = scalar_lea.sflag [#allocation4], %s4549
        %s4551 = sand.u32 %s225, 1
        %s4552 = scalar_lea.vmem [#allocation3], %s4551
        // Predicated region
        $region57: #{squeezenet_forward.1} parent=55 // pred_check
          %p4553 = pneg %p235
        $region58: #{squeezenet_forward.1} parent=55 // pred_check_branch
          %4555 = sbr.rel (%p4553) target = $region60
        $region59: #{squeezenet_forward.1} parent=55 // pred_region
          %s4557 = ssub.s32 16, 16
          %4558 = vsyncadd %s4550, %s4557
          %s4559 = smul.addr %s23, 16
          %s4560 = scalar_lea.hbm %s9, %s4559
          %s4562 = sshll.u32 %s4552, 4
          %s4563 = int_to_ptr.vmem [resolvable:$true] %s4562
          %4565 = dma.vmem_to_hbm [thread:$0]  %s4563, 16, %s4560, %s4550
        $region60: #{squeezenet_forward.1} parent=55 // pred_fallthru
          _
      $region56: #{squeezenet_forward.1} parent=5 // pred_fallthru
        _
      %p4566 = scmp.le.s32.totalorder 2, %s18
      // Predicated region
      $region61: #{squeezenet_forward.1} parent=5 // pred_check
        %p4567 = pneg %p4566
      $region62: #{squeezenet_forward.1} parent=5 // pred_check_branch
        %4569 = sbr.rel (%p4567) target = $region64
      $region63: #{squeezenet_forward.1} parent=5 // pred_region
        %s4570 = ssub.s32 %s18, 2
        // Predicated region
        $region65: #{squeezenet_forward.1} parent=63 // pred_check
          %p4571 = pneg %p241
        $region66: #{squeezenet_forward.1} parent=63 // pred_check_branch
          %4573 = sbr.rel (%p4571) target = $region68
        $region67: #{squeezenet_forward.1} parent=63 // pred_region
          %s4574 = sand.u32 %s226, 1
          %s4575 = scalar_lea.sflag [#allocation4], %s4574
          %s4576 = sand.u32 %s226, 1
          %s4577 = scalar_lea.vmem [#allocation3], %s4576
          %4578 = dma.done %s4575, 16
        $region68: #{squeezenet_forward.1} parent=63 // pred_fallthru
          _
      $region64: #{squeezenet_forward.1} parent=5 // pred_fallthru
        _
    $region6: #{squeezenet_forward.1} parent=1 // loop_footer
      %s22 = sadd.s32 1, %s18
    $region7: #{squeezenet_forward.1} parent=1 // loop_footer_branch
      %17 = sbr.rel target = $region3
    $region8: #{squeezenet_forward.1} parent=1 // loop_exit
      _
    %4579 = vsyncpa [#allocation4], 1
    %s4580 = scalar_lea.sflag [#allocation4], 1
    %4581 = vsyncpa %s4580, 1

</llo_original>
